<compile_context>
chip_gen: v6e
topology: v6e:2x2x1
jax: 0.10.0
libtpu: 0.0.40
codegen_flags: <defaults>
</compile_context>

<pallas_src>
import functools

import numpy as np
import jax
import jax.numpy as jnp
from jax import lax
from jax.experimental import pallas as pl
from jax.experimental.pallas import tpu as pltpu

EPSILON = 1e-05
IOU_THRESHOLD = 0.5
NUM_CLASSES = 4
NUM_FG_CLASSES = NUM_CLASSES - 1


def _map_kernel(slab_ref, out_ref, sorted_ref, *, NP, NG):
    # slab_ref : (16, max(NP, NG)) f32
    #   row 0: pred labels   row 1: pred probits   rows 2-5: pred x1,y1,x2,y2   (lanes < NP)
    #   row 8: gt labels     rows 9-12: gt x1,y1,x2,y2                           (lanes < NG)
    # sorted_ref: (C*NP, NG) scratch; row (r*C + c) = class-(c+1) masked IoUs of the
    #   rank-r prediction of that class against every GT (-1 for wrong-class GTs).
    f32 = jnp.float32
    i32 = jnp.int32
    C = NUM_FG_CLASSES

    # bit-packed key layout for the fused reduction (requires NG <= 64)
    IDX_BITS = max((NG - 1).bit_length(), 1)
    SHIFT = IDX_BITS + 1
    IDX_MASK = (1 << IDX_BITS) - 1
    OFF = 0x3F000000                      # f32 bit pattern of 0.5

    s = slab_ref[...]                     # (16, W)
    labels_row = s[0:1, :NP]              # (1, NP)
    prob_row = s[1:2, :NP]
    pcols = jnp.transpose(s[0:8, :NP])    # (NP, 8) — one small in-kernel transpose
    labels_col = pcols[:, 0:1]
    prob_col = pcols[:, 1:2]
    px1 = pcols[:, 2:3]; py1 = pcols[:, 3:4]
    px2 = pcols[:, 4:5]; py2 = pcols[:, 5:6]
    glab = s[8:9, :NG]                    # (1, NG)
    gx1 = s[9:10, :NG]; gy1 = s[10:11, :NG]
    gx2 = s[11:12, :NG]; gy2 = s[12:13, :NG]

    # ---- IoU in (pred, gt) orientation (NP, NG).  No epsilon: mirrors the reference;
    #      degenerate zero-area pairs give NaN and silently become FPs (as in torch). ----
    ix1 = jnp.maximum(px1, gx1); iy1 = jnp.maximum(py1, gy1)
    ix2 = jnp.minimum(px2, gx2); iy2 = jnp.minimum(py2, gy2)
    inter = jnp.maximum(ix2 - ix1, 0.0) * jnp.maximum(iy2 - iy1, 0.0)
    area_p = (px2 - px1) * (py2 - py1)    # (NP, 1)
    area_g = (gx2 - gx1) * (gy2 - gy1)    # (1, NG)
    iou = inter / (area_p + area_g - inter)                          # (NP, NG)

    # ---- per-pred rank within its own class (descending probit, stable) ----
    row_np = lax.broadcasted_iota(i32, (NP, NP), 0)
    col_np = lax.broadcasted_iota(i32, (NP, NP), 1)
    same_class = labels_col == labels_row
    before = (prob_col > prob_row) | ((prob_col == prob_row) & (row_np < col_np))
    rank_row = jnp.sum((same_class & before).astype(i32), axis=0, keepdims=True)  # (1, NP)

    # rank-major interleaved row code: q = rank*C + (label-1); exact-integer-label check
    label_int = labels_row.astype(i32)
    class_ok = (labels_row == label_int.astype(f32)) & (label_int >= 1) & (label_int <= C)
    code = rank_row * C + (label_int - 1)                             # (1, NP)

    rowq = lax.broadcasted_iota(i32, (C * NP, NP), 0)
    P_all = ((rowq == code) & class_ok).astype(f32)                   # (C*NP, NP)

    # ONE MXU call builds the whole rank-sorted, class-interleaved IoU table.
    # HIGHEST precision => the 0/1 selector copies IoUs bit-exactly (full mantissa),
    # so threshold / argmax-tie decisions match the f32 reference.
    S_all = jnp.dot(P_all, iou, preferred_element_type=f32,
                    precision=lax.Precision.HIGHEST)                  # (C*NP, NG)

    qcol = lax.broadcasted_iota(i32, (C * NP, 1), 0)
    r_of_q = (qcol.astype(f32) * (1.0 / C)).astype(i32)   # exact floor(q/C) for q < 2^20
    class_of_q = (qcol - r_of_q * C + 1).astype(f32)                  # (C*NP, 1) in 1..C
    sorted_ref[...] = jnp.where(glab == class_of_q, S_all, f32(-1.0))

    # ---- per-class prediction / GT counts ----
    class_col = (lax.broadcasted_iota(i32, (C, 1), 0) + 1).astype(f32)   # (C,1): 1..C
    n_pred_col = jnp.sum((labels_row == class_col).astype(i32), axis=1, keepdims=True)  # (C,1)
    n_gt_col = jnp.sum((glab == class_col).astype(i32), axis=1, keepdims=True)          # (C,1)

    gt_iota = lax.broadcasted_iota(i32, (1, NG), 1)
    rev_iota = (NG - 1) - gt_iota                 # (1, NG)
    rev_base = (rev_iota << 1) + 1                # (1, NG): ((NG-1-g)<<1) | 1
    lane_np = lax.broadcasted_iota(i32, (1, NP), 1)

    # ---- serial greedy matching: one loop over rank positions, all classes at once;
    #      a single fused max-reduction per iteration on the critical path. ----
    def body(r, carry):
        gt_matched, tp_row = carry                              # (C,NG) i32, (C,NP) f32
        sel = sorted_ref[pl.ds(r * C, C), :]                    # (C, NG) — one contiguous slice
        cand = sel > IOU_THRESHOLD
        bits = pltpu.bitcast(sel, i32)
        key = jnp.where(cand,
                        ((bits - OFF) << SHIFT) | (rev_base - gt_matched),
                        i32(-1))                                # (C, NG)
        maxkey = jnp.max(key, axis=1, keepdims=True)            # (C, 1) — the only reduce
        active = r < n_pred_col                                 # (C, 1)
        is_tp = active & (maxkey >= 0) & ((maxkey & 1) == 1)
        chosen_rev = (maxkey >> 1) & IDX_MASK                   # reversed index of chosen GT
        gt_matched = jnp.where((rev_iota == chosen_rev) & is_tp, i32(1), gt_matched)
        tp_row = jnp.where((lane_np == r) & is_tp, f32(1.0), tp_row)
        return gt_matched, tp_row

    init = (jnp.zeros((C, NG), i32), jnp.zeros((C, NP), f32))
    _, tp_row = lax.fori_loop(0, NP, body, init, unroll=True)

    # ---- cumulative TP via one small MXU matmul; FP is implicit (rank+1 - tp_cum) ----
    U = (row_np <= col_np).astype(f32)                          # (NP, NP) upper-triangular
    tp_cum = jnp.dot(tp_row, U, preferred_element_type=f32)     # (C, NP)
    lane_f = lane_np.astype(f32)
    prec = tp_cum / (lane_f + (1.0 + EPSILON))                  # == tp/(tp+fp+eps) on valid lanes
    rec = tp_cum / (n_gt_col.astype(f32) + EPSILON)             # (C, NP)
    valid = lane_np < n_pred_col                                # (C, NP)

    # ---- 11-point AP: one (11,NP) max + one sum per class (tail work, off the hot loop) ----
    thr = lax.broadcasted_iota(i32, (11, 1), 0).astype(f32) * 0.1
    total = jnp.zeros((1, 1), f32)
    for c in range(C):
        m = valid[c:c + 1, :] & (rec[c:c + 1, :] >= thr)                         # (11, NP)
        pmax = jnp.max(jnp.where(m, prec[c:c + 1, :], 0.0), axis=1, keepdims=True)  # (11, 1)
        ap_c = jnp.sum(pmax, axis=0, keepdims=True) * (1.0 / 11.0)               # (1, 1)
        has_both = (n_pred_col[c:c + 1, :] > 0) & (n_gt_col[c:c + 1, :] > 0)     # (1, 1)
        total = total + jnp.where(has_both, ap_c, 0.0)

    out_ref[...] = total * (1.0 / C)


def map_pascal_voc(pred, gt_info):
    """pred: (N_PRED, 6) [label, probit, x1, y1, x2, y2]; gt_info: (1, N_GT, 5) [label, x1, y1, x2, y2]."""
    f32 = jnp.float32
    pred = pred.astype(f32)
    gt = gt_info[0].astype(f32)
    NP_ = pred.shape[0]
    NG_ = gt.shape[0]
    assert NG_ <= 64, "packed-key trick needs NG <= 64"
    C = NUM_FG_CLASSES
    W = max(NP_, NG_)

    # one lane-dense slab (single DMA): features on sublanes, entities on lanes
    slab = jnp.zeros((16, W), f32)
    slab = slab.at[0:6, :NP_].set(pred[:, 0:6].T)     # label, probit, x1, y1, x2, y2
    slab = slab.at[8:9, :NG_].set(gt[:, 0:1].T)       # gt label
    slab = slab.at[9:13, :NG_].set(gt[:, 1:5].T)      # gt x1, y1, x2, y2

    kernel = functools.partial(_map_kernel, NP=NP_, NG=NG_)
    out = pl.pallas_call(
        kernel,
        out_shape=jax.ShapeDtypeStruct((1, 1), jnp.float32),
        in_specs=[pl.BlockSpec(memory_space=pltpu.MemorySpace.VMEM)],
        out_specs=pl.BlockSpec(memory_space=pltpu.MemorySpace.VMEM),
        scratch_shapes=[pltpu.VMEM((C * NP_, NG_), jnp.float32)],
    )(slab)
    return out[0, 0]


# ----------------------------- numpy reference (port of the PyTorch code) -----------------------------
def _box_iou_np(b1, b2):
    area1 = (b1[:, 2] - b1[:, 0]) * (b1[:, 3] - b1[:, 1])
    area2 = (b2[:, 2] - b2[:, 0]) * (b2[:, 3] - b2[:, 1])
    lt = np.maximum(b1[:, None, :2], b2[None, :, :2])
    rb = np.minimum(b1[:, None, 2:], b2[None, :, 2:])
    wh = np.clip(rb - lt, 0.0, None)
    inter = wh[..., 0] * wh[..., 1]
    return inter / (area1[:, None] + area2[None, :] - inter)


def _map_ref_np(pred, gt_info):
    pred = np.asarray(pred, np.float32)
    gt = np.asarray(gt_info, np.float32)[0]
    pred_labels, probits, pred_boxes = pred[:, 0], pred[:, 1], pred[:, 2:6]
    gt_labels, gt_boxes = gt[:, 0], gt[:, 1:5]
    ap_per_class = np.zeros(NUM_CLASSES - 1, np.float32)
    for c in range(1, NUM_CLASSES):
        pi = np.where(pred_labels == c)[0]
        gi = np.where(gt_labels == c)[0]
        pb, pp, gb = pred_boxes[pi], probits[pi], gt_boxes[gi]
        if pb.size == 0 or gb.size == 0:
            continue
        order = np.argsort(-pp, kind="stable")
        pb, pp = pb[order], pp[order]
        iou = _box_iou_np(gb, pb)
        ng = gb.shape[0]
        matched = np.zeros(ng, np.int32)
        tp = np.zeros(len(pp), np.float32)
        fp = np.zeros(len(pp), np.float32)
        for k in range(len(pp)):
            poss = np.where(iou[:, k] > IOU_THRESHOLD)[0]
            if poss.size > 0:
                chosen = poss[np.argmax(iou[poss, k])]
                if matched[chosen] == 0:
                    matched[chosen] = 1
                    tp[k] = 1.0
                else:
                    fp[k] = 1.0
            else:
                fp[k] = 1.0
        tpc, fpc = np.cumsum(tp), np.cumsum(fp)
        prec = tpc / (tpc + fpc + EPSILON)
        rec = tpc / (ng + EPSILON)
        ap = 0.0
        for t in [i * 0.1 for i in range(11)]:
            m = rec >= t
            ap += float(prec[m].max()) if m.any() else 0.0
        ap_per_class[c - 1] = ap / 11.0
    return float(ap_per_class.mean())


if __name__ == "__main__":
    key = jax.random.PRNGKey(0)
    NP, NG = 16, 8
    k1, k2, k3, k4, k5, k6, k7 = jax.random.split(key, 7)

    gt_labels = jax.random.randint(k1, (NG,), 1, NUM_CLASSES).astype(jnp.float32)
    xy = jax.random.uniform(k2, (NG, 2), minval=0.0, maxval=80.0)
    wh = jax.random.uniform(k3, (NG, 2), minval=10.0, maxval=40.0)
    gt_boxes = jnp.concatenate([xy, xy + wh], axis=1)                 # (NG, 4)
    gt_info = jnp.concatenate([gt_labels[:, None], gt_boxes], axis=1)[None]  # (1, NG, 5)

    # predictions: first NG are noisy copies of GT boxes (so TPs exist), rest random
    noise = jax.random.uniform(k4, (NG, 4), minval=-3.0, maxval=3.0)
    pred_boxes_a = gt_boxes + noise
    xy2 = jax.random.uniform(k5, (NP - NG, 2), minval=0.0, maxval=80.0)
    wh2 = jax.random.uniform(k5, (NP - NG, 2), minval=10.0, maxval=40.0)
    pred_boxes_b = jnp.concatenate([xy2, xy2 + wh2], axis=1)
    pred_boxes = jnp.concatenate([pred_boxes_a, pred_boxes_b], axis=0)
    pred_labels = jnp.concatenate(
        [gt_labels,
         jax.random.randint(k6, (NP - NG,), 0, NUM_CLASSES).astype(jnp.float32)])
    pred_probits = jax.random.uniform(k7, (NP,), minval=0.0, maxval=1.0)
    pred = jnp.concatenate(
        [pred_labels[:, None], pred_probits[:, None], pred_boxes], axis=1)   # (NP, 6)

    result = jax.block_until_ready(map_pascal_voc(pred, gt_info))

    ref = _map_ref_np(np.asarray(pred), np.asarray(gt_info))
    assert abs(float(result) - ref) < 1e-4, (float(result), ref)
    print("KERNEL_OK")
</pallas_src>

<mosaic_0001>
module attributes {stable_mosaic.version = 11 : i64} {
  func.func @_map_kernel(%arg0: memref<16x16xf32, #tpu.memory_space<vmem>>, %arg1: memref<1x1xf32, #tpu.memory_space<vmem>>, %arg2: memref<48x8xf32, #tpu.memory_space<vmem>>) attributes {dimension_semantics = [], scalar_prefetch = 0 : i64, scratch_operands = 1 : i64, tpu.core_type = #tpu.core_type<tc>} {
    %c0 = arith.constant 0 : index
    %c0_0 = arith.constant 0 : index
    %0 = vector.load %arg0[%c0, %c0_0] : memref<16x16xf32, #tpu.memory_space<vmem>>, vector<16x16xf32>
    %1 = vector.extract_strided_slice %0 {offsets = [0, 0], sizes = [1, 16], strides = [1, 1]} : vector<16x16xf32> to vector<1x16xf32>
    %2 = vector.extract_strided_slice %0 {offsets = [1, 0], sizes = [1, 16], strides = [1, 1]} : vector<16x16xf32> to vector<1x16xf32>
    %3 = vector.extract_strided_slice %0 {offsets = [0, 0], sizes = [8, 16], strides = [1, 1]} : vector<16x16xf32> to vector<8x16xf32>
    %4 = tpu.transpose %3, [1, 0] : vector<8x16xf32> -> vector<16x8xf32>
    %5 = vector.extract_strided_slice %4 {offsets = [0, 0], sizes = [16, 1], strides = [1, 1]} : vector<16x8xf32> to vector<16x1xf32>
    %6 = vector.extract_strided_slice %4 {offsets = [0, 1], sizes = [16, 1], strides = [1, 1]} : vector<16x8xf32> to vector<16x1xf32>
    %7 = vector.extract_strided_slice %4 {offsets = [0, 2], sizes = [16, 1], strides = [1, 1]} : vector<16x8xf32> to vector<16x1xf32>
    %8 = vector.extract_strided_slice %4 {offsets = [0, 3], sizes = [16, 1], strides = [1, 1]} : vector<16x8xf32> to vector<16x1xf32>
    %9 = vector.extract_strided_slice %4 {offsets = [0, 4], sizes = [16, 1], strides = [1, 1]} : vector<16x8xf32> to vector<16x1xf32>
    %10 = vector.extract_strided_slice %4 {offsets = [0, 5], sizes = [16, 1], strides = [1, 1]} : vector<16x8xf32> to vector<16x1xf32>
    %11 = vector.extract_strided_slice %0 {offsets = [8, 0], sizes = [1, 8], strides = [1, 1]} : vector<16x16xf32> to vector<1x8xf32>
    %12 = vector.extract_strided_slice %0 {offsets = [9, 0], sizes = [1, 8], strides = [1, 1]} : vector<16x16xf32> to vector<1x8xf32>
    %13 = vector.extract_strided_slice %0 {offsets = [10, 0], sizes = [1, 8], strides = [1, 1]} : vector<16x16xf32> to vector<1x8xf32>
    %14 = vector.extract_strided_slice %0 {offsets = [11, 0], sizes = [1, 8], strides = [1, 1]} : vector<16x16xf32> to vector<1x8xf32>
    %15 = vector.extract_strided_slice %0 {offsets = [12, 0], sizes = [1, 8], strides = [1, 1]} : vector<16x16xf32> to vector<1x8xf32>
    %16 = vector.broadcast %7 : vector<16x1xf32> to vector<16x8xf32>
    %17 = vector.broadcast %12 : vector<1x8xf32> to vector<16x8xf32>
    %18 = arith.maximumf %16, %17 : vector<16x8xf32>
    %19 = vector.broadcast %8 : vector<16x1xf32> to vector<16x8xf32>
    %20 = vector.broadcast %13 : vector<1x8xf32> to vector<16x8xf32>
    %21 = arith.maximumf %19, %20 : vector<16x8xf32>
    %22 = vector.broadcast %9 : vector<16x1xf32> to vector<16x8xf32>
    %23 = vector.broadcast %14 : vector<1x8xf32> to vector<16x8xf32>
    %24 = arith.minimumf %22, %23 : vector<16x8xf32>
    %25 = vector.broadcast %10 : vector<16x1xf32> to vector<16x8xf32>
    %26 = vector.broadcast %15 : vector<1x8xf32> to vector<16x8xf32>
    %27 = arith.minimumf %25, %26 : vector<16x8xf32>
    %28 = arith.subf %24, %18 : vector<16x8xf32>
    %cst = arith.constant 0.000000e+00 : f32
    %29 = vector.broadcast %cst : f32 to vector<16x8xf32>
    %30 = arith.maximumf %28, %29 : vector<16x8xf32>
    %31 = arith.subf %27, %21 : vector<16x8xf32>
    %cst_1 = arith.constant 0.000000e+00 : f32
    %32 = vector.broadcast %cst_1 : f32 to vector<16x8xf32>
    %33 = arith.maximumf %31, %32 : vector<16x8xf32>
    %34 = arith.mulf %30, %33 : vector<16x8xf32>
    %35 = arith.subf %9, %7 : vector<16x1xf32>
    %36 = arith.subf %10, %8 : vector<16x1xf32>
    %37 = arith.mulf %35, %36 : vector<16x1xf32>
    %38 = arith.subf %14, %12 : vector<1x8xf32>
    %39 = arith.subf %15, %13 : vector<1x8xf32>
    %40 = arith.mulf %38, %39 : vector<1x8xf32>
    %41 = vector.broadcast %37 : vector<16x1xf32> to vector<16x8xf32>
    %42 = vector.broadcast %40 : vector<1x8xf32> to vector<16x8xf32>
    %43 = arith.addf %41, %42 : vector<16x8xf32>
    %44 = arith.subf %43, %34 : vector<16x8xf32>
    %45 = arith.divf %34, %44 : vector<16x8xf32>
    %46 = tpu.iota {dimensions = array<i32: 0>} : vector<16x16xi32>
    %47 = tpu.iota {dimensions = array<i32: 1>} : vector<16x16xi32>
    %48 = vector.broadcast %5 : vector<16x1xf32> to vector<16x16xf32>
    %49 = vector.broadcast %1 : vector<1x16xf32> to vector<16x16xf32>
    %50 = arith.cmpf oeq, %48, %49 : vector<16x16xf32>
    %51 = vector.broadcast %6 : vector<16x1xf32> to vector<16x16xf32>
    %52 = vector.broadcast %2 : vector<1x16xf32> to vector<16x16xf32>
    %53 = arith.cmpf ogt, %51, %52 : vector<16x16xf32>
    %54 = vector.broadcast %6 : vector<16x1xf32> to vector<16x16xf32>
    %55 = vector.broadcast %2 : vector<1x16xf32> to vector<16x16xf32>
    %56 = arith.cmpf oeq, %54, %55 : vector<16x16xf32>
    %57 = arith.cmpi slt, %46, %47 : vector<16x16xi32>
    %58 = arith.andi %56, %57 : vector<16x16xi1>
    %59 = arith.ori %53, %58 : vector<16x16xi1>
    %60 = arith.andi %50, %59 : vector<16x16xi1>
    %61 = arith.extui %60 : vector<16x16xi1> to vector<16x16xi32>
    %cst_2 = arith.constant dense<0> : vector<16xi32>
    %62 = vector.multi_reduction <add>, %61, %cst_2 [0] : vector<16x16xi32> to vector<16xi32>
    %63 = vector.shape_cast %62 : vector<16xi32> to vector<1x16xi32>
    %64 = arith.fptosi %1 : vector<1x16xf32> to vector<1x16xi32>
    %65 = arith.sitofp %64 : vector<1x16xi32> to vector<1x16xf32>
    %66 = arith.cmpf oeq, %1, %65 : vector<1x16xf32>
    %c1_i32 = arith.constant 1 : i32
    %67 = vector.broadcast %c1_i32 : i32 to vector<1x16xi32>
    %68 = arith.cmpi sge, %64, %67 : vector<1x16xi32>
    %69 = arith.andi %66, %68 : vector<1x16xi1>
    %c3_i32 = arith.constant 3 : i32
    %70 = vector.broadcast %c3_i32 : i32 to vector<1x16xi32>
    %71 = arith.cmpi sle, %64, %70 : vector<1x16xi32>
    %72 = arith.andi %69, %71 : vector<1x16xi1>
    %c3_i32_3 = arith.constant 3 : i32
    %73 = vector.broadcast %c3_i32_3 : i32 to vector<1x16xi32>
    %74 = arith.muli %63, %73 : vector<1x16xi32>
    %c1_i32_4 = arith.constant 1 : i32
    %75 = vector.broadcast %c1_i32_4 : i32 to vector<1x16xi32>
    %76 = arith.subi %64, %75 : vector<1x16xi32>
    %77 = arith.addi %74, %76 : vector<1x16xi32>
    %78 = tpu.iota {dimensions = array<i32: 0>} : vector<48x16xi32>
    %79 = vector.broadcast %77 : vector<1x16xi32> to vector<48x16xi32>
    %80 = arith.cmpi eq, %78, %79 : vector<48x16xi32>
    %81 = vector.broadcast %72 : vector<1x16xi1> to vector<48x16xi1>
    %82 = arith.andi %80, %81 : vector<48x16xi1>
    %83 = arith.extui %82 : vector<48x16xi1> to vector<48x16xi32>
    %84 = arith.sitofp %83 : vector<48x16xi32> to vector<48x16xf32>
    %cst_5 = arith.constant dense<0.000000e+00> : vector<48x8xf32>
    %85 = tpu.matmul %84, %45, %cst_5 {dimension_numbers = #tpu.dot_dimension_numbers<[1], [0], [0], [1], [0, 0, 1, 1], [], []>, precision = #tpu.contract_precision<fp32>} : vector<48x16xf32>, vector<16x8xf32>, vector<48x8xf32> -> vector<48x8xf32>
    %86 = tpu.iota {dimensions = array<i32: 0>} : vector<48x1xi32>
    %87 = arith.sitofp %86 : vector<48x1xi32> to vector<48x1xf32>
    %cst_6 = arith.constant 0.333333343 : f32
    %88 = vector.broadcast %cst_6 : f32 to vector<48x1xf32>
    %89 = arith.mulf %87, %88 : vector<48x1xf32>
    %90 = arith.fptosi %89 : vector<48x1xf32> to vector<48x1xi32>
    %c3_i32_7 = arith.constant 3 : i32
    %91 = vector.broadcast %c3_i32_7 : i32 to vector<48x1xi32>
    %92 = arith.muli %90, %91 : vector<48x1xi32>
    %93 = arith.subi %86, %92 : vector<48x1xi32>
    %c1_i32_8 = arith.constant 1 : i32
    %94 = vector.broadcast %c1_i32_8 : i32 to vector<48x1xi32>
    %95 = arith.addi %93, %94 : vector<48x1xi32>
    %96 = arith.sitofp %95 : vector<48x1xi32> to vector<48x1xf32>
    %97 = vector.broadcast %11 : vector<1x8xf32> to vector<48x8xf32>
    %98 = vector.broadcast %96 : vector<48x1xf32> to vector<48x8xf32>
    %99 = arith.cmpf oeq, %97, %98 : vector<48x8xf32>
    %cst_9 = arith.constant -1.000000e+00 : f32
    %100 = vector.broadcast %cst_9 : f32 to vector<48x8xf32>
    %101 = arith.select %99, %85, %100 : vector<48x8xi1>, vector<48x8xf32>
    %c0_10 = arith.constant 0 : index
    %c0_11 = arith.constant 0 : index
    %102 = vector.load %arg2[%c0_10, %c0_11] : memref<48x8xf32, #tpu.memory_space<vmem>>, vector<48x8xf32>
    tpu.vector_store %arg2[%c0_10, %c0_11], %101 {strides = array<i32>} : memref<48x8xf32, #tpu.memory_space<vmem>>, vector<48x8xf32>,
    %103 = tpu.iota {dimensions = array<i32: 0>} : vector<3x1xi32>
    %c1_i32_12 = arith.constant 1 : i32
    %104 = vector.broadcast %c1_i32_12 : i32 to vector<3x1xi32>
    %105 = arith.addi %103, %104 : vector<3x1xi32>
    %106 = arith.sitofp %105 : vector<3x1xi32> to vector<3x1xf32>
    %107 = vector.broadcast %1 : vector<1x16xf32> to vector<3x16xf32>
    %108 = vector.broadcast %106 : vector<3x1xf32> to vector<3x16xf32>
    %109 = arith.cmpf oeq, %107, %108 : vector<3x16xf32>
    %110 = arith.extui %109 : vector<3x16xi1> to vector<3x16xi32>
    %cst_13 = arith.constant dense<0> : vector<3xi32>
    %111 = vector.multi_reduction <add>, %110, %cst_13 [1] : vector<3x16xi32> to vector<3xi32>
    %112 = vector.shape_cast %111 : vector<3xi32> to vector<3x1xi32>
    %113 = vector.broadcast %11 : vector<1x8xf32> to vector<3x8xf32>
    %114 = vector.broadcast %106 : vector<3x1xf32> to vector<3x8xf32>
    %115 = arith.cmpf oeq, %113, %114 : vector<3x8xf32>
    %116 = arith.extui %115 : vector<3x8xi1> to vector<3x8xi32>
    %cst_14 = arith.constant dense<0> : vector<3xi32>
    %117 = vector.multi_reduction <add>, %116, %cst_14 [1] : vector<3x8xi32> to vector<3xi32>
    %118 = vector.shape_cast %117 : vector<3xi32> to vector<3x1xi32>
    %119 = tpu.iota {dimensions = array<i32: 1>} : vector<1x8xi32>
    %c7_i32 = arith.constant 7 : i32
    %120 = vector.broadcast %c7_i32 : i32 to vector<1x8xi32>
    %121 = arith.subi %120, %119 : vector<1x8xi32>
    %c1_i32_15 = arith.constant 1 : i32
    %122 = vector.broadcast %c1_i32_15 : i32 to vector<1x8xi32>
    %123 = arith.shli %121, %122 : vector<1x8xi32>
    %c1_i32_16 = arith.constant 1 : i32
    %124 = vector.broadcast %c1_i32_16 : i32 to vector<1x8xi32>
    %125 = arith.addi %123, %124 : vector<1x8xi32>
    %126 = tpu.iota {dimensions = array<i32: 1>} : vector<1x16xi32>
    %c0_i32 = arith.constant 0 : i32
    %127 = vector.broadcast %c0_i32 : i32 to vector<3x8xi32>
    %cst_17 = arith.constant 0.000000e+00 : f32
    %128 = vector.broadcast %cst_17 : f32 to vector<3x16xf32>
    %c0_i32_18 = arith.constant 0 : i32
    %c3_i32_19 = arith.constant 3 : i32
    %129 = arith.muli %c0_i32_18, %c3_i32_19 : i32
    %130 = arith.index_cast %129 : i32 to index
    %c0_20 = arith.constant 0 : index
    %131 = vector.load %arg2[%130, %c0_20] : memref<48x8xf32, #tpu.memory_space<vmem>>, vector<3x8xf32>
    %cst_21 = arith.constant 5.000000e-01 : f32
    %132 = vector.broadcast %cst_21 : f32 to vector<3x8xf32>
    %133 = arith.cmpf ogt, %131, %132 : vector<3x8xf32>
    %134 = tpu.bitcast %131 : vector<3x8xf32> -> vector<3x8xi32>
    %c1056964608_i32 = arith.constant 1056964608 : i32
    %135 = vector.broadcast %c1056964608_i32 : i32 to vector<3x8xi32>
    %136 = arith.subi %134, %135 : vector<3x8xi32>
    %c4_i32 = arith.constant 4 : i32
    %137 = vector.broadcast %c4_i32 : i32 to vector<3x8xi32>
    %138 = arith.shli %136, %137 : vector<3x8xi32>
    %139 = vector.broadcast %125 : vector<1x8xi32> to vector<3x8xi32>
    %140 = arith.subi %139, %127 : vector<3x8xi32>
    %141 = arith.ori %138, %140 : vector<3x8xi32>
    %c-1_i32 = arith.constant -1 : i32
    %142 = vector.broadcast %c-1_i32 : i32 to vector<3x8xi32>
    %143 = arith.select %133, %141, %142 : vector<3x8xi1>, vector<3x8xi32>
    %cst_22 = arith.constant dense<-2147483648> : vector<3xi32>
    %144 = vector.multi_reduction <maxsi>, %143, %cst_22 [1] : vector<3x8xi32> to vector<3xi32>
    %145 = vector.shape_cast %144 : vector<3xi32> to vector<3x1xi32>
    %146 = vector.broadcast %c0_i32_18 : i32 to vector<3x1xi32>
    %147 = arith.cmpi slt, %146, %112 : vector<3x1xi32>
    %c0_i32_23 = arith.constant 0 : i32
    %148 = vector.broadcast %c0_i32_23 : i32 to vector<3x1xi32>
    %149 = arith.cmpi sge, %145, %148 : vector<3x1xi32>
    %150 = arith.andi %147, %149 : vector<3x1xi1>
    %c1_i32_24 = arith.constant 1 : i32
    %151 = vector.broadcast %c1_i32_24 : i32 to vector<3x1xi32>
    %152 = arith.andi %145, %151 : vector<3x1xi32>
    %c1_i32_25 = arith.constant 1 : i32
    %153 = vector.broadcast %c1_i32_25 : i32 to vector<3x1xi32>
    %154 = arith.cmpi eq, %152, %153 : vector<3x1xi32>
    %155 = arith.andi %150, %154 : vector<3x1xi1>
    %c1_i32_26 = arith.constant 1 : i32
    %156 = vector.broadcast %c1_i32_26 : i32 to vector<3x1xi32>
    %157 = arith.shrsi %145, %156 : vector<3x1xi32>
    %c7_i32_27 = arith.constant 7 : i32
    %158 = vector.broadcast %c7_i32_27 : i32 to vector<3x1xi32>
    %159 = arith.andi %157, %158 : vector<3x1xi32>
    %160 = vector.broadcast %121 : vector<1x8xi32> to vector<3x8xi32>
    %161 = vector.broadcast %159 : vector<3x1xi32> to vector<3x8xi32>
    %162 = arith.cmpi eq, %160, %161 : vector<3x8xi32>
    %163 = vector.broadcast %155 : vector<3x1xi1> to vector<3x8xi1>
    %164 = arith.andi %162, %163 : vector<3x8xi1>
    %c1_i32_28 = arith.constant 1 : i32
    %165 = vector.broadcast %c1_i32_28 : i32 to vector<3x8xi32>
    %166 = arith.select %164, %165, %127 : vector<3x8xi1>, vector<3x8xi32>
    %167 = vector.broadcast %c0_i32_18 : i32 to vector<1x16xi32>
    %168 = arith.cmpi eq, %126, %167 : vector<1x16xi32>
    %169 = vector.broadcast %168 : vector<1x16xi1> to vector<3x16xi1>
    %170 = vector.broadcast %155 : vector<3x1xi1> to vector<3x16xi1>
    %171 = arith.andi %169, %170 : vector<3x16xi1>
    %cst_29 = arith.constant 1.000000e+00 : f32
    %172 = vector.broadcast %cst_29 : f32 to vector<3x16xf32>
    %173 = arith.select %171, %172, %128 : vector<3x16xi1>, vector<3x16xf32>
    %c1_i32_30 = arith.constant 1 : i32
    %c3_i32_31 = arith.constant 3 : i32
    %174 = arith.muli %c1_i32_30, %c3_i32_31 : i32
    %175 = arith.index_cast %174 : i32 to index
    %c0_32 = arith.constant 0 : index
    %176 = vector.load %arg2[%175, %c0_32] : memref<48x8xf32, #tpu.memory_space<vmem>>, vector<3x8xf32>
    %cst_33 = arith.constant 5.000000e-01 : f32
    %177 = vector.broadcast %cst_33 : f32 to vector<3x8xf32>
    %178 = arith.cmpf ogt, %176, %177 : vector<3x8xf32>
    %179 = tpu.bitcast %176 : vector<3x8xf32> -> vector<3x8xi32>
    %c1056964608_i32_34 = arith.constant 1056964608 : i32
    %180 = vector.broadcast %c1056964608_i32_34 : i32 to vector<3x8xi32>
    %181 = arith.subi %179, %180 : vector<3x8xi32>
    %c4_i32_35 = arith.constant 4 : i32
    %182 = vector.broadcast %c4_i32_35 : i32 to vector<3x8xi32>
    %183 = arith.shli %181, %182 : vector<3x8xi32>
    %184 = vector.broadcast %125 : vector<1x8xi32> to vector<3x8xi32>
    %185 = arith.subi %184, %166 : vector<3x8xi32>
    %186 = arith.ori %183, %185 : vector<3x8xi32>
    %c-1_i32_36 = arith.constant -1 : i32
    %187 = vector.broadcast %c-1_i32_36 : i32 to vector<3x8xi32>
    %188 = arith.select %178, %186, %187 : vector<3x8xi1>, vector<3x8xi32>
    %cst_37 = arith.constant dense<-2147483648> : vector<3xi32>
    %189 = vector.multi_reduction <maxsi>, %188, %cst_37 [1] : vector<3x8xi32> to vector<3xi32>
    %190 = vector.shape_cast %189 : vector<3xi32> to vector<3x1xi32>
    %191 = vector.broadcast %c1_i32_30 : i32 to vector<3x1xi32>
    %192 = arith.cmpi slt, %191, %112 : vector<3x1xi32>
    %c0_i32_38 = arith.constant 0 : i32
    %193 = vector.broadcast %c0_i32_38 : i32 to vector<3x1xi32>
    %194 = arith.cmpi sge, %190, %193 : vector<3x1xi32>
    %195 = arith.andi %192, %194 : vector<3x1xi1>
    %c1_i32_39 = arith.constant 1 : i32
    %196 = vector.broadcast %c1_i32_39 : i32 to vector<3x1xi32>
    %197 = arith.andi %190, %196 : vector<3x1xi32>
    %c1_i32_40 = arith.constant 1 : i32
    %198 = vector.broadcast %c1_i32_40 : i32 to vector<3x1xi32>
    %199 = arith.cmpi eq, %197, %198 : vector<3x1xi32>
    %200 = arith.andi %195, %199 : vector<3x1xi1>
    %c1_i32_41 = arith.constant 1 : i32
    %201 = vector.broadcast %c1_i32_41 : i32 to vector<3x1xi32>
    %202 = arith.shrsi %190, %201 : vector<3x1xi32>
    %c7_i32_42 = arith.constant 7 : i32
    %203 = vector.broadcast %c7_i32_42 : i32 to vector<3x1xi32>
    %204 = arith.andi %202, %203 : vector<3x1xi32>
    %205 = vector.broadcast %121 : vector<1x8xi32> to vector<3x8xi32>
    %206 = vector.broadcast %204 : vector<3x1xi32> to vector<3x8xi32>
    %207 = arith.cmpi eq, %205, %206 : vector<3x8xi32>
    %208 = vector.broadcast %200 : vector<3x1xi1> to vector<3x8xi1>
    %209 = arith.andi %207, %208 : vector<3x8xi1>
    %c1_i32_43 = arith.constant 1 : i32
    %210 = vector.broadcast %c1_i32_43 : i32 to vector<3x8xi32>
    %211 = arith.select %209, %210, %166 : vector<3x8xi1>, vector<3x8xi32>
    %212 = vector.broadcast %c1_i32_30 : i32 to vector<1x16xi32>
    %213 = arith.cmpi eq, %126, %212 : vector<1x16xi32>
    %214 = vector.broadcast %213 : vector<1x16xi1> to vector<3x16xi1>
    %215 = vector.broadcast %200 : vector<3x1xi1> to vector<3x16xi1>
    %216 = arith.andi %214, %215 : vector<3x16xi1>
    %cst_44 = arith.constant 1.000000e+00 : f32
    %217 = vector.broadcast %cst_44 : f32 to vector<3x16xf32>
    %218 = arith.select %216, %217, %173 : vector<3x16xi1>, vector<3x16xf32>
    %c2_i32 = arith.constant 2 : i32
    %c3_i32_45 = arith.constant 3 : i32
    %219 = arith.muli %c2_i32, %c3_i32_45 : i32
    %220 = arith.index_cast %219 : i32 to index
    %c0_46 = arith.constant 0 : index
    %221 = vector.load %arg2[%220, %c0_46] : memref<48x8xf32, #tpu.memory_space<vmem>>, vector<3x8xf32>
    %cst_47 = arith.constant 5.000000e-01 : f32
    %222 = vector.broadcast %cst_47 : f32 to vector<3x8xf32>
    %223 = arith.cmpf ogt, %221, %222 : vector<3x8xf32>
    %224 = tpu.bitcast %221 : vector<3x8xf32> -> vector<3x8xi32>
    %c1056964608_i32_48 = arith.constant 1056964608 : i32
    %225 = vector.broadcast %c1056964608_i32_48 : i32 to vector<3x8xi32>
    %226 = arith.subi %224, %225 : vector<3x8xi32>
    %c4_i32_49 = arith.constant 4 : i32
    %227 = vector.broadcast %c4_i32_49 : i32 to vector<3x8xi32>
    %228 = arith.shli %226, %227 : vector<3x8xi32>
    %229 = vector.broadcast %125 : vector<1x8xi32> to vector<3x8xi32>
    %230 = arith.subi %229, %211 : vector<3x8xi32>
    %231 = arith.ori %228, %230 : vector<3x8xi32>
    %c-1_i32_50 = arith.constant -1 : i32
    %232 = vector.broadcast %c-1_i32_50 : i32 to vector<3x8xi32>
    %233 = arith.select %223, %231, %232 : vector<3x8xi1>, vector<3x8xi32>
    %cst_51 = arith.constant dense<-2147483648> : vector<3xi32>
    %234 = vector.multi_reduction <maxsi>, %233, %cst_51 [1] : vector<3x8xi32> to vector<3xi32>
    %235 = vector.shape_cast %234 : vector<3xi32> to vector<3x1xi32>
    %236 = vector.broadcast %c2_i32 : i32 to vector<3x1xi32>
    %237 = arith.cmpi slt, %236, %112 : vector<3x1xi32>
    %c0_i32_52 = arith.constant 0 : i32
    %238 = vector.broadcast %c0_i32_52 : i32 to vector<3x1xi32>
    %239 = arith.cmpi sge, %235, %238 : vector<3x1xi32>
    %240 = arith.andi %237, %239 : vector<3x1xi1>
    %c1_i32_53 = arith.constant 1 : i32
    %241 = vector.broadcast %c1_i32_53 : i32 to vector<3x1xi32>
    %242 = arith.andi %235, %241 : vector<3x1xi32>
    %c1_i32_54 = arith.constant 1 : i32
    %243 = vector.broadcast %c1_i32_54 : i32 to vector<3x1xi32>
    %244 = arith.cmpi eq, %242, %243 : vector<3x1xi32>
    %245 = arith.andi %240, %244 : vector<3x1xi1>
    %c1_i32_55 = arith.constant 1 : i32
    %246 = vector.broadcast %c1_i32_55 : i32 to vector<3x1xi32>
    %247 = arith.shrsi %235, %246 : vector<3x1xi32>
    %c7_i32_56 = arith.constant 7 : i32
    %248 = vector.broadcast %c7_i32_56 : i32 to vector<3x1xi32>
    %249 = arith.andi %247, %248 : vector<3x1xi32>
    %250 = vector.broadcast %121 : vector<1x8xi32> to vector<3x8xi32>
    %251 = vector.broadcast %249 : vector<3x1xi32> to vector<3x8xi32>
    %252 = arith.cmpi eq, %250, %251 : vector<3x8xi32>
    %253 = vector.broadcast %245 : vector<3x1xi1> to vector<3x8xi1>
    %254 = arith.andi %252, %253 : vector<3x8xi1>
    %c1_i32_57 = arith.constant 1 : i32
    %255 = vector.broadcast %c1_i32_57 : i32 to vector<3x8xi32>
    %256 = arith.select %254, %255, %211 : vector<3x8xi1>, vector<3x8xi32>
    %257 = vector.broadcast %c2_i32 : i32 to vector<1x16xi32>
    %258 = arith.cmpi eq, %126, %257 : vector<1x16xi32>
    %259 = vector.broadcast %258 : vector<1x16xi1> to vector<3x16xi1>
    %260 = vector.broadcast %245 : vector<3x1xi1> to vector<3x16xi1>
    %261 = arith.andi %259, %260 : vector<3x16xi1>
    %cst_58 = arith.constant 1.000000e+00 : f32
    %262 = vector.broadcast %cst_58 : f32 to vector<3x16xf32>
    %263 = arith.select %261, %262, %218 : vector<3x16xi1>, vector<3x16xf32>
    %c3_i32_59 = arith.constant 3 : i32
    %c3_i32_60 = arith.constant 3 : i32
    %264 = arith.muli %c3_i32_59, %c3_i32_60 : i32
    %265 = arith.index_cast %264 : i32 to index
    %c0_61 = arith.constant 0 : index
    %266 = vector.load %arg2[%265, %c0_61] : memref<48x8xf32, #tpu.memory_space<vmem>>, vector<3x8xf32>
    %cst_62 = arith.constant 5.000000e-01 : f32
    %267 = vector.broadcast %cst_62 : f32 to vector<3x8xf32>
    %268 = arith.cmpf ogt, %266, %267 : vector<3x8xf32>
    %269 = tpu.bitcast %266 : vector<3x8xf32> -> vector<3x8xi32>
    %c1056964608_i32_63 = arith.constant 1056964608 : i32
    %270 = vector.broadcast %c1056964608_i32_63 : i32 to vector<3x8xi32>
    %271 = arith.subi %269, %270 : vector<3x8xi32>
    %c4_i32_64 = arith.constant 4 : i32
    %272 = vector.broadcast %c4_i32_64 : i32 to vector<3x8xi32>
    %273 = arith.shli %271, %272 : vector<3x8xi32>
    %274 = vector.broadcast %125 : vector<1x8xi32> to vector<3x8xi32>
    %275 = arith.subi %274, %256 : vector<3x8xi32>
    %276 = arith.ori %273, %275 : vector<3x8xi32>
    %c-1_i32_65 = arith.constant -1 : i32
    %277 = vector.broadcast %c-1_i32_65 : i32 to vector<3x8xi32>
    %278 = arith.select %268, %276, %277 : vector<3x8xi1>, vector<3x8xi32>
    %cst_66 = arith.constant dense<-2147483648> : vector<3xi32>
    %279 = vector.multi_reduction <maxsi>, %278, %cst_66 [1] : vector<3x8xi32> to vector<3xi32>
    %280 = vector.shape_cast %279 : vector<3xi32> to vector<3x1xi32>
    %281 = vector.broadcast %c3_i32_59 : i32 to vector<3x1xi32>
    %282 = arith.cmpi slt, %281, %112 : vector<3x1xi32>
    %c0_i32_67 = arith.constant 0 : i32
    %283 = vector.broadcast %c0_i32_67 : i32 to vector<3x1xi32>
    %284 = arith.cmpi sge, %280, %283 : vector<3x1xi32>
    %285 = arith.andi %282, %284 : vector<3x1xi1>
    %c1_i32_68 = arith.constant 1 : i32
    %286 = vector.broadcast %c1_i32_68 : i32 to vector<3x1xi32>
    %287 = arith.andi %280, %286 : vector<3x1xi32>
    %c1_i32_69 = arith.constant 1 : i32
    %288 = vector.broadcast %c1_i32_69 : i32 to vector<3x1xi32>
    %289 = arith.cmpi eq, %287, %288 : vector<3x1xi32>
    %290 = arith.andi %285, %289 : vector<3x1xi1>
    %c1_i32_70 = arith.constant 1 : i32
    %291 = vector.broadcast %c1_i32_70 : i32 to vector<3x1xi32>
    %292 = arith.shrsi %280, %291 : vector<3x1xi32>
    %c7_i32_71 = arith.constant 7 : i32
    %293 = vector.broadcast %c7_i32_71 : i32 to vector<3x1xi32>
    %294 = arith.andi %292, %293 : vector<3x1xi32>
    %295 = vector.broadcast %121 : vector<1x8xi32> to vector<3x8xi32>
    %296 = vector.broadcast %294 : vector<3x1xi32> to vector<3x8xi32>
    %297 = arith.cmpi eq, %295, %296 : vector<3x8xi32>
    %298 = vector.broadcast %290 : vector<3x1xi1> to vector<3x8xi1>
    %299 = arith.andi %297, %298 : vector<3x8xi1>
    %c1_i32_72 = arith.constant 1 : i32
    %300 = vector.broadcast %c1_i32_72 : i32 to vector<3x8xi32>
    %301 = arith.select %299, %300, %256 : vector<3x8xi1>, vector<3x8xi32>
    %302 = vector.broadcast %c3_i32_59 : i32 to vector<1x16xi32>
    %303 = arith.cmpi eq, %126, %302 : vector<1x16xi32>
    %304 = vector.broadcast %303 : vector<1x16xi1> to vector<3x16xi1>
    %305 = vector.broadcast %290 : vector<3x1xi1> to vector<3x16xi1>
    %306 = arith.andi %304, %305 : vector<3x16xi1>
    %cst_73 = arith.constant 1.000000e+00 : f32
    %307 = vector.broadcast %cst_73 : f32 to vector<3x16xf32>
    %308 = arith.select %306, %307, %263 : vector<3x16xi1>, vector<3x16xf32>
    %c4_i32_74 = arith.constant 4 : i32
    %c3_i32_75 = arith.constant 3 : i32
    %309 = arith.muli %c4_i32_74, %c3_i32_75 : i32
    %310 = arith.index_cast %309 : i32 to index
    %c0_76 = arith.constant 0 : index
    %311 = vector.load %arg2[%310, %c0_76] : memref<48x8xf32, #tpu.memory_space<vmem>>, vector<3x8xf32>
    %cst_77 = arith.constant 5.000000e-01 : f32
    %312 = vector.broadcast %cst_77 : f32 to vector<3x8xf32>
    %313 = arith.cmpf ogt, %311, %312 : vector<3x8xf32>
    %314 = tpu.bitcast %311 : vector<3x8xf32> -> vector<3x8xi32>
    %c1056964608_i32_78 = arith.constant 1056964608 : i32
    %315 = vector.broadcast %c1056964608_i32_78 : i32 to vector<3x8xi32>
    %316 = arith.subi %314, %315 : vector<3x8xi32>
    %c4_i32_79 = arith.constant 4 : i32
    %317 = vector.broadcast %c4_i32_79 : i32 to vector<3x8xi32>
    %318 = arith.shli %316, %317 : vector<3x8xi32>
    %319 = vector.broadcast %125 : vector<1x8xi32> to vector<3x8xi32>
    %320 = arith.subi %319, %301 : vector<3x8xi32>
    %321 = arith.ori %318, %320 : vector<3x8xi32>
    %c-1_i32_80 = arith.constant -1 : i32
    %322 = vector.broadcast %c-1_i32_80 : i32 to vector<3x8xi32>
    %323 = arith.select %313, %321, %322 : vector<3x8xi1>, vector<3x8xi32>
    %cst_81 = arith.constant dense<-2147483648> : vector<3xi32>
    %324 = vector.multi_reduction <maxsi>, %323, %cst_81 [1] : vector<3x8xi32> to vector<3xi32>
    %325 = vector.shape_cast %324 : vector<3xi32> to vector<3x1xi32>
    %326 = vector.broadcast %c4_i32_74 : i32 to vector<3x1xi32>
    %327 = arith.cmpi slt, %326, %112 : vector<3x1xi32>
    %c0_i32_82 = arith.constant 0 : i32
    %328 = vector.broadcast %c0_i32_82 : i32 to vector<3x1xi32>
    %329 = arith.cmpi sge, %325, %328 : vector<3x1xi32>
    %330 = arith.andi %327, %329 : vector<3x1xi1>
    %c1_i32_83 = arith.constant 1 : i32
    %331 = vector.broadcast %c1_i32_83 : i32 to vector<3x1xi32>
    %332 = arith.andi %325, %331 : vector<3x1xi32>
    %c1_i32_84 = arith.constant 1 : i32
    %333 = vector.broadcast %c1_i32_84 : i32 to vector<3x1xi32>
    %334 = arith.cmpi eq, %332, %333 : vector<3x1xi32>
    %335 = arith.andi %330, %334 : vector<3x1xi1>
    %c1_i32_85 = arith.constant 1 : i32
    %336 = vector.broadcast %c1_i32_85 : i32 to vector<3x1xi32>
    %337 = arith.shrsi %325, %336 : vector<3x1xi32>
    %c7_i32_86 = arith.constant 7 : i32
    %338 = vector.broadcast %c7_i32_86 : i32 to vector<3x1xi32>
    %339 = arith.andi %337, %338 : vector<3x1xi32>
    %340 = vector.broadcast %121 : vector<1x8xi32> to vector<3x8xi32>
    %341 = vector.broadcast %339 : vector<3x1xi32> to vector<3x8xi32>
    %342 = arith.cmpi eq, %340, %341 : vector<3x8xi32>
    %343 = vector.broadcast %335 : vector<3x1xi1> to vector<3x8xi1>
    %344 = arith.andi %342, %343 : vector<3x8xi1>
    %c1_i32_87 = arith.constant 1 : i32
    %345 = vector.broadcast %c1_i32_87 : i32 to vector<3x8xi32>
    %346 = arith.select %344, %345, %301 : vector<3x8xi1>, vector<3x8xi32>
    %347 = vector.broadcast %c4_i32_74 : i32 to vector<1x16xi32>
    %348 = arith.cmpi eq, %126, %347 : vector<1x16xi32>
    %349 = vector.broadcast %348 : vector<1x16xi1> to vector<3x16xi1>
    %350 = vector.broadcast %335 : vector<3x1xi1> to vector<3x16xi1>
    %351 = arith.andi %349, %350 : vector<3x16xi1>
    %cst_88 = arith.constant 1.000000e+00 : f32
    %352 = vector.broadcast %cst_88 : f32 to vector<3x16xf32>
    %353 = arith.select %351, %352, %308 : vector<3x16xi1>, vector<3x16xf32>
    %c5_i32 = arith.constant 5 : i32
    %c3_i32_89 = arith.constant 3 : i32
    %354 = arith.muli %c5_i32, %c3_i32_89 : i32
    %355 = arith.index_cast %354 : i32 to index
    %c0_90 = arith.constant 0 : index
    %356 = vector.load %arg2[%355, %c0_90] : memref<48x8xf32, #tpu.memory_space<vmem>>, vector<3x8xf32>
    %cst_91 = arith.constant 5.000000e-01 : f32
    %357 = vector.broadcast %cst_91 : f32 to vector<3x8xf32>
    %358 = arith.cmpf ogt, %356, %357 : vector<3x8xf32>
    %359 = tpu.bitcast %356 : vector<3x8xf32> -> vector<3x8xi32>
    %c1056964608_i32_92 = arith.constant 1056964608 : i32
    %360 = vector.broadcast %c1056964608_i32_92 : i32 to vector<3x8xi32>
    %361 = arith.subi %359, %360 : vector<3x8xi32>
    %c4_i32_93 = arith.constant 4 : i32
    %362 = vector.broadcast %c4_i32_93 : i32 to vector<3x8xi32>
    %363 = arith.shli %361, %362 : vector<3x8xi32>
    %364 = vector.broadcast %125 : vector<1x8xi32> to vector<3x8xi32>
    %365 = arith.subi %364, %346 : vector<3x8xi32>
    %366 = arith.ori %363, %365 : vector<3x8xi32>
    %c-1_i32_94 = arith.constant -1 : i32
    %367 = vector.broadcast %c-1_i32_94 : i32 to vector<3x8xi32>
    %368 = arith.select %358, %366, %367 : vector<3x8xi1>, vector<3x8xi32>
    %cst_95 = arith.constant dense<-2147483648> : vector<3xi32>
    %369 = vector.multi_reduction <maxsi>, %368, %cst_95 [1] : vector<3x8xi32> to vector<3xi32>
    %370 = vector.shape_cast %369 : vector<3xi32> to vector<3x1xi32>
    %371 = vector.broadcast %c5_i32 : i32 to vector<3x1xi32>
    %372 = arith.cmpi slt, %371, %112 : vector<3x1xi32>
    %c0_i32_96 = arith.constant 0 : i32
    %373 = vector.broadcast %c0_i32_96 : i32 to vector<3x1xi32>
    %374 = arith.cmpi sge, %370, %373 : vector<3x1xi32>
    %375 = arith.andi %372, %374 : vector<3x1xi1>
    %c1_i32_97 = arith.constant 1 : i32
    %376 = vector.broadcast %c1_i32_97 : i32 to vector<3x1xi32>
    %377 = arith.andi %370, %376 : vector<3x1xi32>
    %c1_i32_98 = arith.constant 1 : i32
    %378 = vector.broadcast %c1_i32_98 : i32 to vector<3x1xi32>
    %379 = arith.cmpi eq, %377, %378 : vector<3x1xi32>
    %380 = arith.andi %375, %379 : vector<3x1xi1>
    %c1_i32_99 = arith.constant 1 : i32
    %381 = vector.broadcast %c1_i32_99 : i32 to vector<3x1xi32>
    %382 = arith.shrsi %370, %381 : vector<3x1xi32>
    %c7_i32_100 = arith.constant 7 : i32
    %383 = vector.broadcast %c7_i32_100 : i32 to vector<3x1xi32>
    %384 = arith.andi %382, %383 : vector<3x1xi32>
    %385 = vector.broadcast %121 : vector<1x8xi32> to vector<3x8xi32>
    %386 = vector.broadcast %384 : vector<3x1xi32> to vector<3x8xi32>
    %387 = arith.cmpi eq, %385, %386 : vector<3x8xi32>
    %388 = vector.broadcast %380 : vector<3x1xi1> to vector<3x8xi1>
    %389 = arith.andi %387, %388 : vector<3x8xi1>
    %c1_i32_101 = arith.constant 1 : i32
    %390 = vector.broadcast %c1_i32_101 : i32 to vector<3x8xi32>
    %391 = arith.select %389, %390, %346 : vector<3x8xi1>, vector<3x8xi32>
    %392 = vector.broadcast %c5_i32 : i32 to vector<1x16xi32>
    %393 = arith.cmpi eq, %126, %392 : vector<1x16xi32>
    %394 = vector.broadcast %393 : vector<1x16xi1> to vector<3x16xi1>
    %395 = vector.broadcast %380 : vector<3x1xi1> to vector<3x16xi1>
    %396 = arith.andi %394, %395 : vector<3x16xi1>
    %cst_102 = arith.constant 1.000000e+00 : f32
    %397 = vector.broadcast %cst_102 : f32 to vector<3x16xf32>
    %398 = arith.select %396, %397, %353 : vector<3x16xi1>, vector<3x16xf32>
    %c6_i32 = arith.constant 6 : i32
    %c3_i32_103 = arith.constant 3 : i32
    %399 = arith.muli %c6_i32, %c3_i32_103 : i32
    %400 = arith.index_cast %399 : i32 to index
    %c0_104 = arith.constant 0 : index
    %401 = vector.load %arg2[%400, %c0_104] : memref<48x8xf32, #tpu.memory_space<vmem>>, vector<3x8xf32>
    %cst_105 = arith.constant 5.000000e-01 : f32
    %402 = vector.broadcast %cst_105 : f32 to vector<3x8xf32>
    %403 = arith.cmpf ogt, %401, %402 : vector<3x8xf32>
    %404 = tpu.bitcast %401 : vector<3x8xf32> -> vector<3x8xi32>
    %c1056964608_i32_106 = arith.constant 1056964608 : i32
    %405 = vector.broadcast %c1056964608_i32_106 : i32 to vector<3x8xi32>
    %406 = arith.subi %404, %405 : vector<3x8xi32>
    %c4_i32_107 = arith.constant 4 : i32
    %407 = vector.broadcast %c4_i32_107 : i32 to vector<3x8xi32>
    %408 = arith.shli %406, %407 : vector<3x8xi32>
    %409 = vector.broadcast %125 : vector<1x8xi32> to vector<3x8xi32>
    %410 = arith.subi %409, %391 : vector<3x8xi32>
    %411 = arith.ori %408, %410 : vector<3x8xi32>
    %c-1_i32_108 = arith.constant -1 : i32
    %412 = vector.broadcast %c-1_i32_108 : i32 to vector<3x8xi32>
    %413 = arith.select %403, %411, %412 : vector<3x8xi1>, vector<3x8xi32>
    %cst_109 = arith.constant dense<-2147483648> : vector<3xi32>
    %414 = vector.multi_reduction <maxsi>, %413, %cst_109 [1] : vector<3x8xi32> to vector<3xi32>
    %415 = vector.shape_cast %414 : vector<3xi32> to vector<3x1xi32>
    %416 = vector.broadcast %c6_i32 : i32 to vector<3x1xi32>
    %417 = arith.cmpi slt, %416, %112 : vector<3x1xi32>
    %c0_i32_110 = arith.constant 0 : i32
    %418 = vector.broadcast %c0_i32_110 : i32 to vector<3x1xi32>
    %419 = arith.cmpi sge, %415, %418 : vector<3x1xi32>
    %420 = arith.andi %417, %419 : vector<3x1xi1>
    %c1_i32_111 = arith.constant 1 : i32
    %421 = vector.broadcast %c1_i32_111 : i32 to vector<3x1xi32>
    %422 = arith.andi %415, %421 : vector<3x1xi32>
    %c1_i32_112 = arith.constant 1 : i32
    %423 = vector.broadcast %c1_i32_112 : i32 to vector<3x1xi32>
    %424 = arith.cmpi eq, %422, %423 : vector<3x1xi32>
    %425 = arith.andi %420, %424 : vector<3x1xi1>
    %c1_i32_113 = arith.constant 1 : i32
    %426 = vector.broadcast %c1_i32_113 : i32 to vector<3x1xi32>
    %427 = arith.shrsi %415, %426 : vector<3x1xi32>
    %c7_i32_114 = arith.constant 7 : i32
    %428 = vector.broadcast %c7_i32_114 : i32 to vector<3x1xi32>
    %429 = arith.andi %427, %428 : vector<3x1xi32>
    %430 = vector.broadcast %121 : vector<1x8xi32> to vector<3x8xi32>
    %431 = vector.broadcast %429 : vector<3x1xi32> to vector<3x8xi32>
    %432 = arith.cmpi eq, %430, %431 : vector<3x8xi32>
    %433 = vector.broadcast %425 : vector<3x1xi1> to vector<3x8xi1>
    %434 = arith.andi %432, %433 : vector<3x8xi1>
    %c1_i32_115 = arith.constant 1 : i32
    %435 = vector.broadcast %c1_i32_115 : i32 to vector<3x8xi32>
    %436 = arith.select %434, %435, %391 : vector<3x8xi1>, vector<3x8xi32>
    %437 = vector.broadcast %c6_i32 : i32 to vector<1x16xi32>
    %438 = arith.cmpi eq, %126, %437 : vector<1x16xi32>
    %439 = vector.broadcast %438 : vector<1x16xi1> to vector<3x16xi1>
    %440 = vector.broadcast %425 : vector<3x1xi1> to vector<3x16xi1>
    %441 = arith.andi %439, %440 : vector<3x16xi1>
    %cst_116 = arith.constant 1.000000e+00 : f32
    %442 = vector.broadcast %cst_116 : f32 to vector<3x16xf32>
    %443 = arith.select %441, %442, %398 : vector<3x16xi1>, vector<3x16xf32>
    %c7_i32_117 = arith.constant 7 : i32
    %c3_i32_118 = arith.constant 3 : i32
    %444 = arith.muli %c7_i32_117, %c3_i32_118 : i32
    %445 = arith.index_cast %444 : i32 to index
    %c0_119 = arith.constant 0 : index
    %446 = vector.load %arg2[%445, %c0_119] : memref<48x8xf32, #tpu.memory_space<vmem>>, vector<3x8xf32>
    %cst_120 = arith.constant 5.000000e-01 : f32
    %447 = vector.broadcast %cst_120 : f32 to vector<3x8xf32>
    %448 = arith.cmpf ogt, %446, %447 : vector<3x8xf32>
    %449 = tpu.bitcast %446 : vector<3x8xf32> -> vector<3x8xi32>
    %c1056964608_i32_121 = arith.constant 1056964608 : i32
    %450 = vector.broadcast %c1056964608_i32_121 : i32 to vector<3x8xi32>
    %451 = arith.subi %449, %450 : vector<3x8xi32>
    %c4_i32_122 = arith.constant 4 : i32
    %452 = vector.broadcast %c4_i32_122 : i32 to vector<3x8xi32>
    %453 = arith.shli %451, %452 : vector<3x8xi32>
    %454 = vector.broadcast %125 : vector<1x8xi32> to vector<3x8xi32>
    %455 = arith.subi %454, %436 : vector<3x8xi32>
    %456 = arith.ori %453, %455 : vector<3x8xi32>
    %c-1_i32_123 = arith.constant -1 : i32
    %457 = vector.broadcast %c-1_i32_123 : i32 to vector<3x8xi32>
    %458 = arith.select %448, %456, %457 : vector<3x8xi1>, vector<3x8xi32>
    %cst_124 = arith.constant dense<-2147483648> : vector<3xi32>
    %459 = vector.multi_reduction <maxsi>, %458, %cst_124 [1] : vector<3x8xi32> to vector<3xi32>
    %460 = vector.shape_cast %459 : vector<3xi32> to vector<3x1xi32>
    %461 = vector.broadcast %c7_i32_117 : i32 to vector<3x1xi32>
    %462 = arith.cmpi slt, %461, %112 : vector<3x1xi32>
    %c0_i32_125 = arith.constant 0 : i32
    %463 = vector.broadcast %c0_i32_125 : i32 to vector<3x1xi32>
    %464 = arith.cmpi sge, %460, %463 : vector<3x1xi32>
    %465 = arith.andi %462, %464 : vector<3x1xi1>
    %c1_i32_126 = arith.constant 1 : i32
    %466 = vector.broadcast %c1_i32_126 : i32 to vector<3x1xi32>
    %467 = arith.andi %460, %466 : vector<3x1xi32>
    %c1_i32_127 = arith.constant 1 : i32
    %468 = vector.broadcast %c1_i32_127 : i32 to vector<3x1xi32>
    %469 = arith.cmpi eq, %467, %468 : vector<3x1xi32>
    %470 = arith.andi %465, %469 : vector<3x1xi1>
    %c1_i32_128 = arith.constant 1 : i32
    %471 = vector.broadcast %c1_i32_128 : i32 to vector<3x1xi32>
    %472 = arith.shrsi %460, %471 : vector<3x1xi32>
    %c7_i32_129 = arith.constant 7 : i32
    %473 = vector.broadcast %c7_i32_129 : i32 to vector<3x1xi32>
    %474 = arith.andi %472, %473 : vector<3x1xi32>
    %475 = vector.broadcast %121 : vector<1x8xi32> to vector<3x8xi32>
    %476 = vector.broadcast %474 : vector<3x1xi32> to vector<3x8xi32>
    %477 = arith.cmpi eq, %475, %476 : vector<3x8xi32>
    %478 = vector.broadcast %470 : vector<3x1xi1> to vector<3x8xi1>
    %479 = arith.andi %477, %478 : vector<3x8xi1>
    %c1_i32_130 = arith.constant 1 : i32
    %480 = vector.broadcast %c1_i32_130 : i32 to vector<3x8xi32>
    %481 = arith.select %479, %480, %436 : vector<3x8xi1>, vector<3x8xi32>
    %482 = vector.broadcast %c7_i32_117 : i32 to vector<1x16xi32>
    %483 = arith.cmpi eq, %126, %482 : vector<1x16xi32>
    %484 = vector.broadcast %483 : vector<1x16xi1> to vector<3x16xi1>
    %485 = vector.broadcast %470 : vector<3x1xi1> to vector<3x16xi1>
    %486 = arith.andi %484, %485 : vector<3x16xi1>
    %cst_131 = arith.constant 1.000000e+00 : f32
    %487 = vector.broadcast %cst_131 : f32 to vector<3x16xf32>
    %488 = arith.select %486, %487, %443 : vector<3x16xi1>, vector<3x16xf32>
    %c8_i32 = arith.constant 8 : i32
    %c3_i32_132 = arith.constant 3 : i32
    %489 = arith.muli %c8_i32, %c3_i32_132 : i32
    %490 = arith.index_cast %489 : i32 to index
    %c0_133 = arith.constant 0 : index
    %491 = vector.load %arg2[%490, %c0_133] : memref<48x8xf32, #tpu.memory_space<vmem>>, vector<3x8xf32>
    %cst_134 = arith.constant 5.000000e-01 : f32
    %492 = vector.broadcast %cst_134 : f32 to vector<3x8xf32>
    %493 = arith.cmpf ogt, %491, %492 : vector<3x8xf32>
    %494 = tpu.bitcast %491 : vector<3x8xf32> -> vector<3x8xi32>
    %c1056964608_i32_135 = arith.constant 1056964608 : i32
    %495 = vector.broadcast %c1056964608_i32_135 : i32 to vector<3x8xi32>
    %496 = arith.subi %494, %495 : vector<3x8xi32>
    %c4_i32_136 = arith.constant 4 : i32
    %497 = vector.broadcast %c4_i32_136 : i32 to vector<3x8xi32>
    %498 = arith.shli %496, %497 : vector<3x8xi32>
    %499 = vector.broadcast %125 : vector<1x8xi32> to vector<3x8xi32>
    %500 = arith.subi %499, %481 : vector<3x8xi32>
    %501 = arith.ori %498, %500 : vector<3x8xi32>
    %c-1_i32_137 = arith.constant -1 : i32
    %502 = vector.broadcast %c-1_i32_137 : i32 to vector<3x8xi32>
    %503 = arith.select %493, %501, %502 : vector<3x8xi1>, vector<3x8xi32>
    %cst_138 = arith.constant dense<-2147483648> : vector<3xi32>
    %504 = vector.multi_reduction <maxsi>, %503, %cst_138 [1] : vector<3x8xi32> to vector<3xi32>
    %505 = vector.shape_cast %504 : vector<3xi32> to vector<3x1xi32>
    %506 = vector.broadcast %c8_i32 : i32 to vector<3x1xi32>
    %507 = arith.cmpi slt, %506, %112 : vector<3x1xi32>
    %c0_i32_139 = arith.constant 0 : i32
    %508 = vector.broadcast %c0_i32_139 : i32 to vector<3x1xi32>
    %509 = arith.cmpi sge, %505, %508 : vector<3x1xi32>
    %510 = arith.andi %507, %509 : vector<3x1xi1>
    %c1_i32_140 = arith.constant 1 : i32
    %511 = vector.broadcast %c1_i32_140 : i32 to vector<3x1xi32>
    %512 = arith.andi %505, %511 : vector<3x1xi32>
    %c1_i32_141 = arith.constant 1 : i32
    %513 = vector.broadcast %c1_i32_141 : i32 to vector<3x1xi32>
    %514 = arith.cmpi eq, %512, %513 : vector<3x1xi32>
    %515 = arith.andi %510, %514 : vector<3x1xi1>
    %c1_i32_142 = arith.constant 1 : i32
    %516 = vector.broadcast %c1_i32_142 : i32 to vector<3x1xi32>
    %517 = arith.shrsi %505, %516 : vector<3x1xi32>
    %c7_i32_143 = arith.constant 7 : i32
    %518 = vector.broadcast %c7_i32_143 : i32 to vector<3x1xi32>
    %519 = arith.andi %517, %518 : vector<3x1xi32>
    %520 = vector.broadcast %121 : vector<1x8xi32> to vector<3x8xi32>
    %521 = vector.broadcast %519 : vector<3x1xi32> to vector<3x8xi32>
    %522 = arith.cmpi eq, %520, %521 : vector<3x8xi32>
    %523 = vector.broadcast %515 : vector<3x1xi1> to vector<3x8xi1>
    %524 = arith.andi %522, %523 : vector<3x8xi1>
    %c1_i32_144 = arith.constant 1 : i32
    %525 = vector.broadcast %c1_i32_144 : i32 to vector<3x8xi32>
    %526 = arith.select %524, %525, %481 : vector<3x8xi1>, vector<3x8xi32>
    %527 = vector.broadcast %c8_i32 : i32 to vector<1x16xi32>
    %528 = arith.cmpi eq, %126, %527 : vector<1x16xi32>
    %529 = vector.broadcast %528 : vector<1x16xi1> to vector<3x16xi1>
    %530 = vector.broadcast %515 : vector<3x1xi1> to vector<3x16xi1>
    %531 = arith.andi %529, %530 : vector<3x16xi1>
    %cst_145 = arith.constant 1.000000e+00 : f32
    %532 = vector.broadcast %cst_145 : f32 to vector<3x16xf32>
    %533 = arith.select %531, %532, %488 : vector<3x16xi1>, vector<3x16xf32>
    %c9_i32 = arith.constant 9 : i32
    %c3_i32_146 = arith.constant 3 : i32
    %534 = arith.muli %c9_i32, %c3_i32_146 : i32
    %535 = arith.index_cast %534 : i32 to index
    %c0_147 = arith.constant 0 : index
    %536 = vector.load %arg2[%535, %c0_147] : memref<48x8xf32, #tpu.memory_space<vmem>>, vector<3x8xf32>
    %cst_148 = arith.constant 5.000000e-01 : f32
    %537 = vector.broadcast %cst_148 : f32 to vector<3x8xf32>
    %538 = arith.cmpf ogt, %536, %537 : vector<3x8xf32>
    %539 = tpu.bitcast %536 : vector<3x8xf32> -> vector<3x8xi32>
    %c1056964608_i32_149 = arith.constant 1056964608 : i32
    %540 = vector.broadcast %c1056964608_i32_149 : i32 to vector<3x8xi32>
    %541 = arith.subi %539, %540 : vector<3x8xi32>
    %c4_i32_150 = arith.constant 4 : i32
    %542 = vector.broadcast %c4_i32_150 : i32 to vector<3x8xi32>
    %543 = arith.shli %541, %542 : vector<3x8xi32>
    %544 = vector.broadcast %125 : vector<1x8xi32> to vector<3x8xi32>
    %545 = arith.subi %544, %526 : vector<3x8xi32>
    %546 = arith.ori %543, %545 : vector<3x8xi32>
    %c-1_i32_151 = arith.constant -1 : i32
    %547 = vector.broadcast %c-1_i32_151 : i32 to vector<3x8xi32>
    %548 = arith.select %538, %546, %547 : vector<3x8xi1>, vector<3x8xi32>
    %cst_152 = arith.constant dense<-2147483648> : vector<3xi32>
    %549 = vector.multi_reduction <maxsi>, %548, %cst_152 [1] : vector<3x8xi32> to vector<3xi32>
    %550 = vector.shape_cast %549 : vector<3xi32> to vector<3x1xi32>
    %551 = vector.broadcast %c9_i32 : i32 to vector<3x1xi32>
    %552 = arith.cmpi slt, %551, %112 : vector<3x1xi32>
    %c0_i32_153 = arith.constant 0 : i32
    %553 = vector.broadcast %c0_i32_153 : i32 to vector<3x1xi32>
    %554 = arith.cmpi sge, %550, %553 : vector<3x1xi32>
    %555 = arith.andi %552, %554 : vector<3x1xi1>
    %c1_i32_154 = arith.constant 1 : i32
    %556 = vector.broadcast %c1_i32_154 : i32 to vector<3x1xi32>
    %557 = arith.andi %550, %556 : vector<3x1xi32>
    %c1_i32_155 = arith.constant 1 : i32
    %558 = vector.broadcast %c1_i32_155 : i32 to vector<3x1xi32>
    %559 = arith.cmpi eq, %557, %558 : vector<3x1xi32>
    %560 = arith.andi %555, %559 : vector<3x1xi1>
    %c1_i32_156 = arith.constant 1 : i32
    %561 = vector.broadcast %c1_i32_156 : i32 to vector<3x1xi32>
    %562 = arith.shrsi %550, %561 : vector<3x1xi32>
    %c7_i32_157 = arith.constant 7 : i32
    %563 = vector.broadcast %c7_i32_157 : i32 to vector<3x1xi32>
    %564 = arith.andi %562, %563 : vector<3x1xi32>
    %565 = vector.broadcast %121 : vector<1x8xi32> to vector<3x8xi32>
    %566 = vector.broadcast %564 : vector<3x1xi32> to vector<3x8xi32>
    %567 = arith.cmpi eq, %565, %566 : vector<3x8xi32>
    %568 = vector.broadcast %560 : vector<3x1xi1> to vector<3x8xi1>
    %569 = arith.andi %567, %568 : vector<3x8xi1>
    %c1_i32_158 = arith.constant 1 : i32
    %570 = vector.broadcast %c1_i32_158 : i32 to vector<3x8xi32>
    %571 = arith.select %569, %570, %526 : vector<3x8xi1>, vector<3x8xi32>
    %572 = vector.broadcast %c9_i32 : i32 to vector<1x16xi32>
    %573 = arith.cmpi eq, %126, %572 : vector<1x16xi32>
    %574 = vector.broadcast %573 : vector<1x16xi1> to vector<3x16xi1>
    %575 = vector.broadcast %560 : vector<3x1xi1> to vector<3x16xi1>
    %576 = arith.andi %574, %575 : vector<3x16xi1>
    %cst_159 = arith.constant 1.000000e+00 : f32
    %577 = vector.broadcast %cst_159 : f32 to vector<3x16xf32>
    %578 = arith.select %576, %577, %533 : vector<3x16xi1>, vector<3x16xf32>
    %c10_i32 = arith.constant 10 : i32
    %c3_i32_160 = arith.constant 3 : i32
    %579 = arith.muli %c10_i32, %c3_i32_160 : i32
    %580 = arith.index_cast %579 : i32 to index
    %c0_161 = arith.constant 0 : index
    %581 = vector.load %arg2[%580, %c0_161] : memref<48x8xf32, #tpu.memory_space<vmem>>, vector<3x8xf32>
    %cst_162 = arith.constant 5.000000e-01 : f32
    %582 = vector.broadcast %cst_162 : f32 to vector<3x8xf32>
    %583 = arith.cmpf ogt, %581, %582 : vector<3x8xf32>
    %584 = tpu.bitcast %581 : vector<3x8xf32> -> vector<3x8xi32>
    %c1056964608_i32_163 = arith.constant 1056964608 : i32
    %585 = vector.broadcast %c1056964608_i32_163 : i32 to vector<3x8xi32>
    %586 = arith.subi %584, %585 : vector<3x8xi32>
    %c4_i32_164 = arith.constant 4 : i32
    %587 = vector.broadcast %c4_i32_164 : i32 to vector<3x8xi32>
    %588 = arith.shli %586, %587 : vector<3x8xi32>
    %589 = vector.broadcast %125 : vector<1x8xi32> to vector<3x8xi32>
    %590 = arith.subi %589, %571 : vector<3x8xi32>
    %591 = arith.ori %588, %590 : vector<3x8xi32>
    %c-1_i32_165 = arith.constant -1 : i32
    %592 = vector.broadcast %c-1_i32_165 : i32 to vector<3x8xi32>
    %593 = arith.select %583, %591, %592 : vector<3x8xi1>, vector<3x8xi32>
    %cst_166 = arith.constant dense<-2147483648> : vector<3xi32>
    %594 = vector.multi_reduction <maxsi>, %593, %cst_166 [1] : vector<3x8xi32> to vector<3xi32>
    %595 = vector.shape_cast %594 : vector<3xi32> to vector<3x1xi32>
    %596 = vector.broadcast %c10_i32 : i32 to vector<3x1xi32>
    %597 = arith.cmpi slt, %596, %112 : vector<3x1xi32>
    %c0_i32_167 = arith.constant 0 : i32
    %598 = vector.broadcast %c0_i32_167 : i32 to vector<3x1xi32>
    %599 = arith.cmpi sge, %595, %598 : vector<3x1xi32>
    %600 = arith.andi %597, %599 : vector<3x1xi1>
    %c1_i32_168 = arith.constant 1 : i32
    %601 = vector.broadcast %c1_i32_168 : i32 to vector<3x1xi32>
    %602 = arith.andi %595, %601 : vector<3x1xi32>
    %c1_i32_169 = arith.constant 1 : i32
    %603 = vector.broadcast %c1_i32_169 : i32 to vector<3x1xi32>
    %604 = arith.cmpi eq, %602, %603 : vector<3x1xi32>
    %605 = arith.andi %600, %604 : vector<3x1xi1>
    %c1_i32_170 = arith.constant 1 : i32
    %606 = vector.broadcast %c1_i32_170 : i32 to vector<3x1xi32>
    %607 = arith.shrsi %595, %606 : vector<3x1xi32>
    %c7_i32_171 = arith.constant 7 : i32
    %608 = vector.broadcast %c7_i32_171 : i32 to vector<3x1xi32>
    %609 = arith.andi %607, %608 : vector<3x1xi32>
    %610 = vector.broadcast %121 : vector<1x8xi32> to vector<3x8xi32>
    %611 = vector.broadcast %609 : vector<3x1xi32> to vector<3x8xi32>
    %612 = arith.cmpi eq, %610, %611 : vector<3x8xi32>
    %613 = vector.broadcast %605 : vector<3x1xi1> to vector<3x8xi1>
    %614 = arith.andi %612, %613 : vector<3x8xi1>
    %c1_i32_172 = arith.constant 1 : i32
    %615 = vector.broadcast %c1_i32_172 : i32 to vector<3x8xi32>
    %616 = arith.select %614, %615, %571 : vector<3x8xi1>, vector<3x8xi32>
    %617 = vector.broadcast %c10_i32 : i32 to vector<1x16xi32>
    %618 = arith.cmpi eq, %126, %617 : vector<1x16xi32>
    %619 = vector.broadcast %618 : vector<1x16xi1> to vector<3x16xi1>
    %620 = vector.broadcast %605 : vector<3x1xi1> to vector<3x16xi1>
    %621 = arith.andi %619, %620 : vector<3x16xi1>
    %cst_173 = arith.constant 1.000000e+00 : f32
    %622 = vector.broadcast %cst_173 : f32 to vector<3x16xf32>
    %623 = arith.select %621, %622, %578 : vector<3x16xi1>, vector<3x16xf32>
    %c11_i32 = arith.constant 11 : i32
    %c3_i32_174 = arith.constant 3 : i32
    %624 = arith.muli %c11_i32, %c3_i32_174 : i32
    %625 = arith.index_cast %624 : i32 to index
    %c0_175 = arith.constant 0 : index
    %626 = vector.load %arg2[%625, %c0_175] : memref<48x8xf32, #tpu.memory_space<vmem>>, vector<3x8xf32>
    %cst_176 = arith.constant 5.000000e-01 : f32
    %627 = vector.broadcast %cst_176 : f32 to vector<3x8xf32>
    %628 = arith.cmpf ogt, %626, %627 : vector<3x8xf32>
    %629 = tpu.bitcast %626 : vector<3x8xf32> -> vector<3x8xi32>
    %c1056964608_i32_177 = arith.constant 1056964608 : i32
    %630 = vector.broadcast %c1056964608_i32_177 : i32 to vector<3x8xi32>
    %631 = arith.subi %629, %630 : vector<3x8xi32>
    %c4_i32_178 = arith.constant 4 : i32
    %632 = vector.broadcast %c4_i32_178 : i32 to vector<3x8xi32>
    %633 = arith.shli %631, %632 : vector<3x8xi32>
    %634 = vector.broadcast %125 : vector<1x8xi32> to vector<3x8xi32>
    %635 = arith.subi %634, %616 : vector<3x8xi32>
    %636 = arith.ori %633, %635 : vector<3x8xi32>
    %c-1_i32_179 = arith.constant -1 : i32
    %637 = vector.broadcast %c-1_i32_179 : i32 to vector<3x8xi32>
    %638 = arith.select %628, %636, %637 : vector<3x8xi1>, vector<3x8xi32>
    %cst_180 = arith.constant dense<-2147483648> : vector<3xi32>
    %639 = vector.multi_reduction <maxsi>, %638, %cst_180 [1] : vector<3x8xi32> to vector<3xi32>
    %640 = vector.shape_cast %639 : vector<3xi32> to vector<3x1xi32>
    %641 = vector.broadcast %c11_i32 : i32 to vector<3x1xi32>
    %642 = arith.cmpi slt, %641, %112 : vector<3x1xi32>
    %c0_i32_181 = arith.constant 0 : i32
    %643 = vector.broadcast %c0_i32_181 : i32 to vector<3x1xi32>
    %644 = arith.cmpi sge, %640, %643 : vector<3x1xi32>
    %645 = arith.andi %642, %644 : vector<3x1xi1>
    %c1_i32_182 = arith.constant 1 : i32
    %646 = vector.broadcast %c1_i32_182 : i32 to vector<3x1xi32>
    %647 = arith.andi %640, %646 : vector<3x1xi32>
    %c1_i32_183 = arith.constant 1 : i32
    %648 = vector.broadcast %c1_i32_183 : i32 to vector<3x1xi32>
    %649 = arith.cmpi eq, %647, %648 : vector<3x1xi32>
    %650 = arith.andi %645, %649 : vector<3x1xi1>
    %c1_i32_184 = arith.constant 1 : i32
    %651 = vector.broadcast %c1_i32_184 : i32 to vector<3x1xi32>
    %652 = arith.shrsi %640, %651 : vector<3x1xi32>
    %c7_i32_185 = arith.constant 7 : i32
    %653 = vector.broadcast %c7_i32_185 : i32 to vector<3x1xi32>
    %654 = arith.andi %652, %653 : vector<3x1xi32>
    %655 = vector.broadcast %121 : vector<1x8xi32> to vector<3x8xi32>
    %656 = vector.broadcast %654 : vector<3x1xi32> to vector<3x8xi32>
    %657 = arith.cmpi eq, %655, %656 : vector<3x8xi32>
    %658 = vector.broadcast %650 : vector<3x1xi1> to vector<3x8xi1>
    %659 = arith.andi %657, %658 : vector<3x8xi1>
    %c1_i32_186 = arith.constant 1 : i32
    %660 = vector.broadcast %c1_i32_186 : i32 to vector<3x8xi32>
    %661 = arith.select %659, %660, %616 : vector<3x8xi1>, vector<3x8xi32>
    %662 = vector.broadcast %c11_i32 : i32 to vector<1x16xi32>
    %663 = arith.cmpi eq, %126, %662 : vector<1x16xi32>
    %664 = vector.broadcast %663 : vector<1x16xi1> to vector<3x16xi1>
    %665 = vector.broadcast %650 : vector<3x1xi1> to vector<3x16xi1>
    %666 = arith.andi %664, %665 : vector<3x16xi1>
    %cst_187 = arith.constant 1.000000e+00 : f32
    %667 = vector.broadcast %cst_187 : f32 to vector<3x16xf32>
    %668 = arith.select %666, %667, %623 : vector<3x16xi1>, vector<3x16xf32>
    %c12_i32 = arith.constant 12 : i32
    %c3_i32_188 = arith.constant 3 : i32
    %669 = arith.muli %c12_i32, %c3_i32_188 : i32
    %670 = arith.index_cast %669 : i32 to index
    %c0_189 = arith.constant 0 : index
    %671 = vector.load %arg2[%670, %c0_189] : memref<48x8xf32, #tpu.memory_space<vmem>>, vector<3x8xf32>
    %cst_190 = arith.constant 5.000000e-01 : f32
    %672 = vector.broadcast %cst_190 : f32 to vector<3x8xf32>
    %673 = arith.cmpf ogt, %671, %672 : vector<3x8xf32>
    %674 = tpu.bitcast %671 : vector<3x8xf32> -> vector<3x8xi32>
    %c1056964608_i32_191 = arith.constant 1056964608 : i32
    %675 = vector.broadcast %c1056964608_i32_191 : i32 to vector<3x8xi32>
    %676 = arith.subi %674, %675 : vector<3x8xi32>
    %c4_i32_192 = arith.constant 4 : i32
    %677 = vector.broadcast %c4_i32_192 : i32 to vector<3x8xi32>
    %678 = arith.shli %676, %677 : vector<3x8xi32>
    %679 = vector.broadcast %125 : vector<1x8xi32> to vector<3x8xi32>
    %680 = arith.subi %679, %661 : vector<3x8xi32>
    %681 = arith.ori %678, %680 : vector<3x8xi32>
    %c-1_i32_193 = arith.constant -1 : i32
    %682 = vector.broadcast %c-1_i32_193 : i32 to vector<3x8xi32>
    %683 = arith.select %673, %681, %682 : vector<3x8xi1>, vector<3x8xi32>
    %cst_194 = arith.constant dense<-2147483648> : vector<3xi32>
    %684 = vector.multi_reduction <maxsi>, %683, %cst_194 [1] : vector<3x8xi32> to vector<3xi32>
    %685 = vector.shape_cast %684 : vector<3xi32> to vector<3x1xi32>
    %686 = vector.broadcast %c12_i32 : i32 to vector<3x1xi32>
    %687 = arith.cmpi slt, %686, %112 : vector<3x1xi32>
    %c0_i32_195 = arith.constant 0 : i32
    %688 = vector.broadcast %c0_i32_195 : i32 to vector<3x1xi32>
    %689 = arith.cmpi sge, %685, %688 : vector<3x1xi32>
    %690 = arith.andi %687, %689 : vector<3x1xi1>
    %c1_i32_196 = arith.constant 1 : i32
    %691 = vector.broadcast %c1_i32_196 : i32 to vector<3x1xi32>
    %692 = arith.andi %685, %691 : vector<3x1xi32>
    %c1_i32_197 = arith.constant 1 : i32
    %693 = vector.broadcast %c1_i32_197 : i32 to vector<3x1xi32>
    %694 = arith.cmpi eq, %692, %693 : vector<3x1xi32>
    %695 = arith.andi %690, %694 : vector<3x1xi1>
    %c1_i32_198 = arith.constant 1 : i32
    %696 = vector.broadcast %c1_i32_198 : i32 to vector<3x1xi32>
    %697 = arith.shrsi %685, %696 : vector<3x1xi32>
    %c7_i32_199 = arith.constant 7 : i32
    %698 = vector.broadcast %c7_i32_199 : i32 to vector<3x1xi32>
    %699 = arith.andi %697, %698 : vector<3x1xi32>
    %700 = vector.broadcast %121 : vector<1x8xi32> to vector<3x8xi32>
    %701 = vector.broadcast %699 : vector<3x1xi32> to vector<3x8xi32>
    %702 = arith.cmpi eq, %700, %701 : vector<3x8xi32>
    %703 = vector.broadcast %695 : vector<3x1xi1> to vector<3x8xi1>
    %704 = arith.andi %702, %703 : vector<3x8xi1>
    %c1_i32_200 = arith.constant 1 : i32
    %705 = vector.broadcast %c1_i32_200 : i32 to vector<3x8xi32>
    %706 = arith.select %704, %705, %661 : vector<3x8xi1>, vector<3x8xi32>
    %707 = vector.broadcast %c12_i32 : i32 to vector<1x16xi32>
    %708 = arith.cmpi eq, %126, %707 : vector<1x16xi32>
    %709 = vector.broadcast %708 : vector<1x16xi1> to vector<3x16xi1>
    %710 = vector.broadcast %695 : vector<3x1xi1> to vector<3x16xi1>
    %711 = arith.andi %709, %710 : vector<3x16xi1>
    %cst_201 = arith.constant 1.000000e+00 : f32
    %712 = vector.broadcast %cst_201 : f32 to vector<3x16xf32>
    %713 = arith.select %711, %712, %668 : vector<3x16xi1>, vector<3x16xf32>
    %c13_i32 = arith.constant 13 : i32
    %c3_i32_202 = arith.constant 3 : i32
    %714 = arith.muli %c13_i32, %c3_i32_202 : i32
    %715 = arith.index_cast %714 : i32 to index
    %c0_203 = arith.constant 0 : index
    %716 = vector.load %arg2[%715, %c0_203] : memref<48x8xf32, #tpu.memory_space<vmem>>, vector<3x8xf32>
    %cst_204 = arith.constant 5.000000e-01 : f32
    %717 = vector.broadcast %cst_204 : f32 to vector<3x8xf32>
    %718 = arith.cmpf ogt, %716, %717 : vector<3x8xf32>
    %719 = tpu.bitcast %716 : vector<3x8xf32> -> vector<3x8xi32>
    %c1056964608_i32_205 = arith.constant 1056964608 : i32
    %720 = vector.broadcast %c1056964608_i32_205 : i32 to vector<3x8xi32>
    %721 = arith.subi %719, %720 : vector<3x8xi32>
    %c4_i32_206 = arith.constant 4 : i32
    %722 = vector.broadcast %c4_i32_206 : i32 to vector<3x8xi32>
    %723 = arith.shli %721, %722 : vector<3x8xi32>
    %724 = vector.broadcast %125 : vector<1x8xi32> to vector<3x8xi32>
    %725 = arith.subi %724, %706 : vector<3x8xi32>
    %726 = arith.ori %723, %725 : vector<3x8xi32>
    %c-1_i32_207 = arith.constant -1 : i32
    %727 = vector.broadcast %c-1_i32_207 : i32 to vector<3x8xi32>
    %728 = arith.select %718, %726, %727 : vector<3x8xi1>, vector<3x8xi32>
    %cst_208 = arith.constant dense<-2147483648> : vector<3xi32>
    %729 = vector.multi_reduction <maxsi>, %728, %cst_208 [1] : vector<3x8xi32> to vector<3xi32>
    %730 = vector.shape_cast %729 : vector<3xi32> to vector<3x1xi32>
    %731 = vector.broadcast %c13_i32 : i32 to vector<3x1xi32>
    %732 = arith.cmpi slt, %731, %112 : vector<3x1xi32>
    %c0_i32_209 = arith.constant 0 : i32
    %733 = vector.broadcast %c0_i32_209 : i32 to vector<3x1xi32>
    %734 = arith.cmpi sge, %730, %733 : vector<3x1xi32>
    %735 = arith.andi %732, %734 : vector<3x1xi1>
    %c1_i32_210 = arith.constant 1 : i32
    %736 = vector.broadcast %c1_i32_210 : i32 to vector<3x1xi32>
    %737 = arith.andi %730, %736 : vector<3x1xi32>
    %c1_i32_211 = arith.constant 1 : i32
    %738 = vector.broadcast %c1_i32_211 : i32 to vector<3x1xi32>
    %739 = arith.cmpi eq, %737, %738 : vector<3x1xi32>
    %740 = arith.andi %735, %739 : vector<3x1xi1>
    %c1_i32_212 = arith.constant 1 : i32
    %741 = vector.broadcast %c1_i32_212 : i32 to vector<3x1xi32>
    %742 = arith.shrsi %730, %741 : vector<3x1xi32>
    %c7_i32_213 = arith.constant 7 : i32
    %743 = vector.broadcast %c7_i32_213 : i32 to vector<3x1xi32>
    %744 = arith.andi %742, %743 : vector<3x1xi32>
    %745 = vector.broadcast %121 : vector<1x8xi32> to vector<3x8xi32>
    %746 = vector.broadcast %744 : vector<3x1xi32> to vector<3x8xi32>
    %747 = arith.cmpi eq, %745, %746 : vector<3x8xi32>
    %748 = vector.broadcast %740 : vector<3x1xi1> to vector<3x8xi1>
    %749 = arith.andi %747, %748 : vector<3x8xi1>
    %c1_i32_214 = arith.constant 1 : i32
    %750 = vector.broadcast %c1_i32_214 : i32 to vector<3x8xi32>
    %751 = arith.select %749, %750, %706 : vector<3x8xi1>, vector<3x8xi32>
    %752 = vector.broadcast %c13_i32 : i32 to vector<1x16xi32>
    %753 = arith.cmpi eq, %126, %752 : vector<1x16xi32>
    %754 = vector.broadcast %753 : vector<1x16xi1> to vector<3x16xi1>
    %755 = vector.broadcast %740 : vector<3x1xi1> to vector<3x16xi1>
    %756 = arith.andi %754, %755 : vector<3x16xi1>
    %cst_215 = arith.constant 1.000000e+00 : f32
    %757 = vector.broadcast %cst_215 : f32 to vector<3x16xf32>
    %758 = arith.select %756, %757, %713 : vector<3x16xi1>, vector<3x16xf32>
    %c14_i32 = arith.constant 14 : i32
    %c3_i32_216 = arith.constant 3 : i32
    %759 = arith.muli %c14_i32, %c3_i32_216 : i32
    %760 = arith.index_cast %759 : i32 to index
    %c0_217 = arith.constant 0 : index
    %761 = vector.load %arg2[%760, %c0_217] : memref<48x8xf32, #tpu.memory_space<vmem>>, vector<3x8xf32>
    %cst_218 = arith.constant 5.000000e-01 : f32
    %762 = vector.broadcast %cst_218 : f32 to vector<3x8xf32>
    %763 = arith.cmpf ogt, %761, %762 : vector<3x8xf32>
    %764 = tpu.bitcast %761 : vector<3x8xf32> -> vector<3x8xi32>
    %c1056964608_i32_219 = arith.constant 1056964608 : i32
    %765 = vector.broadcast %c1056964608_i32_219 : i32 to vector<3x8xi32>
    %766 = arith.subi %764, %765 : vector<3x8xi32>
    %c4_i32_220 = arith.constant 4 : i32
    %767 = vector.broadcast %c4_i32_220 : i32 to vector<3x8xi32>
    %768 = arith.shli %766, %767 : vector<3x8xi32>
    %769 = vector.broadcast %125 : vector<1x8xi32> to vector<3x8xi32>
    %770 = arith.subi %769, %751 : vector<3x8xi32>
    %771 = arith.ori %768, %770 : vector<3x8xi32>
    %c-1_i32_221 = arith.constant -1 : i32
    %772 = vector.broadcast %c-1_i32_221 : i32 to vector<3x8xi32>
    %773 = arith.select %763, %771, %772 : vector<3x8xi1>, vector<3x8xi32>
    %cst_222 = arith.constant dense<-2147483648> : vector<3xi32>
    %774 = vector.multi_reduction <maxsi>, %773, %cst_222 [1] : vector<3x8xi32> to vector<3xi32>
    %775 = vector.shape_cast %774 : vector<3xi32> to vector<3x1xi32>
    %776 = vector.broadcast %c14_i32 : i32 to vector<3x1xi32>
    %777 = arith.cmpi slt, %776, %112 : vector<3x1xi32>
    %c0_i32_223 = arith.constant 0 : i32
    %778 = vector.broadcast %c0_i32_223 : i32 to vector<3x1xi32>
    %779 = arith.cmpi sge, %775, %778 : vector<3x1xi32>
    %780 = arith.andi %777, %779 : vector<3x1xi1>
    %c1_i32_224 = arith.constant 1 : i32
    %781 = vector.broadcast %c1_i32_224 : i32 to vector<3x1xi32>
    %782 = arith.andi %775, %781 : vector<3x1xi32>
    %c1_i32_225 = arith.constant 1 : i32
    %783 = vector.broadcast %c1_i32_225 : i32 to vector<3x1xi32>
    %784 = arith.cmpi eq, %782, %783 : vector<3x1xi32>
    %785 = arith.andi %780, %784 : vector<3x1xi1>
    %c1_i32_226 = arith.constant 1 : i32
    %786 = vector.broadcast %c1_i32_226 : i32 to vector<3x1xi32>
    %787 = arith.shrsi %775, %786 : vector<3x1xi32>
    %c7_i32_227 = arith.constant 7 : i32
    %788 = vector.broadcast %c7_i32_227 : i32 to vector<3x1xi32>
    %789 = arith.andi %787, %788 : vector<3x1xi32>
    %790 = vector.broadcast %121 : vector<1x8xi32> to vector<3x8xi32>
    %791 = vector.broadcast %789 : vector<3x1xi32> to vector<3x8xi32>
    %792 = arith.cmpi eq, %790, %791 : vector<3x8xi32>
    %793 = vector.broadcast %785 : vector<3x1xi1> to vector<3x8xi1>
    %794 = arith.andi %792, %793 : vector<3x8xi1>
    %c1_i32_228 = arith.constant 1 : i32
    %795 = vector.broadcast %c1_i32_228 : i32 to vector<3x8xi32>
    %796 = arith.select %794, %795, %751 : vector<3x8xi1>, vector<3x8xi32>
    %797 = vector.broadcast %c14_i32 : i32 to vector<1x16xi32>
    %798 = arith.cmpi eq, %126, %797 : vector<1x16xi32>
    %799 = vector.broadcast %798 : vector<1x16xi1> to vector<3x16xi1>
    %800 = vector.broadcast %785 : vector<3x1xi1> to vector<3x16xi1>
    %801 = arith.andi %799, %800 : vector<3x16xi1>
    %cst_229 = arith.constant 1.000000e+00 : f32
    %802 = vector.broadcast %cst_229 : f32 to vector<3x16xf32>
    %803 = arith.select %801, %802, %758 : vector<3x16xi1>, vector<3x16xf32>
    %c15_i32 = arith.constant 15 : i32
    %c3_i32_230 = arith.constant 3 : i32
    %804 = arith.muli %c15_i32, %c3_i32_230 : i32
    %805 = arith.index_cast %804 : i32 to index
    %c0_231 = arith.constant 0 : index
    %806 = vector.load %arg2[%805, %c0_231] : memref<48x8xf32, #tpu.memory_space<vmem>>, vector<3x8xf32>
    %cst_232 = arith.constant 5.000000e-01 : f32
    %807 = vector.broadcast %cst_232 : f32 to vector<3x8xf32>
    %808 = arith.cmpf ogt, %806, %807 : vector<3x8xf32>
    %809 = tpu.bitcast %806 : vector<3x8xf32> -> vector<3x8xi32>
    %c1056964608_i32_233 = arith.constant 1056964608 : i32
    %810 = vector.broadcast %c1056964608_i32_233 : i32 to vector<3x8xi32>
    %811 = arith.subi %809, %810 : vector<3x8xi32>
    %c4_i32_234 = arith.constant 4 : i32
    %812 = vector.broadcast %c4_i32_234 : i32 to vector<3x8xi32>
    %813 = arith.shli %811, %812 : vector<3x8xi32>
    %814 = vector.broadcast %125 : vector<1x8xi32> to vector<3x8xi32>
    %815 = arith.subi %814, %796 : vector<3x8xi32>
    %816 = arith.ori %813, %815 : vector<3x8xi32>
    %c-1_i32_235 = arith.constant -1 : i32
    %817 = vector.broadcast %c-1_i32_235 : i32 to vector<3x8xi32>
    %818 = arith.select %808, %816, %817 : vector<3x8xi1>, vector<3x8xi32>
    %cst_236 = arith.constant dense<-2147483648> : vector<3xi32>
    %819 = vector.multi_reduction <maxsi>, %818, %cst_236 [1] : vector<3x8xi32> to vector<3xi32>
    %820 = vector.shape_cast %819 : vector<3xi32> to vector<3x1xi32>
    %821 = vector.broadcast %c15_i32 : i32 to vector<3x1xi32>
    %822 = arith.cmpi slt, %821, %112 : vector<3x1xi32>
    %c0_i32_237 = arith.constant 0 : i32
    %823 = vector.broadcast %c0_i32_237 : i32 to vector<3x1xi32>
    %824 = arith.cmpi sge, %820, %823 : vector<3x1xi32>
    %825 = arith.andi %822, %824 : vector<3x1xi1>
    %c1_i32_238 = arith.constant 1 : i32
    %826 = vector.broadcast %c1_i32_238 : i32 to vector<3x1xi32>
    %827 = arith.andi %820, %826 : vector<3x1xi32>
    %c1_i32_239 = arith.constant 1 : i32
    %828 = vector.broadcast %c1_i32_239 : i32 to vector<3x1xi32>
    %829 = arith.cmpi eq, %827, %828 : vector<3x1xi32>
    %830 = arith.andi %825, %829 : vector<3x1xi1>
    %c1_i32_240 = arith.constant 1 : i32
    %831 = vector.broadcast %c1_i32_240 : i32 to vector<3x1xi32>
    %832 = arith.shrsi %820, %831 : vector<3x1xi32>
    %c7_i32_241 = arith.constant 7 : i32
    %833 = vector.broadcast %c7_i32_241 : i32 to vector<3x1xi32>
    %834 = arith.andi %832, %833 : vector<3x1xi32>
    %835 = vector.broadcast %121 : vector<1x8xi32> to vector<3x8xi32>
    %836 = vector.broadcast %834 : vector<3x1xi32> to vector<3x8xi32>
    %837 = arith.cmpi eq, %835, %836 : vector<3x8xi32>
    %838 = vector.broadcast %830 : vector<3x1xi1> to vector<3x8xi1>
    %839 = arith.andi %837, %838 : vector<3x8xi1>
    %c1_i32_242 = arith.constant 1 : i32
    %840 = vector.broadcast %c1_i32_242 : i32 to vector<3x8xi32>
    %841 = arith.select %839, %840, %796 : vector<3x8xi1>, vector<3x8xi32>
    %842 = vector.broadcast %c15_i32 : i32 to vector<1x16xi32>
    %843 = arith.cmpi eq, %126, %842 : vector<1x16xi32>
    %844 = vector.broadcast %843 : vector<1x16xi1> to vector<3x16xi1>
    %845 = vector.broadcast %830 : vector<3x1xi1> to vector<3x16xi1>
    %846 = arith.andi %844, %845 : vector<3x16xi1>
    %cst_243 = arith.constant 1.000000e+00 : f32
    %847 = vector.broadcast %cst_243 : f32 to vector<3x16xf32>
    %848 = arith.select %846, %847, %803 : vector<3x16xi1>, vector<3x16xf32>
    %c16_i32 = arith.constant 16 : i32
    %849 = arith.cmpi sle, %46, %47 : vector<16x16xi32>
    %850 = arith.extui %849 : vector<16x16xi1> to vector<16x16xi32>
    %851 = arith.sitofp %850 : vector<16x16xi32> to vector<16x16xf32>
    %cst_244 = arith.constant dense<0.000000e+00> : vector<3x16xf32>
    %852 = tpu.matmul %848, %851, %cst_244 {dimension_numbers = #tpu.dot_dimension_numbers<[1], [0], [0], [1], [0, 0, 1, 1], [], []>} : vector<3x16xf32>, vector<16x16xf32>, vector<3x16xf32> -> vector<3x16xf32>
    %853 = arith.sitofp %126 : vector<1x16xi32> to vector<1x16xf32>
    %cst_245 = arith.constant 1.000010e+00 : f32
    %854 = vector.broadcast %cst_245 : f32 to vector<1x16xf32>
    %855 = arith.addf %853, %854 : vector<1x16xf32>
    %856 = vector.broadcast %855 : vector<1x16xf32> to vector<3x16xf32>
    %857 = arith.divf %852, %856 : vector<3x16xf32>
    %858 = arith.sitofp %118 : vector<3x1xi32> to vector<3x1xf32>
    %cst_246 = arith.constant 9.99999974E-6 : f32
    %859 = vector.broadcast %cst_246 : f32 to vector<3x1xf32>
    %860 = arith.addf %858, %859 : vector<3x1xf32>
    %861 = vector.broadcast %860 : vector<3x1xf32> to vector<3x16xf32>
    %862 = arith.divf %852, %861 : vector<3x16xf32>
    %863 = vector.broadcast %126 : vector<1x16xi32> to vector<3x16xi32>
    %864 = vector.broadcast %112 : vector<3x1xi32> to vector<3x16xi32>
    %865 = arith.cmpi slt, %863, %864 : vector<3x16xi32>
    %866 = tpu.iota {dimensions = array<i32: 0>} : vector<11x1xi32>
    %867 = arith.sitofp %866 : vector<11x1xi32> to vector<11x1xf32>
    %cst_247 = arith.constant 1.000000e-01 : f32
    %868 = vector.broadcast %cst_247 : f32 to vector<11x1xf32>
    %869 = arith.mulf %867, %868 : vector<11x1xf32>
    %cst_248 = arith.constant 0.000000e+00 : f32
    %870 = vector.broadcast %cst_248 : f32 to vector<1x1xf32>
    %871 = vector.extract_strided_slice %865 {offsets = [0, 0], sizes = [1, 16], strides = [1, 1]} : vector<3x16xi1> to vector<1x16xi1>
    %872 = vector.extract_strided_slice %862 {offsets = [0, 0], sizes = [1, 16], strides = [1, 1]} : vector<3x16xf32> to vector<1x16xf32>
    %873 = vector.broadcast %872 : vector<1x16xf32> to vector<11x16xf32>
    %874 = vector.broadcast %869 : vector<11x1xf32> to vector<11x16xf32>
    %875 = arith.cmpf oge, %873, %874 : vector<11x16xf32>
    %876 = vector.broadcast %871 : vector<1x16xi1> to vector<11x16xi1>
    %877 = arith.andi %876, %875 : vector<11x16xi1>
    %878 = vector.extract_strided_slice %857 {offsets = [0, 0], sizes = [1, 16], strides = [1, 1]} : vector<3x16xf32> to vector<1x16xf32>
    %cst_249 = arith.constant 0.000000e+00 : f32
    %879 = vector.shape_cast %878 : vector<1x16xf32> to vector<1x16xf32>
    %880 = vector.broadcast %879 : vector<1x16xf32> to vector<11x16xf32>
    %881 = vector.broadcast %cst_249 : f32 to vector<11x16xf32>
    %882 = arith.select %877, %880, %881 : vector<11x16xi1>, vector<11x16xf32>
    %cst_250 = arith.constant dense<0xFF800000> : vector<11xf32>
    %883 = vector.multi_reduction <maximumf>, %882, %cst_250 [1] : vector<11x16xf32> to vector<11xf32>
    %884 = vector.shape_cast %883 : vector<11xf32> to vector<11x1xf32>
    %cst_251 = arith.constant dense<0.000000e+00> : vector<1xf32>
    %885 = vector.multi_reduction <add>, %884, %cst_251 [0] : vector<11x1xf32> to vector<1xf32>
    %886 = vector.shape_cast %885 : vector<1xf32> to vector<1x1xf32>
    %cst_252 = arith.constant 0.0909090936 : f32
    %887 = vector.broadcast %cst_252 : f32 to vector<1x1xf32>
    %888 = arith.mulf %886, %887 : vector<1x1xf32>
    %889 = vector.extract_strided_slice %112 {offsets = [0, 0], sizes = [1, 1], strides = [1, 1]} : vector<3x1xi32> to vector<1x1xi32>
    %c0_i32_253 = arith.constant 0 : i32
    %890 = vector.broadcast %c0_i32_253 : i32 to vector<1x1xi32>
    %891 = arith.cmpi sgt, %889, %890 : vector<1x1xi32>
    %892 = vector.extract_strided_slice %118 {offsets = [0, 0], sizes = [1, 1], strides = [1, 1]} : vector<3x1xi32> to vector<1x1xi32>
    %c0_i32_254 = arith.constant 0 : i32
    %893 = vector.broadcast %c0_i32_254 : i32 to vector<1x1xi32>
    %894 = arith.cmpi sgt, %892, %893 : vector<1x1xi32>
    %895 = arith.andi %891, %894 : vector<1x1xi1>
    %cst_255 = arith.constant 0.000000e+00 : f32
    %896 = vector.broadcast %cst_255 : f32 to vector<1x1xf32>
    %897 = arith.select %895, %888, %896 : vector<1x1xi1>, vector<1x1xf32>
    %898 = arith.addf %870, %897 : vector<1x1xf32>
    %899 = vector.extract_strided_slice %865 {offsets = [1, 0], sizes = [1, 16], strides = [1, 1]} : vector<3x16xi1> to vector<1x16xi1>
    %900 = vector.extract_strided_slice %862 {offsets = [1, 0], sizes = [1, 16], strides = [1, 1]} : vector<3x16xf32> to vector<1x16xf32>
    %901 = vector.broadcast %900 : vector<1x16xf32> to vector<11x16xf32>
    %902 = vector.broadcast %869 : vector<11x1xf32> to vector<11x16xf32>
    %903 = arith.cmpf oge, %901, %902 : vector<11x16xf32>
    %904 = vector.broadcast %899 : vector<1x16xi1> to vector<11x16xi1>
    %905 = arith.andi %904, %903 : vector<11x16xi1>
    %906 = vector.extract_strided_slice %857 {offsets = [1, 0], sizes = [1, 16], strides = [1, 1]} : vector<3x16xf32> to vector<1x16xf32>
    %cst_256 = arith.constant 0.000000e+00 : f32
    %907 = vector.shape_cast %906 : vector<1x16xf32> to vector<1x16xf32>
    %908 = vector.broadcast %907 : vector<1x16xf32> to vector<11x16xf32>
    %909 = vector.broadcast %cst_256 : f32 to vector<11x16xf32>
    %910 = arith.select %905, %908, %909 : vector<11x16xi1>, vector<11x16xf32>
    %cst_257 = arith.constant dense<0xFF800000> : vector<11xf32>
    %911 = vector.multi_reduction <maximumf>, %910, %cst_257 [1] : vector<11x16xf32> to vector<11xf32>
    %912 = vector.shape_cast %911 : vector<11xf32> to vector<11x1xf32>
    %cst_258 = arith.constant dense<0.000000e+00> : vector<1xf32>
    %913 = vector.multi_reduction <add>, %912, %cst_258 [0] : vector<11x1xf32> to vector<1xf32>
    %914 = vector.shape_cast %913 : vector<1xf32> to vector<1x1xf32>
    %cst_259 = arith.constant 0.0909090936 : f32
    %915 = vector.broadcast %cst_259 : f32 to vector<1x1xf32>
    %916 = arith.mulf %914, %915 : vector<1x1xf32>
    %917 = vector.extract_strided_slice %112 {offsets = [1, 0], sizes = [1, 1], strides = [1, 1]} : vector<3x1xi32> to vector<1x1xi32>
    %c0_i32_260 = arith.constant 0 : i32
    %918 = vector.broadcast %c0_i32_260 : i32 to vector<1x1xi32>
    %919 = arith.cmpi sgt, %917, %918 : vector<1x1xi32>
    %920 = vector.extract_strided_slice %118 {offsets = [1, 0], sizes = [1, 1], strides = [1, 1]} : vector<3x1xi32> to vector<1x1xi32>
    %c0_i32_261 = arith.constant 0 : i32
    %921 = vector.broadcast %c0_i32_261 : i32 to vector<1x1xi32>
    %922 = arith.cmpi sgt, %920, %921 : vector<1x1xi32>
    %923 = arith.andi %919, %922 : vector<1x1xi1>
    %cst_262 = arith.constant 0.000000e+00 : f32
    %924 = vector.broadcast %cst_262 : f32 to vector<1x1xf32>
    %925 = arith.select %923, %916, %924 : vector<1x1xi1>, vector<1x1xf32>
    %926 = arith.addf %898, %925 : vector<1x1xf32>
    %927 = vector.extract_strided_slice %865 {offsets = [2, 0], sizes = [1, 16], strides = [1, 1]} : vector<3x16xi1> to vector<1x16xi1>
    %928 = vector.extract_strided_slice %862 {offsets = [2, 0], sizes = [1, 16], strides = [1, 1]} : vector<3x16xf32> to vector<1x16xf32>
    %929 = vector.broadcast %928 : vector<1x16xf32> to vector<11x16xf32>
    %930 = vector.broadcast %869 : vector<11x1xf32> to vector<11x16xf32>
    %931 = arith.cmpf oge, %929, %930 : vector<11x16xf32>
    %932 = vector.broadcast %927 : vector<1x16xi1> to vector<11x16xi1>
    %933 = arith.andi %932, %931 : vector<11x16xi1>
    %934 = vector.extract_strided_slice %857 {offsets = [2, 0], sizes = [1, 16], strides = [1, 1]} : vector<3x16xf32> to vector<1x16xf32>
    %cst_263 = arith.constant 0.000000e+00 : f32
    %935 = vector.shape_cast %934 : vector<1x16xf32> to vector<1x16xf32>
    %936 = vector.broadcast %935 : vector<1x16xf32> to vector<11x16xf32>
    %937 = vector.broadcast %cst_263 : f32 to vector<11x16xf32>
    %938 = arith.select %933, %936, %937 : vector<11x16xi1>, vector<11x16xf32>
    %cst_264 = arith.constant dense<0xFF800000> : vector<11xf32>
    %939 = vector.multi_reduction <maximumf>, %938, %cst_264 [1] : vector<11x16xf32> to vector<11xf32>
    %940 = vector.shape_cast %939 : vector<11xf32> to vector<11x1xf32>
    %cst_265 = arith.constant dense<0.000000e+00> : vector<1xf32>
    %941 = vector.multi_reduction <add>, %940, %cst_265 [0] : vector<11x1xf32> to vector<1xf32>
    %942 = vector.shape_cast %941 : vector<1xf32> to vector<1x1xf32>
    %cst_266 = arith.constant 0.0909090936 : f32
    %943 = vector.broadcast %cst_266 : f32 to vector<1x1xf32>
    %944 = arith.mulf %942, %943 : vector<1x1xf32>
    %945 = vector.extract_strided_slice %112 {offsets = [2, 0], sizes = [1, 1], strides = [1, 1]} : vector<3x1xi32> to vector<1x1xi32>
    %c0_i32_267 = arith.constant 0 : i32
    %946 = vector.broadcast %c0_i32_267 : i32 to vector<1x1xi32>
    %947 = arith.cmpi sgt, %945, %946 : vector<1x1xi32>
    %948 = vector.extract_strided_slice %118 {offsets = [2, 0], sizes = [1, 1], strides = [1, 1]} : vector<3x1xi32> to vector<1x1xi32>
    %c0_i32_268 = arith.constant 0 : i32
    %949 = vector.broadcast %c0_i32_268 : i32 to vector<1x1xi32>
    %950 = arith.cmpi sgt, %948, %949 : vector<1x1xi32>
    %951 = arith.andi %947, %950 : vector<1x1xi1>
    %cst_269 = arith.constant 0.000000e+00 : f32
    %952 = vector.broadcast %cst_269 : f32 to vector<1x1xf32>
    %953 = arith.select %951, %944, %952 : vector<1x1xi1>, vector<1x1xf32>
    %954 = arith.addf %926, %953 : vector<1x1xf32>
    %cst_270 = arith.constant 0.333333343 : f32
    %955 = vector.broadcast %cst_270 : f32 to vector<1x1xf32>
    %956 = arith.mulf %954, %955 : vector<1x1xf32>
    %c0_271 = arith.constant 0 : index
    %c0_272 = arith.constant 0 : index
    %957 = vector.load %arg1[%c0_271, %c0_272] : memref<1x1xf32, #tpu.memory_space<vmem>>, vector<1x1xf32>
    tpu.vector_store %arg1[%c0_271, %c0_272], %956 {strides = array<i32>} : memref<1x1xf32, #tpu.memory_space<vmem>>, vector<1x1xf32>,
    return
  }
}

</mosaic_0001>

<llo_original>
// kernel: tpu_custom_call.1
$region0: #{tpu_custom_call.1}
  #allocation0 [shape = 'u32[]', space=smem, size = 0x4, offset = 0x4, fixed_abs, tag = 'smem constant byte address 0x4 - core index']
  #allocation1 [shape = 'u32[144,128]{1,0:T(1,128)}', space=vmem, size = 0x12000, scoped, tag = 'internal scratch']
  #allocation2 [shape = 'f32[48,8]{1,0:T(8,128)}', space=vmem, size = 0x6000, scoped, tag = 'scratch operand']
  %s0 = inlined_call_operand.hbm [shape: f32[16,16], index: 0, kind: input, shape index: {}]
  %s1 = inlined_call_operand.hbm [shape: f32[1,1], index: 1, kind: output, shape index: {}]
  %s2 = sld [smem:[#allocation0]]
  $region18: #{tpu_custom_call.1} parent=0
    _
  %s4 = ssub.s32 1, %s2
  %s5 = scalar_select 0, %s4, %s2
  $region1: #{tpu_custom_call.1} parent=0
    #allocation3 [shape = 'u8[8192]{0}', space=vmem, size = 0x2000, scoped, tag = 'input window, operand 0, single buffered']
    #allocation4 [shape = 's32[1]{0}', space=sflag, size = 0x4, scoped, tag = 'scoped memory for tpu_custom_call.1']
    #allocation5 [shape = 's32[1]{0}', space=sflag, size = 0x4, scoped, tag = 'scoped memory for tpu_custom_call.1']
    #allocation6 [shape = 'u8[512]{0}', space=vmem, size = 0x400, scoped, tag = 'output window, operand 0, single buffered']
    %6 = vsyncpa [#allocation4], 0
    %7 = vsyncpa [#allocation5], 0
    // Predicated region
    $region2: #{tpu_custom_call.1} parent=1 // pred_check
      _
    $region3: #{tpu_custom_call.1} parent=1 // pred_check_branch
      %9 = sbr.rel (0) target = $region5
    $region4: #{tpu_custom_call.1} parent=1 // pred_region
      %s11 = ssub.s32 256, 256
      %12 = vsyncadd [#allocation4], %s11
      %s13 = sshll.u32 [#allocation3], 4
      %s14 = int_to_ptr.vmem [resolvable:$true] %s13
      %19 = dma.hbm_to_vmem [thread:$0]  %s0, 256, %s14, [#allocation4], 128, 128, 8
    $region5: #{tpu_custom_call.1} parent=1 // pred_fallthru
      _
    // Predicated region
    $region6: #{tpu_custom_call.1} parent=1 // pred_check
      _
    $region7: #{tpu_custom_call.1} parent=1 // pred_check_branch
      %21 = sbr.rel (0) target = $region9
    $region8: #{tpu_custom_call.1} parent=1 // pred_region
      %22 = dma.done [#allocation4], 256
    $region9: #{tpu_custom_call.1} parent=1 // pred_fallthru
      _
    %v23 = vld [vmem:[#allocation3] sm:$0xff]
    %v24 = vld [vmem:[#allocation3 + $0x8] sm:$0xff]
    %25 = vxpose.xlu0.b32.start [1/16] %v23, 128
    %26 = vxpose.xlu0.b32.cont [2/16] 0.0, 128
    %27 = vxpose.xlu0.b32.cont [3/16] 0.0, 128
    %28 = vxpose.xlu0.b32.cont [4/16] 0.0, 128
    %29 = vxpose.xlu0.b32.cont [5/16] 0.0, 128
    %30 = vxpose.xlu0.b32.cont [6/16] 0.0, 128
    %31 = vxpose.xlu0.b32.cont [7/16] 0.0, 128
    %32 = vxpose.xlu0.b32.cont [8/16] 0.0, 128
    %33 = vxpose.xlu0.b32.cont [9/16] 0.0, 128
    %34 = vxpose.xlu0.b32.cont [10/16] 0.0, 128
    %35 = vxpose.xlu0.b32.cont [11/16] 0.0, 128
    %36 = vxpose.xlu0.b32.cont [12/16] 0.0, 128
    %37 = vxpose.xlu0.b32.cont [13/16] 0.0, 128
    %38 = vxpose.xlu0.b32.cont [14/16] 0.0, 128
    %39 = vxpose.xlu0.b32.cont [15/16] 0.0, 128
    %40 = vxpose.xlu0.b32.end [16/16] 0.0, 128
    %v41 = vpop.trf.xlu0
    %v42 = vpop.trf.xlu0
    %v43 = vpop.trf.xlu0
    %v44 = vpop.trf.xlu0
    %v45 = vpop.trf.xlu0
    %v46 = vpop.trf.xlu0
    %v47 = vpop.trf.xlu0
    %v48 = vpop.trf.xlu0
    %v49 = vpop.trf.xlu0
    %v50 = vpop.trf.xlu0
    %v51 = vpop.trf.xlu0
    %v52 = vpop.trf.xlu0
    %v53 = vpop.trf.xlu0
    %v54 = vpop.trf.xlu0
    %v55 = vpop.trf.xlu0
    %v56 = vpop.trf.xlu0
    %58 = vset.pattern.permute.xlu0 2
    %59 = vperm.xlu0 %58, %v41
    %v60 = vpop.permute.xlu0 %59
    %63 = vset.pattern.permute.xlu0 2
    %64 = vperm.xlu0 %63, %v42
    %v65 = vpop.permute.xlu0 %64
    %v67 = vlaneseq
    %v68 = vshrl.u32 %v67, 7
    %v69 = vsub.s32 1, %v68
    %v70 = vrot.slane %v24, %v69
    %v71 = vmax.f32 %v60, %v70
    %v72 = vmax.f32 %v65, %v70
    %73 = vset.pattern.permute.xlu0 3
    %74 = vperm.xlu0 %73, %v41
    %v75 = vpop.permute.xlu0 %74
    %77 = vset.pattern.permute.xlu0 3
    %78 = vperm.xlu0 %77, %v42
    %v79 = vpop.permute.xlu0 %78
    %v81 = vlaneseq
    %v82 = vshrl.u32 %v81, 7
    %v83 = vsub.s32 2, %v82
    %v84 = vrot.slane %v24, %v83
    %v85 = vmax.f32 %v75, %v84
    %v86 = vmax.f32 %v79, %v84
    %87 = vset.pattern.permute.xlu0 4
    %88 = vperm.xlu0 %87, %v41
    %v89 = vpop.permute.xlu0 %88
    %91 = vset.pattern.permute.xlu0 4
    %92 = vperm.xlu0 %91, %v42
    %v93 = vpop.permute.xlu0 %92
    %v95 = vlaneseq
    %v96 = vshrl.u32 %v95, 7
    %v97 = vsub.s32 3, %v96
    %v98 = vrot.slane %v24, %v97
    %v99 = vmin.f32 %v89, %v98
    %v100 = vmin.f32 %v93, %v98
    %101 = vset.pattern.permute.xlu0 5
    %102 = vperm.xlu0 %101, %v41
    %v103 = vpop.permute.xlu0 %102
    %105 = vset.pattern.permute.xlu0 5
    %106 = vperm.xlu0 %105, %v42
    %v107 = vpop.permute.xlu0 %106
    %v109 = vlaneseq
    %v110 = vshrl.u32 %v109, 7
    %v111 = vsub.s32 4, %v110
    %v112 = vrot.slane %v24, %v111
    %v113 = vmin.f32 %v103, %v112
    %v114 = vmin.f32 %v107, %v112
    %v115 = vsub.f32 %v99, %v71
    %v116 = vsub.f32 %v100, %v72
    %v117 = vmax.f32 %v115, 0.0
    %v118 = vmax.f32 %v116, 0.0
    %v119 = vsub.f32 %v113, %v85
    %v120 = vsub.f32 %v114, %v86
    %v121 = vmax.f32 %v119, 0.0
    %v122 = vmax.f32 %v120, 0.0
    %v123 = vmul.f32 %v117, %v121
    %v124 = vmul.f32 %v118, %v122
    %125 = vrot.lane.b32.xlu0 %v41, 2
    %v126 = vpop.permute.xlu0 %125
    %127 = vrot.lane.b32.xlu0 %v42, 2
    %v128 = vpop.permute.xlu0 %127
    %v131 = vsub.f32 %v41, %v126
    %v132 = vsub.f32 %v42, %v128
    %135 = vrot.lane.b32.xlu0 %v131, 127
    %v136 = vpop.permute.xlu0 %135
    %137 = vrot.lane.b32.xlu0 %v132, 127
    %v138 = vpop.permute.xlu0 %137
    %v141 = vmul.f32 %v131, %v136
    %v142 = vmul.f32 %v132, %v138
    %v144 = vrot.slane %v24, 6
    %v146 = vsub.f32 %v24, %v144
    %v148 = vrot.slane %v146, 1
    %v150 = vmul.f32 %v146, %v148
    %152 = vset.pattern.permute.xlu0 4
    %153 = vperm.xlu0 %152, %v141
    %v154 = vpop.permute.xlu0 %153
    %157 = vset.pattern.permute.xlu0 4
    %158 = vperm.xlu0 %157, %v142
    %v159 = vpop.permute.xlu0 %158
    %v161 = vlaneseq
    %v162 = vshrl.u32 %v161, 7
    %v163 = vsub.s32 3, %v162
    %v164 = vrot.slane %v150, %v163
    %v165 = vadd.f32 %v154, %v164
    %v166 = vadd.f32 %v159, %v164
    %v167 = vsub.f32 %v165, %v123
    %v168 = vsub.f32 %v166, %v124
    %v169 = vrcp.pop %v167
    %v170 = vmul.f32 %v123, %v169
    %v171 = vrcp.pop %v168
    %v172 = vmul.f32 %v124, %v171
    %v173 = vlaneseq
    %v174 = vshrl.u32 %v173, 7
    %v175 = vadd.s32 %v174, 8
    %v176 = vlaneseq
    %v177 = vand.u32 %v176, 127
    %178 = vset.pattern.permute.xlu0 0
    %179 = vperm.xlu0 %178, %v41
    %v180 = vpop.permute.xlu0 %179
    %182 = vset.pattern.permute.xlu0 0
    %183 = vperm.xlu0 %182, %v42
    %v184 = vpop.permute.xlu0 %183
    %v186 = vlaneseq
    %v187 = vshrl.u32 %v186, 7
    %v188 = vsub.s32 0, %v187
    %v189 = vrot.slane %v23, %v188
    %vm190 = vcmp.eq.f32.partialorder %v180, %v189
    %vm191 = vcmp.eq.f32.partialorder %v184, %v189
    %192 = vset.pattern.permute.xlu0 1
    %193 = vperm.xlu0 %192, %v41
    %v194 = vpop.permute.xlu0 %193
    %196 = vset.pattern.permute.xlu0 1
    %197 = vperm.xlu0 %196, %v42
    %v198 = vpop.permute.xlu0 %197
    %v200 = vlaneseq
    %v201 = vshrl.u32 %v200, 7
    %v202 = vsub.s32 1, %v201
    %v203 = vrot.slane %v23, %v202
    %vm204 = vcmp.gt.f32.partialorder %v194, %v203
    %vm205 = vcmp.gt.f32.partialorder %v198, %v203
    %vm206 = vcmp.eq.f32.partialorder %v194, %v203
    %vm207 = vcmp.eq.f32.partialorder %v198, %v203
    %vm208 = vcmp.lt.s32.totalorder %v174, %v177
    %vm209 = vcmp.lt.s32.totalorder %v175, %v177
    %vm210 = vmand %vm206, %vm208
    %vm211 = vmand %vm207, %vm209
    %vm212 = vmor %vm204, %vm210
    %vm213 = vmor %vm205, %vm211
    %vm214 = vmand %vm190, %vm212
    %vm215 = vmand %vm191, %vm213
    %v216 = vsel %vm214, 1, 0
    %v217 = vsel %vm215, 1, 0
    %vm218 = vcmask 130048
    %v219 = vsel %vm218, %v216, 0
    %v220 = vsel %vm218, %v217, 0
    %v221 = vadd.s32 %v219, %v220
    %v222 = vrot.slane %v221, 4
    %v223 = vadd.s32 %v221, %v222
    %v224 = vrot.slane %v223, 2
    %v225 = vadd.s32 %v223, %v224
    %v226 = vrot.slane %v225, 1
    %v227 = vadd.s32 %v225, %v226
    %v228 = vcvt.f32.s32.to.zero.pseudo %v23
    %v229 = vcvt.s32.f32 %v228
    %vm230 = vcmp.eq.f32.partialorder %v23, %v229
    %vm231 = vcmp.ge.s32.totalorder %v228, 1
    %vm232 = vmand %vm230, %vm231
    %vm233 = vcmp.le.s32.totalorder %v228, 3
    %vm234 = vmand %vm232, %vm233
    %v235 = vmul.u32 %v227, 3
    %v236 = vsub.s32 %v228, 1
    %v237 = vadd.s32 %v235, %v236
    %v238 = vadd.s32 %v174, 16
    %v239 = vadd.s32 %v174, 24
    %v240 = vadd.s32 %v174, 32
    %v241 = vadd.s32 %v174, 40
    %v242 = vlaneseq
    %v243 = vshrl.u32 %v242, 7
    %v244 = vsub.s32 0, %v243
    %v245 = vrot.slane %v237, %v244
    %vm246 = vcmp.eq.s32.totalorder %v174, %v245
    %vm247 = vcmp.eq.s32.totalorder %v175, %v245
    %vm248 = vcmp.eq.s32.totalorder %v238, %v245
    %vm249 = vcmp.eq.s32.totalorder %v239, %v245
    %vm250 = vcmp.eq.s32.totalorder %v240, %v245
    %vm251 = vcmp.eq.s32.totalorder %v241, %v245
    %v252 = vsel %vm234, 1, 0
    %v253 = vlaneseq
    %v254 = vshrl.u32 %v253, 7
    %v255 = vsub.s32 0, %v254
    %v256 = vrot.slane %v252, %v255
    %vm257 = vcmp.eq.s32.totalorder %v256, 1
    %vm258 = vmand %vm246, %vm257
    %vm259 = vmand %vm247, %vm257
    %vm260 = vmand %vm248, %vm257
    %vm261 = vmand %vm249, %vm257
    %vm262 = vmand %vm250, %vm257
    %vm263 = vmand %vm251, %vm257
    %v264 = vsel %vm258, 1, 0
    %v265 = vsel %vm259, 1, 0
    %v266 = vsel %vm260, 1, 0
    %v267 = vsel %vm261, 1, 0
    %v268 = vsel %vm262, 1, 0
    %v269 = vsel %vm263, 1, 0
    %v270 = vcvt.s32.f32 %v264
    %v271 = vcvt.s32.f32 %v265
    %v272 = vcvt.s32.f32 %v266
    %v273 = vcvt.s32.f32 %v267
    %v274 = vcvt.s32.f32 %v268
    %v275 = vcvt.s32.f32 %v269
    %v277 = vsel %vm218, %v270, 0
    %v280 = vsel %vm218, %v271, 0
    %v283 = vsel %vm218, %v272, 0
    %v286 = vsel %vm218, %v273, 0
    %v289 = vsel %vm218, %v274, 0
    %v292 = vsel %vm218, %v275, 0
    %294 = vmatprep.subr.mxu0 0.0
    %295 = vmatpush1.msra.mxu0 0.0
    %296 = vmatprep.subr.mxu0 0.0
    %297 = vmatpush1.msra.mxu0 0.0
    %298 = vmatprep.subr.mxu0 0.0
    %299 = vmatpush1.msra.mxu0 0.0
    %300 = vmatprep.subr.mxu0 0.0
    %301 = vmatpush1.msra.mxu0 0.0
    %302 = vmatprep.subr.mxu0 0.0
    %303 = vmatpush1.msra.mxu0 0.0
    %304 = vmatprep.subr.mxu0 0.0
    %305 = vmatpush1.msra.mxu0 0.0
    %306 = vmatprep.subr.mxu0 0.0
    %307 = vmatpush1.msra.mxu0 0.0
    %308 = vmatprep.subr.mxu0 0.0
    %309 = vmatpush1.msra.mxu0 0.0
    %310 = vmatprep.subr.mxu0 0.0
    %311 = vmatpush1.msra.mxu0 0.0
    %312 = vmatprep.subr.mxu0 0.0
    %313 = vmatpush1.msra.mxu0 0.0
    %314 = vmatprep.subr.mxu0 0.0
    %315 = vmatpush1.msra.mxu0 0.0
    %316 = vmatprep.subr.mxu0 0.0
    %317 = vmatpush1.msra.mxu0 0.0
    %318 = vmatprep.subr.mxu0 0.0
    %319 = vmatpush1.msra.mxu0 0.0
    %320 = vmatprep.subr.mxu0 0.0
    %321 = vmatpush1.msra.mxu0 0.0
    %322 = vmatprep.subr.mxu0 0.0
    %v323 = vand.u32 %v172, 4294901760
    %324 = vmatpush1.msra.mxu0 %v323
    %325 = vmatprep.subr.mxu0 0.0
    %v326 = vand.u32 %v170, 4294901760
    %327 = vmatpush1.msra.mxu0 %v326
    %328 = vmatprep.subr.mxu0 0.0
    %329 = vmatpush2.msra.mxu0 0.0
    %330 = vmatprep.subr.mxu0 0.0
    %331 = vmatpush2.msra.mxu0 0.0
    %332 = vmatprep.subr.mxu0 0.0
    %333 = vmatpush2.msra.mxu0 0.0
    %334 = vmatprep.subr.mxu0 0.0
    %335 = vmatpush2.msra.mxu0 0.0
    %336 = vmatprep.subr.mxu0 0.0
    %337 = vmatpush2.msra.mxu0 0.0
    %338 = vmatprep.subr.mxu0 0.0
    %339 = vmatpush2.msra.mxu0 0.0
    %340 = vmatprep.subr.mxu0 0.0
    %341 = vmatpush2.msra.mxu0 0.0
    %342 = vmatprep.subr.mxu0 0.0
    %343 = vmatpush2.msra.mxu0 0.0
    %344 = vmatprep.subr.mxu0 0.0
    %345 = vmatpush2.msra.mxu0 0.0
    %346 = vmatprep.subr.mxu0 0.0
    %347 = vmatpush2.msra.mxu0 0.0
    %348 = vmatprep.subr.mxu0 0.0
    %349 = vmatpush2.msra.mxu0 0.0
    %350 = vmatprep.subr.mxu0 0.0
    %351 = vmatpush2.msra.mxu0 0.0
    %352 = vmatprep.subr.mxu0 0.0
    %353 = vmatpush2.msra.mxu0 0.0
    %354 = vmatprep.subr.mxu0 0.0
    %355 = vmatpush2.msra.mxu0 0.0
    %356 = vmatprep.subr.mxu0 0.0
    %357 = vmatpush2.msra.mxu0 0.0
    %358 = vmatprep.subr.mxu0 0.0
    %359 = vmatpush2.msra.mxu0 0.0
    %360 = vmatprep.mubr.f32.mxu0 0.0
    %v361 = vand.u32 %v277, 4294901760
    %v362 = vsub.f32 %v277, %v361
    %v363 = vand.u32 %v362, 4294901760
    %v364 = vsub.f32 %v362, %v363
    %v365 = vand.u32 %v364, 4294901760
    %366 = vmatmul.mubr.f32.gmra.mxu0 %v365
    %v367 = vpop.f32.mrf.mxu0
    %v368 = vadd.f32 0.0, %v367
    %v369 = vpop.f32.mrf.mxu0
    %370 = vmatprep.mubr.f32.mxu0 0.0
    %v371 = vand.u32 %v280, 4294901760
    %v372 = vsub.f32 %v280, %v371
    %v373 = vand.u32 %v372, 4294901760
    %v374 = vsub.f32 %v372, %v373
    %v375 = vand.u32 %v374, 4294901760
    %376 = vmatmul.mubr.f32.gmra.mxu0 %v375
    %v377 = vpop.f32.mrf.mxu0
    %v378 = vadd.f32 0.0, %v377
    %v379 = vpop.f32.mrf.mxu0
    %380 = vmatprep.mubr.f32.mxu0 0.0
    %v381 = vand.u32 %v283, 4294901760
    %v382 = vsub.f32 %v283, %v381
    %v383 = vand.u32 %v382, 4294901760
    %v384 = vsub.f32 %v382, %v383
    %v385 = vand.u32 %v384, 4294901760
    %386 = vmatmul.mubr.f32.gmra.mxu0 %v385
    %v387 = vpop.f32.mrf.mxu0
    %v388 = vadd.f32 0.0, %v387
    %v389 = vpop.f32.mrf.mxu0
    %390 = vmatprep.mubr.f32.mxu0 0.0
    %v391 = vand.u32 %v286, 4294901760
    %v392 = vsub.f32 %v286, %v391
    %v393 = vand.u32 %v392, 4294901760
    %v394 = vsub.f32 %v392, %v393
    %v395 = vand.u32 %v394, 4294901760
    %396 = vmatmul.mubr.f32.gmra.mxu0 %v395
    %v397 = vpop.f32.mrf.mxu0
    %v398 = vadd.f32 0.0, %v397
    %v399 = vpop.f32.mrf.mxu0
    %400 = vmatprep.mubr.f32.mxu0 0.0
    %v401 = vand.u32 %v289, 4294901760
    %v402 = vsub.f32 %v289, %v401
    %v403 = vand.u32 %v402, 4294901760
    %v404 = vsub.f32 %v402, %v403
    %v405 = vand.u32 %v404, 4294901760
    %406 = vmatmul.mubr.f32.gmra.mxu0 %v405
    %v407 = vpop.f32.mrf.mxu0
    %v408 = vadd.f32 0.0, %v407
    %v409 = vpop.f32.mrf.mxu0
    %410 = vmatprep.mubr.f32.mxu0 0.0
    %v411 = vand.u32 %v292, 4294901760
    %v412 = vsub.f32 %v292, %v411
    %v413 = vand.u32 %v412, 4294901760
    %v414 = vsub.f32 %v412, %v413
    %v415 = vand.u32 %v414, 4294901760
    %416 = vmatmul.mubr.f32.gmra.mxu0 %v415
    %v417 = vpop.f32.mrf.mxu0
    %v418 = vadd.f32 0.0, %v417
    %v419 = vpop.f32.mrf.mxu0
    %420 = vdwg.mxu0
    %421 = vmatprep.subr.mxu0 0.0
    %422 = vmatpush1.msra.mxu0 0.0
    %423 = vmatprep.subr.mxu0 0.0
    %424 = vmatpush1.msra.mxu0 0.0
    %425 = vmatprep.subr.mxu0 0.0
    %426 = vmatpush1.msra.mxu0 0.0
    %427 = vmatprep.subr.mxu0 0.0
    %428 = vmatpush1.msra.mxu0 0.0
    %429 = vmatprep.subr.mxu0 0.0
    %430 = vmatpush1.msra.mxu0 0.0
    %431 = vmatprep.subr.mxu0 0.0
    %432 = vmatpush1.msra.mxu0 0.0
    %433 = vmatprep.subr.mxu0 0.0
    %434 = vmatpush1.msra.mxu0 0.0
    %435 = vmatprep.subr.mxu0 0.0
    %436 = vmatpush1.msra.mxu0 0.0
    %437 = vmatprep.subr.mxu0 0.0
    %438 = vmatpush1.msra.mxu0 0.0
    %439 = vmatprep.subr.mxu0 0.0
    %440 = vmatpush1.msra.mxu0 0.0
    %441 = vmatprep.subr.mxu0 0.0
    %442 = vmatpush1.msra.mxu0 0.0
    %443 = vmatprep.subr.mxu0 0.0
    %444 = vmatpush1.msra.mxu0 0.0
    %445 = vmatprep.subr.mxu0 0.0
    %446 = vmatpush1.msra.mxu0 0.0
    %447 = vmatprep.subr.mxu0 0.0
    %448 = vmatpush1.msra.mxu0 0.0
    %449 = vmatprep.subr.mxu0 0.0
    %v450 = vand.u32 %v172, 4294901760
    %v451 = vsub.f32 %v172, %v450
    %v452 = vand.u32 %v451, 4294901760
    %v453 = vsub.f32 %v451, %v452
    %v454 = vand.u32 %v453, 4294901760
    %455 = vmatpush1.msra.mxu0 %v454
    %456 = vmatprep.subr.mxu0 0.0
    %v457 = vand.u32 %v170, 4294901760
    %v458 = vsub.f32 %v170, %v457
    %v459 = vand.u32 %v458, 4294901760
    %v460 = vsub.f32 %v458, %v459
    %v461 = vand.u32 %v460, 4294901760
    %462 = vmatpush1.msra.mxu0 %v461
    %463 = vmatprep.subr.mxu0 0.0
    %464 = vmatpush2.msra.mxu0 0.0
    %465 = vmatprep.subr.mxu0 0.0
    %466 = vmatpush2.msra.mxu0 0.0
    %467 = vmatprep.subr.mxu0 0.0
    %468 = vmatpush2.msra.mxu0 0.0
    %469 = vmatprep.subr.mxu0 0.0
    %470 = vmatpush2.msra.mxu0 0.0
    %471 = vmatprep.subr.mxu0 0.0
    %472 = vmatpush2.msra.mxu0 0.0
    %473 = vmatprep.subr.mxu0 0.0
    %474 = vmatpush2.msra.mxu0 0.0
    %475 = vmatprep.subr.mxu0 0.0
    %476 = vmatpush2.msra.mxu0 0.0
    %477 = vmatprep.subr.mxu0 0.0
    %478 = vmatpush2.msra.mxu0 0.0
    %479 = vmatprep.subr.mxu0 0.0
    %480 = vmatpush2.msra.mxu0 0.0
    %481 = vmatprep.subr.mxu0 0.0
    %482 = vmatpush2.msra.mxu0 0.0
    %483 = vmatprep.subr.mxu0 0.0
    %484 = vmatpush2.msra.mxu0 0.0
    %485 = vmatprep.subr.mxu0 0.0
    %486 = vmatpush2.msra.mxu0 0.0
    %487 = vmatprep.subr.mxu0 0.0
    %488 = vmatpush2.msra.mxu0 0.0
    %489 = vmatprep.subr.mxu0 0.0
    %490 = vmatpush2.msra.mxu0 0.0
    %491 = vmatprep.subr.mxu0 0.0
    %492 = vmatpush2.msra.mxu0 0.0
    %493 = vmatprep.subr.mxu0 0.0
    %494 = vmatpush2.msra.mxu0 0.0
    %495 = vmatprep.mubr.f32.mxu0 0.0
    %v496 = vand.u32 %v277, 4294901760
    %497 = vmatmul.mubr.f32.gmra.mxu0 %v496
    %v498 = vpop.f32.mrf.mxu0
    %v499 = vadd.f32 %v368, %v498
    %v500 = vpop.f32.mrf.mxu0
    %501 = vmatprep.mubr.f32.mxu0 0.0
    %v502 = vand.u32 %v280, 4294901760
    %503 = vmatmul.mubr.f32.gmra.mxu0 %v502
    %v504 = vpop.f32.mrf.mxu0
    %v505 = vadd.f32 %v378, %v504
    %v506 = vpop.f32.mrf.mxu0
    %507 = vmatprep.mubr.f32.mxu0 0.0
    %v508 = vand.u32 %v283, 4294901760
    %509 = vmatmul.mubr.f32.gmra.mxu0 %v508
    %v510 = vpop.f32.mrf.mxu0
    %v511 = vadd.f32 %v388, %v510
    %v512 = vpop.f32.mrf.mxu0
    %513 = vmatprep.mubr.f32.mxu0 0.0
    %v514 = vand.u32 %v286, 4294901760
    %515 = vmatmul.mubr.f32.gmra.mxu0 %v514
    %v516 = vpop.f32.mrf.mxu0
    %v517 = vadd.f32 %v398, %v516
    %v518 = vpop.f32.mrf.mxu0
    %519 = vmatprep.mubr.f32.mxu0 0.0
    %v520 = vand.u32 %v289, 4294901760
    %521 = vmatmul.mubr.f32.gmra.mxu0 %v520
    %v522 = vpop.f32.mrf.mxu0
    %v523 = vadd.f32 %v408, %v522
    %v524 = vpop.f32.mrf.mxu0
    %525 = vmatprep.mubr.f32.mxu0 0.0
    %v526 = vand.u32 %v292, 4294901760
    %527 = vmatmul.mubr.f32.gmra.mxu0 %v526
    %v528 = vpop.f32.mrf.mxu0
    %v529 = vadd.f32 %v418, %v528
    %v530 = vpop.f32.mrf.mxu0
    %531 = vdwg.mxu0
    %532 = vmatprep.subr.mxu0 0.0
    %533 = vmatpush1.msra.mxu0 0.0
    %534 = vmatprep.subr.mxu0 0.0
    %535 = vmatpush1.msra.mxu0 0.0
    %536 = vmatprep.subr.mxu0 0.0
    %537 = vmatpush1.msra.mxu0 0.0
    %538 = vmatprep.subr.mxu0 0.0
    %539 = vmatpush1.msra.mxu0 0.0
    %540 = vmatprep.subr.mxu0 0.0
    %541 = vmatpush1.msra.mxu0 0.0
    %542 = vmatprep.subr.mxu0 0.0
    %543 = vmatpush1.msra.mxu0 0.0
    %544 = vmatprep.subr.mxu0 0.0
    %545 = vmatpush1.msra.mxu0 0.0
    %546 = vmatprep.subr.mxu0 0.0
    %547 = vmatpush1.msra.mxu0 0.0
    %548 = vmatprep.subr.mxu0 0.0
    %549 = vmatpush1.msra.mxu0 0.0
    %550 = vmatprep.subr.mxu0 0.0
    %551 = vmatpush1.msra.mxu0 0.0
    %552 = vmatprep.subr.mxu0 0.0
    %553 = vmatpush1.msra.mxu0 0.0
    %554 = vmatprep.subr.mxu0 0.0
    %555 = vmatpush1.msra.mxu0 0.0
    %556 = vmatprep.subr.mxu0 0.0
    %557 = vmatpush1.msra.mxu0 0.0
    %558 = vmatprep.subr.mxu0 0.0
    %559 = vmatpush1.msra.mxu0 0.0
    %560 = vmatprep.subr.mxu0 0.0
    %v561 = vand.u32 %v172, 4294901760
    %v562 = vsub.f32 %v172, %v561
    %563 = vmatpush1.msra.mxu0 %v562
    %564 = vmatprep.subr.mxu0 0.0
    %v565 = vand.u32 %v170, 4294901760
    %v566 = vsub.f32 %v170, %v565
    %567 = vmatpush1.msra.mxu0 %v566
    %568 = vmatprep.subr.mxu0 0.0
    %569 = vmatpush2.msra.mxu0 0.0
    %570 = vmatprep.subr.mxu0 0.0
    %571 = vmatpush2.msra.mxu0 0.0
    %572 = vmatprep.subr.mxu0 0.0
    %573 = vmatpush2.msra.mxu0 0.0
    %574 = vmatprep.subr.mxu0 0.0
    %575 = vmatpush2.msra.mxu0 0.0
    %576 = vmatprep.subr.mxu0 0.0
    %577 = vmatpush2.msra.mxu0 0.0
    %578 = vmatprep.subr.mxu0 0.0
    %579 = vmatpush2.msra.mxu0 0.0
    %580 = vmatprep.subr.mxu0 0.0
    %581 = vmatpush2.msra.mxu0 0.0
    %582 = vmatprep.subr.mxu0 0.0
    %583 = vmatpush2.msra.mxu0 0.0
    %584 = vmatprep.subr.mxu0 0.0
    %585 = vmatpush2.msra.mxu0 0.0
    %586 = vmatprep.subr.mxu0 0.0
    %587 = vmatpush2.msra.mxu0 0.0
    %588 = vmatprep.subr.mxu0 0.0
    %589 = vmatpush2.msra.mxu0 0.0
    %590 = vmatprep.subr.mxu0 0.0
    %591 = vmatpush2.msra.mxu0 0.0
    %592 = vmatprep.subr.mxu0 0.0
    %593 = vmatpush2.msra.mxu0 0.0
    %594 = vmatprep.subr.mxu0 0.0
    %595 = vmatpush2.msra.mxu0 0.0
    %596 = vmatprep.subr.mxu0 0.0
    %597 = vmatpush2.msra.mxu0 0.0
    %598 = vmatprep.subr.mxu0 0.0
    %599 = vmatpush2.msra.mxu0 0.0
    %600 = vmatprep.mubr.f32.mxu0 0.0
    %v601 = vand.u32 %v277, 4294901760
    %v602 = vsub.f32 %v277, %v601
    %603 = vmatmul.mubr.f32.gmra.mxu0 %v602
    %v604 = vpop.f32.mrf.mxu0
    %v605 = vadd.f32 %v499, %v604
    %v606 = vpop.f32.mrf.mxu0
    %607 = vmatprep.mubr.f32.mxu0 0.0
    %v608 = vand.u32 %v280, 4294901760
    %v609 = vsub.f32 %v280, %v608
    %610 = vmatmul.mubr.f32.gmra.mxu0 %v609
    %v611 = vpop.f32.mrf.mxu0
    %v612 = vadd.f32 %v505, %v611
    %v613 = vpop.f32.mrf.mxu0
    %614 = vmatprep.mubr.f32.mxu0 0.0
    %v615 = vand.u32 %v283, 4294901760
    %v616 = vsub.f32 %v283, %v615
    %617 = vmatmul.mubr.f32.gmra.mxu0 %v616
    %v618 = vpop.f32.mrf.mxu0
    %v619 = vadd.f32 %v511, %v618
    %v620 = vpop.f32.mrf.mxu0
    %621 = vmatprep.mubr.f32.mxu0 0.0
    %v622 = vand.u32 %v286, 4294901760
    %v623 = vsub.f32 %v286, %v622
    %624 = vmatmul.mubr.f32.gmra.mxu0 %v623
    %v625 = vpop.f32.mrf.mxu0
    %v626 = vadd.f32 %v517, %v625
    %v627 = vpop.f32.mrf.mxu0
    %628 = vmatprep.mubr.f32.mxu0 0.0
    %v629 = vand.u32 %v289, 4294901760
    %v630 = vsub.f32 %v289, %v629
    %631 = vmatmul.mubr.f32.gmra.mxu0 %v630
    %v632 = vpop.f32.mrf.mxu0
    %v633 = vadd.f32 %v523, %v632
    %v634 = vpop.f32.mrf.mxu0
    %635 = vmatprep.mubr.f32.mxu0 0.0
    %v636 = vand.u32 %v292, 4294901760
    %v637 = vsub.f32 %v292, %v636
    %638 = vmatmul.mubr.f32.gmra.mxu0 %v637
    %v639 = vpop.f32.mrf.mxu0
    %v640 = vadd.f32 %v529, %v639
    %v641 = vpop.f32.mrf.mxu0
    %642 = vdwg.mxu0
    %643 = vmatprep.subr.mxu0 0.0
    %644 = vmatpush1.msra.mxu0 0.0
    %645 = vmatprep.subr.mxu0 0.0
    %646 = vmatpush1.msra.mxu0 0.0
    %647 = vmatprep.subr.mxu0 0.0
    %648 = vmatpush1.msra.mxu0 0.0
    %649 = vmatprep.subr.mxu0 0.0
    %650 = vmatpush1.msra.mxu0 0.0
    %651 = vmatprep.subr.mxu0 0.0
    %652 = vmatpush1.msra.mxu0 0.0
    %653 = vmatprep.subr.mxu0 0.0
    %654 = vmatpush1.msra.mxu0 0.0
    %655 = vmatprep.subr.mxu0 0.0
    %656 = vmatpush1.msra.mxu0 0.0
    %657 = vmatprep.subr.mxu0 0.0
    %658 = vmatpush1.msra.mxu0 0.0
    %659 = vmatprep.subr.mxu0 0.0
    %660 = vmatpush1.msra.mxu0 0.0
    %661 = vmatprep.subr.mxu0 0.0
    %662 = vmatpush1.msra.mxu0 0.0
    %663 = vmatprep.subr.mxu0 0.0
    %664 = vmatpush1.msra.mxu0 0.0
    %665 = vmatprep.subr.mxu0 0.0
    %666 = vmatpush1.msra.mxu0 0.0
    %667 = vmatprep.subr.mxu0 0.0
    %668 = vmatpush1.msra.mxu0 0.0
    %669 = vmatprep.subr.mxu0 0.0
    %670 = vmatpush1.msra.mxu0 0.0
    %671 = vmatprep.subr.mxu0 0.0
    %v672 = vand.u32 %v172, 4294901760
    %673 = vmatpush1.msra.mxu0 %v672
    %674 = vmatprep.subr.mxu0 0.0
    %v675 = vand.u32 %v170, 4294901760
    %676 = vmatpush1.msra.mxu0 %v675
    %677 = vmatprep.subr.mxu0 0.0
    %678 = vmatpush2.msra.mxu0 0.0
    %679 = vmatprep.subr.mxu0 0.0
    %680 = vmatpush2.msra.mxu0 0.0
    %681 = vmatprep.subr.mxu0 0.0
    %682 = vmatpush2.msra.mxu0 0.0
    %683 = vmatprep.subr.mxu0 0.0
    %684 = vmatpush2.msra.mxu0 0.0
    %685 = vmatprep.subr.mxu0 0.0
    %686 = vmatpush2.msra.mxu0 0.0
    %687 = vmatprep.subr.mxu0 0.0
    %688 = vmatpush2.msra.mxu0 0.0
    %689 = vmatprep.subr.mxu0 0.0
    %690 = vmatpush2.msra.mxu0 0.0
    %691 = vmatprep.subr.mxu0 0.0
    %692 = vmatpush2.msra.mxu0 0.0
    %693 = vmatprep.subr.mxu0 0.0
    %694 = vmatpush2.msra.mxu0 0.0
    %695 = vmatprep.subr.mxu0 0.0
    %696 = vmatpush2.msra.mxu0 0.0
    %697 = vmatprep.subr.mxu0 0.0
    %698 = vmatpush2.msra.mxu0 0.0
    %699 = vmatprep.subr.mxu0 0.0
    %700 = vmatpush2.msra.mxu0 0.0
    %701 = vmatprep.subr.mxu0 0.0
    %702 = vmatpush2.msra.mxu0 0.0
    %703 = vmatprep.subr.mxu0 0.0
    %704 = vmatpush2.msra.mxu0 0.0
    %705 = vmatprep.subr.mxu0 0.0
    %706 = vmatpush2.msra.mxu0 0.0
    %707 = vmatprep.subr.mxu0 0.0
    %708 = vmatpush2.msra.mxu0 0.0
    %709 = vmatprep.mubr.f32.mxu0 0.0
    %v710 = vand.u32 %v277, 4294901760
    %v711 = vsub.f32 %v277, %v710
    %v712 = vand.u32 %v711, 4294901760
    %713 = vmatmul.mubr.f32.gmra.mxu0 %v712
    %v714 = vpop.f32.mrf.mxu0
    %v715 = vadd.f32 %v605, %v714
    %v716 = vpop.f32.mrf.mxu0
    %717 = vmatprep.mubr.f32.mxu0 0.0
    %v718 = vand.u32 %v280, 4294901760
    %v719 = vsub.f32 %v280, %v718
    %v720 = vand.u32 %v719, 4294901760
    %721 = vmatmul.mubr.f32.gmra.mxu0 %v720
    %v722 = vpop.f32.mrf.mxu0
    %v723 = vadd.f32 %v612, %v722
    %v724 = vpop.f32.mrf.mxu0
    %725 = vmatprep.mubr.f32.mxu0 0.0
    %v726 = vand.u32 %v283, 4294901760
    %v727 = vsub.f32 %v283, %v726
    %v728 = vand.u32 %v727, 4294901760
    %729 = vmatmul.mubr.f32.gmra.mxu0 %v728
    %v730 = vpop.f32.mrf.mxu0
    %v731 = vadd.f32 %v619, %v730
    %v732 = vpop.f32.mrf.mxu0
    %733 = vmatprep.mubr.f32.mxu0 0.0
    %v734 = vand.u32 %v286, 4294901760
    %v735 = vsub.f32 %v286, %v734
    %v736 = vand.u32 %v735, 4294901760
    %737 = vmatmul.mubr.f32.gmra.mxu0 %v736
    %v738 = vpop.f32.mrf.mxu0
    %v739 = vadd.f32 %v626, %v738
    %v740 = vpop.f32.mrf.mxu0
    %741 = vmatprep.mubr.f32.mxu0 0.0
    %v742 = vand.u32 %v289, 4294901760
    %v743 = vsub.f32 %v289, %v742
    %v744 = vand.u32 %v743, 4294901760
    %745 = vmatmul.mubr.f32.gmra.mxu0 %v744
    %v746 = vpop.f32.mrf.mxu0
    %v747 = vadd.f32 %v633, %v746
    %v748 = vpop.f32.mrf.mxu0
    %749 = vmatprep.mubr.f32.mxu0 0.0
    %v750 = vand.u32 %v292, 4294901760
    %v751 = vsub.f32 %v292, %v750
    %v752 = vand.u32 %v751, 4294901760
    %753 = vmatmul.mubr.f32.gmra.mxu0 %v752
    %v754 = vpop.f32.mrf.mxu0
    %v755 = vadd.f32 %v640, %v754
    %v756 = vpop.f32.mrf.mxu0
    %757 = vdwg.mxu0
    %758 = vmatprep.subr.mxu0 0.0
    %759 = vmatpush1.msra.mxu0 0.0
    %760 = vmatprep.subr.mxu0 0.0
    %761 = vmatpush1.msra.mxu0 0.0
    %762 = vmatprep.subr.mxu0 0.0
    %763 = vmatpush1.msra.mxu0 0.0
    %764 = vmatprep.subr.mxu0 0.0
    %765 = vmatpush1.msra.mxu0 0.0
    %766 = vmatprep.subr.mxu0 0.0
    %767 = vmatpush1.msra.mxu0 0.0
    %768 = vmatprep.subr.mxu0 0.0
    %769 = vmatpush1.msra.mxu0 0.0
    %770 = vmatprep.subr.mxu0 0.0
    %771 = vmatpush1.msra.mxu0 0.0
    %772 = vmatprep.subr.mxu0 0.0
    %773 = vmatpush1.msra.mxu0 0.0
    %774 = vmatprep.subr.mxu0 0.0
    %775 = vmatpush1.msra.mxu0 0.0
    %776 = vmatprep.subr.mxu0 0.0
    %777 = vmatpush1.msra.mxu0 0.0
    %778 = vmatprep.subr.mxu0 0.0
    %779 = vmatpush1.msra.mxu0 0.0
    %780 = vmatprep.subr.mxu0 0.0
    %781 = vmatpush1.msra.mxu0 0.0
    %782 = vmatprep.subr.mxu0 0.0
    %783 = vmatpush1.msra.mxu0 0.0
    %784 = vmatprep.subr.mxu0 0.0
    %785 = vmatpush1.msra.mxu0 0.0
    %786 = vmatprep.subr.mxu0 0.0
    %v787 = vand.u32 %v172, 4294901760
    %v788 = vsub.f32 %v172, %v787
    %v789 = vand.u32 %v788, 4294901760
    %790 = vmatpush1.msra.mxu0 %v789
    %791 = vmatprep.subr.mxu0 0.0
    %v792 = vand.u32 %v170, 4294901760
    %v793 = vsub.f32 %v170, %v792
    %v794 = vand.u32 %v793, 4294901760
    %795 = vmatpush1.msra.mxu0 %v794
    %796 = vmatprep.subr.mxu0 0.0
    %797 = vmatpush2.msra.mxu0 0.0
    %798 = vmatprep.subr.mxu0 0.0
    %799 = vmatpush2.msra.mxu0 0.0
    %800 = vmatprep.subr.mxu0 0.0
    %801 = vmatpush2.msra.mxu0 0.0
    %802 = vmatprep.subr.mxu0 0.0
    %803 = vmatpush2.msra.mxu0 0.0
    %804 = vmatprep.subr.mxu0 0.0
    %805 = vmatpush2.msra.mxu0 0.0
    %806 = vmatprep.subr.mxu0 0.0
    %807 = vmatpush2.msra.mxu0 0.0
    %808 = vmatprep.subr.mxu0 0.0
    %809 = vmatpush2.msra.mxu0 0.0
    %810 = vmatprep.subr.mxu0 0.0
    %811 = vmatpush2.msra.mxu0 0.0
    %812 = vmatprep.subr.mxu0 0.0
    %813 = vmatpush2.msra.mxu0 0.0
    %814 = vmatprep.subr.mxu0 0.0
    %815 = vmatpush2.msra.mxu0 0.0
    %816 = vmatprep.subr.mxu0 0.0
    %817 = vmatpush2.msra.mxu0 0.0
    %818 = vmatprep.subr.mxu0 0.0
    %819 = vmatpush2.msra.mxu0 0.0
    %820 = vmatprep.subr.mxu0 0.0
    %821 = vmatpush2.msra.mxu0 0.0
    %822 = vmatprep.subr.mxu0 0.0
    %823 = vmatpush2.msra.mxu0 0.0
    %824 = vmatprep.subr.mxu0 0.0
    %825 = vmatpush2.msra.mxu0 0.0
    %826 = vmatprep.subr.mxu0 0.0
    %827 = vmatpush2.msra.mxu0 0.0
    %828 = vmatprep.mubr.f32.mxu0 0.0
    %v829 = vand.u32 %v277, 4294901760
    %830 = vmatmul.mubr.f32.gmra.mxu0 %v829
    %v831 = vpop.f32.mrf.mxu0
    %v832 = vadd.f32 %v715, %v831
    %v833 = vpop.f32.mrf.mxu0
    %834 = vmatprep.mubr.f32.mxu0 0.0
    %v835 = vand.u32 %v280, 4294901760
    %836 = vmatmul.mubr.f32.gmra.mxu0 %v835
    %v837 = vpop.f32.mrf.mxu0
    %v838 = vadd.f32 %v723, %v837
    %v839 = vpop.f32.mrf.mxu0
    %840 = vmatprep.mubr.f32.mxu0 0.0
    %v841 = vand.u32 %v283, 4294901760
    %842 = vmatmul.mubr.f32.gmra.mxu0 %v841
    %v843 = vpop.f32.mrf.mxu0
    %v844 = vadd.f32 %v731, %v843
    %v845 = vpop.f32.mrf.mxu0
    %846 = vmatprep.mubr.f32.mxu0 0.0
    %v847 = vand.u32 %v286, 4294901760
    %848 = vmatmul.mubr.f32.gmra.mxu0 %v847
    %v849 = vpop.f32.mrf.mxu0
    %v850 = vadd.f32 %v739, %v849
    %v851 = vpop.f32.mrf.mxu0
    %852 = vmatprep.mubr.f32.mxu0 0.0
    %v853 = vand.u32 %v289, 4294901760
    %854 = vmatmul.mubr.f32.gmra.mxu0 %v853
    %v855 = vpop.f32.mrf.mxu0
    %v856 = vadd.f32 %v747, %v855
    %v857 = vpop.f32.mrf.mxu0
    %858 = vmatprep.mubr.f32.mxu0 0.0
    %v859 = vand.u32 %v292, 4294901760
    %860 = vmatmul.mubr.f32.gmra.mxu0 %v859
    %v861 = vpop.f32.mrf.mxu0
    %v862 = vadd.f32 %v755, %v861
    %v863 = vpop.f32.mrf.mxu0
    %864 = vdwg.mxu0
    %865 = vmatprep.subr.mxu0 0.0
    %866 = vmatpush1.msra.mxu0 0.0
    %867 = vmatprep.subr.mxu0 0.0
    %868 = vmatpush1.msra.mxu0 0.0
    %869 = vmatprep.subr.mxu0 0.0
    %870 = vmatpush1.msra.mxu0 0.0
    %871 = vmatprep.subr.mxu0 0.0
    %872 = vmatpush1.msra.mxu0 0.0
    %873 = vmatprep.subr.mxu0 0.0
    %874 = vmatpush1.msra.mxu0 0.0
    %875 = vmatprep.subr.mxu0 0.0
    %876 = vmatpush1.msra.mxu0 0.0
    %877 = vmatprep.subr.mxu0 0.0
    %878 = vmatpush1.msra.mxu0 0.0
    %879 = vmatprep.subr.mxu0 0.0
    %880 = vmatpush1.msra.mxu0 0.0
    %881 = vmatprep.subr.mxu0 0.0
    %882 = vmatpush1.msra.mxu0 0.0
    %883 = vmatprep.subr.mxu0 0.0
    %884 = vmatpush1.msra.mxu0 0.0
    %885 = vmatprep.subr.mxu0 0.0
    %886 = vmatpush1.msra.mxu0 0.0
    %887 = vmatprep.subr.mxu0 0.0
    %888 = vmatpush1.msra.mxu0 0.0
    %889 = vmatprep.subr.mxu0 0.0
    %890 = vmatpush1.msra.mxu0 0.0
    %891 = vmatprep.subr.mxu0 0.0
    %892 = vmatpush1.msra.mxu0 0.0
    %893 = vmatprep.subr.mxu0 0.0
    %v894 = vand.u32 %v172, 4294901760
    %895 = vmatpush1.msra.mxu0 %v894
    %896 = vmatprep.subr.mxu0 0.0
    %v897 = vand.u32 %v170, 4294901760
    %898 = vmatpush1.msra.mxu0 %v897
    %899 = vmatprep.subr.mxu0 0.0
    %900 = vmatpush2.msra.mxu0 0.0
    %901 = vmatprep.subr.mxu0 0.0
    %902 = vmatpush2.msra.mxu0 0.0
    %903 = vmatprep.subr.mxu0 0.0
    %904 = vmatpush2.msra.mxu0 0.0
    %905 = vmatprep.subr.mxu0 0.0
    %906 = vmatpush2.msra.mxu0 0.0
    %907 = vmatprep.subr.mxu0 0.0
    %908 = vmatpush2.msra.mxu0 0.0
    %909 = vmatprep.subr.mxu0 0.0
    %910 = vmatpush2.msra.mxu0 0.0
    %911 = vmatprep.subr.mxu0 0.0
    %912 = vmatpush2.msra.mxu0 0.0
    %913 = vmatprep.subr.mxu0 0.0
    %914 = vmatpush2.msra.mxu0 0.0
    %915 = vmatprep.subr.mxu0 0.0
    %916 = vmatpush2.msra.mxu0 0.0
    %917 = vmatprep.subr.mxu0 0.0
    %918 = vmatpush2.msra.mxu0 0.0
    %919 = vmatprep.subr.mxu0 0.0
    %920 = vmatpush2.msra.mxu0 0.0
    %921 = vmatprep.subr.mxu0 0.0
    %922 = vmatpush2.msra.mxu0 0.0
    %923 = vmatprep.subr.mxu0 0.0
    %924 = vmatpush2.msra.mxu0 0.0
    %925 = vmatprep.subr.mxu0 0.0
    %926 = vmatpush2.msra.mxu0 0.0
    %927 = vmatprep.subr.mxu0 0.0
    %928 = vmatpush2.msra.mxu0 0.0
    %929 = vmatprep.subr.mxu0 0.0
    %930 = vmatpush2.msra.mxu0 0.0
    %931 = vmatprep.mubr.f32.mxu0 0.0
    %v932 = vand.u32 %v277, 4294901760
    %933 = vmatmul.mubr.f32.gmra.mxu0 %v932
    %v934 = vpop.f32.mrf.mxu0
    %v935 = vadd.f32 %v832, %v934
    %v936 = vpop.f32.mrf.mxu0
    %937 = vmatprep.mubr.f32.mxu0 0.0
    %v938 = vand.u32 %v280, 4294901760
    %939 = vmatmul.mubr.f32.gmra.mxu0 %v938
    %v940 = vpop.f32.mrf.mxu0
    %v941 = vadd.f32 %v838, %v940
    %v942 = vpop.f32.mrf.mxu0
    %943 = vmatprep.mubr.f32.mxu0 0.0
    %v944 = vand.u32 %v283, 4294901760
    %945 = vmatmul.mubr.f32.gmra.mxu0 %v944
    %v946 = vpop.f32.mrf.mxu0
    %v947 = vadd.f32 %v844, %v946
    %v948 = vpop.f32.mrf.mxu0
    %949 = vmatprep.mubr.f32.mxu0 0.0
    %v950 = vand.u32 %v286, 4294901760
    %951 = vmatmul.mubr.f32.gmra.mxu0 %v950
    %v952 = vpop.f32.mrf.mxu0
    %v953 = vadd.f32 %v850, %v952
    %v954 = vpop.f32.mrf.mxu0
    %955 = vmatprep.mubr.f32.mxu0 0.0
    %v956 = vand.u32 %v289, 4294901760
    %957 = vmatmul.mubr.f32.gmra.mxu0 %v956
    %v958 = vpop.f32.mrf.mxu0
    %v959 = vadd.f32 %v856, %v958
    %v960 = vpop.f32.mrf.mxu0
    %961 = vmatprep.mubr.f32.mxu0 0.0
    %v962 = vand.u32 %v292, 4294901760
    %963 = vmatmul.mubr.f32.gmra.mxu0 %v962
    %v964 = vpop.f32.mrf.mxu0
    %v965 = vadd.f32 %v862, %v964
    %v966 = vpop.f32.mrf.mxu0
    %967 = vdwg.mxu0
    %v968 = vcvt.s32.f32 %v174
    %v969 = vcvt.s32.f32 %v175
    %v970 = vcvt.s32.f32 %v238
    %v971 = vcvt.s32.f32 %v239
    %v972 = vcvt.s32.f32 %v240
    %v973 = vcvt.s32.f32 %v241
    %v974 = vmul.f32 %v968, 0.33333334
    %v975 = vmul.f32 %v969, 0.33333334
    %v976 = vmul.f32 %v970, 0.33333334
    %v977 = vmul.f32 %v971, 0.33333334
    %v978 = vmul.f32 %v972, 0.33333334
    %v979 = vmul.f32 %v973, 0.33333334
    %v980 = vcvt.f32.s32.to.zero.pseudo %v974
    %v981 = vcvt.f32.s32.to.zero.pseudo %v975
    %v982 = vcvt.f32.s32.to.zero.pseudo %v976
    %v983 = vcvt.f32.s32.to.zero.pseudo %v977
    %v984 = vcvt.f32.s32.to.zero.pseudo %v978
    %v985 = vcvt.f32.s32.to.zero.pseudo %v979
    %v986 = vmul.u32 %v980, 3
    %v987 = vmul.u32 %v981, 3
    %v988 = vmul.u32 %v982, 3
    %v989 = vmul.u32 %v983, 3
    %v990 = vmul.u32 %v984, 3
    %v991 = vmul.u32 %v985, 3
    %v992 = vsub.s32 %v174, %v986
    %v993 = vsub.s32 %v175, %v987
    %v994 = vsub.s32 %v238, %v988
    %v995 = vsub.s32 %v239, %v989
    %v996 = vsub.s32 %v240, %v990
    %v997 = vsub.s32 %v241, %v991
    %v998 = vadd.s32 %v992, 1
    %v999 = vadd.s32 %v993, 1
    %v1000 = vadd.s32 %v994, 1
    %v1001 = vadd.s32 %v995, 1
    %v1002 = vadd.s32 %v996, 1
    %v1003 = vadd.s32 %v997, 1
    %v1004 = vcvt.s32.f32 %v998
    %v1005 = vcvt.s32.f32 %v999
    %v1006 = vcvt.s32.f32 %v1000
    %v1007 = vcvt.s32.f32 %v1001
    %v1008 = vcvt.s32.f32 %v1002
    %v1009 = vcvt.s32.f32 %v1003
    %v1010 = vlaneseq
    %v1011 = vshrl.u32 %v1010, 7
    %v1012 = vsub.s32 0, %v1011
    %v1013 = vrot.slane %v24, %v1012
    %vm1014 = vcmp.eq.f32.partialorder %v1013, %v1004
    %vm1015 = vcmp.eq.f32.partialorder %v1013, %v1005
    %vm1016 = vcmp.eq.f32.partialorder %v1013, %v1006
    %vm1017 = vcmp.eq.f32.partialorder %v1013, %v1007
    %vm1018 = vcmp.eq.f32.partialorder %v1013, %v1008
    %vm1019 = vcmp.eq.f32.partialorder %v1013, %v1009
    %v1020 = vsel %vm1014, %v935, -1.0
    %v1021 = vsel %vm1015, %v941, -1.0
    %v1022 = vsel %vm1016, %v947, -1.0
    %v1023 = vsel %vm1017, %v953, -1.0
    %v1024 = vsel %vm1018, %v959, -1.0
    %v1025 = vsel %vm1019, %v965, -1.0
    %vm1026 = vcmask 64512
    %1027 = vst.msk [vmem:[#allocation2] sm:$0xff] %vm1026, %v1020
    %1028 = vst.msk [vmem:[#allocation2 + $0x8] sm:$0xff] %vm1026, %v1021
    %1029 = vst.msk [vmem:[#allocation2 + $0x10] sm:$0xff] %vm1026, %v1022
    %1030 = vst.msk [vmem:[#allocation2 + $0x18] sm:$0xff] %vm1026, %v1023
    %1031 = vst.msk [vmem:[#allocation2 + $0x20] sm:$0xff] %vm1026, %v1024
    %1032 = vst.msk [vmem:[#allocation2 + $0x28] sm:$0xff] %vm1026, %v1025
    %v1033 = vadd.s32 %v174, 1
    %v1034 = vcvt.s32.f32 %v1033
    %vm1035 = vcmp.eq.f32.partialorder %v189, %v1034
    %v1036 = vsel %vm1035, 1, 0
    %vm1037 = vcmask 124928
    %v1038 = vsel %vm1037, %v1036, 0
    %v1039 = vand.u32 %v1038, 65535
    %v1040 = vshrl.u32 %v1038, 16
    %v1041 = vcvt.s32.f32 %v1039
    %v1042 = vcvt.s32.f32 %v1040
    %1043 = vadd.xlane.f32.xlu0 %v1041
    %v1044 = vpop.xlane.xlu0 %1043
    %1045 = vadd.xlane.f32.xlu0 %v1042
    %v1046 = vpop.xlane.xlu0 %1045
    %v1047 = vcvt.f32.s32 %v1044
    %v1048 = vcvt.f32.s32 %v1046
    %v1049 = vshll.u32 %v1048, 16
    %v1050 = vadd.s32 %v1049, %v1047
    %vm1051 = vcmp.eq.f32.partialorder %v1013, %v1034
    %v1052 = vsel %vm1051, 1, 0
    %vm1053 = vcmask 59392
    %v1054 = vsel %vm1053, %v1052, 0
    %v1055 = vand.u32 %v1054, 65535
    %v1056 = vshrl.u32 %v1054, 16
    %v1057 = vcvt.s32.f32 %v1055
    %v1058 = vcvt.s32.f32 %v1056
    %1059 = vadd.xlane.f32.xlu0 %v1057
    %v1060 = vpop.xlane.xlu0 %1059
    %1061 = vadd.xlane.f32.xlu0 %v1058
    %v1062 = vpop.xlane.xlu0 %1061
    %v1063 = vcvt.f32.s32 %v1060
    %v1064 = vcvt.f32.s32 %v1062
    %v1065 = vshll.u32 %v1064, 16
    %v1066 = vadd.s32 %v1065, %v1063
    %v1067 = vsub.s32 7, %v177
    %v1068 = vshll.u32 %v1067, 1
    %v1069 = vadd.s32 %v1068, 1
    %v1070 = vld [vmem:[#allocation2] sm:$0x7]
    %vm1071 = vcmp.gt.f32.partialorder %v1070, 0.5
    %v1073 = vsub.s32 %v1070, 1056964608
    %v1074 = vshll.u32 %v1073, 4
    %v1075 = vor.u32 %v1074, %v1069
    %v1076 = vsel %vm1071, %v1075, 4294967295
    %v1077 = vsel %vm1053, %v1076, 2147483648
    %v1078 = vand.u32 %v1077, 65535
    %v1079 = vshra.s32 %v1077, 16
    %v1080 = vcvt.s32.f32 %v1078
    %v1081 = vcvt.s32.f32 %v1079
    %1082 = vmax.xlane.f32.xlu0 %v1081
    %v1083 = vpop.xlane.xlu0 %1082
    %vm1084 = vcmp.eq.f32.partialorder %v1081, %v1083
    %v1085 = vsel %vm1084, %v1080, -inf
    %1086 = vmax.xlane.f32.xlu0 %v1085
    %v1087 = vpop.xlane.xlu0 %1086
    %v1088 = vcvt.f32.s32 %v1087
    %v1089 = vcvt.f32.s32 %v1083
    %v1090 = vshll.u32 %v1089, 16
    %v1091 = vadd.s32 %v1090, %v1088
    %vm1092 = vcmp.gt.s32.totalorder %v1050, 0
    %vm1093 = vcmp.ge.s32.totalorder %v1091, 0
    %vm1094 = vmand %vm1092, %vm1093
    %v1095 = vand.u32 %v1091, 1
    %vm1096 = vcmp.eq.s32.totalorder %v1095, 1
    %vm1097 = vmand %vm1094, %vm1096
    %v1098 = vshra.s32 %v1091, 1
    %v1099 = vand.u32 %v1098, 7
    %vm1100 = vcmp.eq.s32.totalorder %v1067, %v1099
    %v1101 = vsel %vm1097, 1, 0
    %vm1102 = vcmp.eq.s32.totalorder %v1101, 1
    %vm1103 = vmand %vm1100, %vm1102
    %v1104 = vsel %vm1103, 1, 0
    %vm1105 = vcmp.eq.s32.totalorder %v177, 0
    %v1106 = vsel %vm1105, 1, 0
    %vm1107 = vcmp.eq.s32.totalorder %v1106, 1
    %vm1108 = vmand %vm1107, %vm1102
    %v1109 = vsel %vm1108, 1.0, 0.0
    %v1110 = vld [vmem:[#allocation2 + $0x3] sm:$0x7]
    %vm1111 = vcmp.gt.f32.partialorder %v1110, 0.5
    %v1113 = vsub.s32 %v1110, 1056964608
    %v1114 = vshll.u32 %v1113, 4
    %v1115 = vsub.s32 %v1069, %v1104
    %v1116 = vor.u32 %v1114, %v1115
    %v1117 = vsel %vm1111, %v1116, 4294967295
    %v1118 = vsel %vm1053, %v1117, 2147483648
    %v1119 = vand.u32 %v1118, 65535
    %v1120 = vshra.s32 %v1118, 16
    %v1121 = vcvt.s32.f32 %v1119
    %v1122 = vcvt.s32.f32 %v1120
    %1123 = vmax.xlane.f32.xlu0 %v1122
    %v1124 = vpop.xlane.xlu0 %1123
    %vm1125 = vcmp.eq.f32.partialorder %v1122, %v1124
    %v1126 = vsel %vm1125, %v1121, -inf
    %1127 = vmax.xlane.f32.xlu0 %v1126
    %v1128 = vpop.xlane.xlu0 %1127
    %v1129 = vcvt.f32.s32 %v1128
    %v1130 = vcvt.f32.s32 %v1124
    %v1131 = vshll.u32 %v1130, 16
    %v1132 = vadd.s32 %v1131, %v1129
    %vm1133 = vcmp.gt.s32.totalorder %v1050, 1
    %vm1134 = vcmp.ge.s32.totalorder %v1132, 0
    %vm1135 = vmand %vm1133, %vm1134
    %v1136 = vand.u32 %v1132, 1
    %vm1137 = vcmp.eq.s32.totalorder %v1136, 1
    %vm1138 = vmand %vm1135, %vm1137
    %v1139 = vshra.s32 %v1132, 1
    %v1140 = vand.u32 %v1139, 7
    %vm1141 = vcmp.eq.s32.totalorder %v1067, %v1140
    %v1142 = vsel %vm1138, 1, 0
    %vm1143 = vcmp.eq.s32.totalorder %v1142, 1
    %vm1144 = vmand %vm1141, %vm1143
    %v1145 = vsel %vm1144, 1, %v1104
    %vm1146 = vcmp.eq.s32.totalorder %v177, 1
    %v1147 = vsel %vm1146, 1, 0
    %vm1148 = vcmp.eq.s32.totalorder %v1147, 1
    %vm1149 = vmand %vm1148, %vm1143
    %v1150 = vsel %vm1149, 1.0, %v1109
    %v1151 = vld [vmem:[#allocation2 + $0x6] sm:$0x7]
    %vm1152 = vcmp.gt.f32.partialorder %v1151, 0.5
    %v1154 = vsub.s32 %v1151, 1056964608
    %v1155 = vshll.u32 %v1154, 4
    %v1156 = vsub.s32 %v1069, %v1145
    %v1157 = vor.u32 %v1155, %v1156
    %v1158 = vsel %vm1152, %v1157, 4294967295
    %v1159 = vsel %vm1053, %v1158, 2147483648
    %v1160 = vand.u32 %v1159, 65535
    %v1161 = vshra.s32 %v1159, 16
    %v1162 = vcvt.s32.f32 %v1160
    %v1163 = vcvt.s32.f32 %v1161
    %1164 = vmax.xlane.f32.xlu0 %v1163
    %v1165 = vpop.xlane.xlu0 %1164
    %vm1166 = vcmp.eq.f32.partialorder %v1163, %v1165
    %v1167 = vsel %vm1166, %v1162, -inf
    %1168 = vmax.xlane.f32.xlu0 %v1167
    %v1169 = vpop.xlane.xlu0 %1168
    %v1170 = vcvt.f32.s32 %v1169
    %v1171 = vcvt.f32.s32 %v1165
    %v1172 = vshll.u32 %v1171, 16
    %v1173 = vadd.s32 %v1172, %v1170
    %vm1174 = vcmp.gt.s32.totalorder %v1050, 2
    %vm1175 = vcmp.ge.s32.totalorder %v1173, 0
    %vm1176 = vmand %vm1174, %vm1175
    %v1177 = vand.u32 %v1173, 1
    %vm1178 = vcmp.eq.s32.totalorder %v1177, 1
    %vm1179 = vmand %vm1176, %vm1178
    %v1180 = vshra.s32 %v1173, 1
    %v1181 = vand.u32 %v1180, 7
    %vm1182 = vcmp.eq.s32.totalorder %v1067, %v1181
    %v1183 = vsel %vm1179, 1, 0
    %vm1184 = vcmp.eq.s32.totalorder %v1183, 1
    %vm1185 = vmand %vm1182, %vm1184
    %v1186 = vsel %vm1185, 1, %v1145
    %vm1187 = vcmp.eq.s32.totalorder %v177, 2
    %v1188 = vsel %vm1187, 1, 0
    %vm1189 = vcmp.eq.s32.totalorder %v1188, 1
    %vm1190 = vmand %vm1189, %vm1184
    %v1191 = vsel %vm1190, 1.0, %v1150
    %v1192 = vld [vmem:[#allocation2 + $0x9] sm:$0x7]
    %vm1193 = vcmp.gt.f32.partialorder %v1192, 0.5
    %v1195 = vsub.s32 %v1192, 1056964608
    %v1196 = vshll.u32 %v1195, 4
    %v1197 = vsub.s32 %v1069, %v1186
    %v1198 = vor.u32 %v1196, %v1197
    %v1199 = vsel %vm1193, %v1198, 4294967295
    %v1200 = vsel %vm1053, %v1199, 2147483648
    %v1201 = vand.u32 %v1200, 65535
    %v1202 = vshra.s32 %v1200, 16
    %v1203 = vcvt.s32.f32 %v1201
    %v1204 = vcvt.s32.f32 %v1202
    %1205 = vmax.xlane.f32.xlu0 %v1204
    %v1206 = vpop.xlane.xlu0 %1205
    %vm1207 = vcmp.eq.f32.partialorder %v1204, %v1206
    %v1208 = vsel %vm1207, %v1203, -inf
    %1209 = vmax.xlane.f32.xlu0 %v1208
    %v1210 = vpop.xlane.xlu0 %1209
    %v1211 = vcvt.f32.s32 %v1210
    %v1212 = vcvt.f32.s32 %v1206
    %v1213 = vshll.u32 %v1212, 16
    %v1214 = vadd.s32 %v1213, %v1211
    %vm1215 = vcmp.gt.s32.totalorder %v1050, 3
    %vm1216 = vcmp.ge.s32.totalorder %v1214, 0
    %vm1217 = vmand %vm1215, %vm1216
    %v1218 = vand.u32 %v1214, 1
    %vm1219 = vcmp.eq.s32.totalorder %v1218, 1
    %vm1220 = vmand %vm1217, %vm1219
    %v1221 = vshra.s32 %v1214, 1
    %v1222 = vand.u32 %v1221, 7
    %vm1223 = vcmp.eq.s32.totalorder %v1067, %v1222
    %v1224 = vsel %vm1220, 1, 0
    %vm1225 = vcmp.eq.s32.totalorder %v1224, 1
    %vm1226 = vmand %vm1223, %vm1225
    %v1227 = vsel %vm1226, 1, %v1186
    %vm1228 = vcmp.eq.s32.totalorder %v177, 3
    %v1229 = vsel %vm1228, 1, 0
    %vm1230 = vcmp.eq.s32.totalorder %v1229, 1
    %vm1231 = vmand %vm1230, %vm1225
    %v1232 = vsel %vm1231, 1.0, %v1191
    %v1233 = vld [vmem:[#allocation2 + $0xc] sm:$0x7]
    %vm1234 = vcmp.gt.f32.partialorder %v1233, 0.5
    %v1236 = vsub.s32 %v1233, 1056964608
    %v1237 = vshll.u32 %v1236, 4
    %v1238 = vsub.s32 %v1069, %v1227
    %v1239 = vor.u32 %v1237, %v1238
    %v1240 = vsel %vm1234, %v1239, 4294967295
    %v1241 = vsel %vm1053, %v1240, 2147483648
    %v1242 = vand.u32 %v1241, 65535
    %v1243 = vshra.s32 %v1241, 16
    %v1244 = vcvt.s32.f32 %v1242
    %v1245 = vcvt.s32.f32 %v1243
    %1246 = vmax.xlane.f32.xlu0 %v1245
    %v1247 = vpop.xlane.xlu0 %1246
    %vm1248 = vcmp.eq.f32.partialorder %v1245, %v1247
    %v1249 = vsel %vm1248, %v1244, -inf
    %1250 = vmax.xlane.f32.xlu0 %v1249
    %v1251 = vpop.xlane.xlu0 %1250
    %v1252 = vcvt.f32.s32 %v1251
    %v1253 = vcvt.f32.s32 %v1247
    %v1254 = vshll.u32 %v1253, 16
    %v1255 = vadd.s32 %v1254, %v1252
    %vm1256 = vcmp.gt.s32.totalorder %v1050, 4
    %vm1257 = vcmp.ge.s32.totalorder %v1255, 0
    %vm1258 = vmand %vm1256, %vm1257
    %v1259 = vand.u32 %v1255, 1
    %vm1260 = vcmp.eq.s32.totalorder %v1259, 1
    %vm1261 = vmand %vm1258, %vm1260
    %v1262 = vshra.s32 %v1255, 1
    %v1263 = vand.u32 %v1262, 7
    %vm1264 = vcmp.eq.s32.totalorder %v1067, %v1263
    %v1265 = vsel %vm1261, 1, 0
    %vm1266 = vcmp.eq.s32.totalorder %v1265, 1
    %vm1267 = vmand %vm1264, %vm1266
    %v1268 = vsel %vm1267, 1, %v1227
    %vm1269 = vcmp.eq.s32.totalorder %v177, 4
    %v1270 = vsel %vm1269, 1, 0
    %vm1271 = vcmp.eq.s32.totalorder %v1270, 1
    %vm1272 = vmand %vm1271, %vm1266
    %v1273 = vsel %vm1272, 1.0, %v1232
    %v1274 = vld [vmem:[#allocation2 + $0xf] sm:$0x7]
    %vm1275 = vcmp.gt.f32.partialorder %v1274, 0.5
    %v1277 = vsub.s32 %v1274, 1056964608
    %v1278 = vshll.u32 %v1277, 4
    %v1279 = vsub.s32 %v1069, %v1268
    %v1280 = vor.u32 %v1278, %v1279
    %v1281 = vsel %vm1275, %v1280, 4294967295
    %v1282 = vsel %vm1053, %v1281, 2147483648
    %v1283 = vand.u32 %v1282, 65535
    %v1284 = vshra.s32 %v1282, 16
    %v1285 = vcvt.s32.f32 %v1283
    %v1286 = vcvt.s32.f32 %v1284
    %1287 = vmax.xlane.f32.xlu0 %v1286
    %v1288 = vpop.xlane.xlu0 %1287
    %vm1289 = vcmp.eq.f32.partialorder %v1286, %v1288
    %v1290 = vsel %vm1289, %v1285, -inf
    %1291 = vmax.xlane.f32.xlu0 %v1290
    %v1292 = vpop.xlane.xlu0 %1291
    %v1293 = vcvt.f32.s32 %v1292
    %v1294 = vcvt.f32.s32 %v1288
    %v1295 = vshll.u32 %v1294, 16
    %v1296 = vadd.s32 %v1295, %v1293
    %vm1297 = vcmp.gt.s32.totalorder %v1050, 5
    %vm1298 = vcmp.ge.s32.totalorder %v1296, 0
    %vm1299 = vmand %vm1297, %vm1298
    %v1300 = vand.u32 %v1296, 1
    %vm1301 = vcmp.eq.s32.totalorder %v1300, 1
    %vm1302 = vmand %vm1299, %vm1301
    %v1303 = vshra.s32 %v1296, 1
    %v1304 = vand.u32 %v1303, 7
    %vm1305 = vcmp.eq.s32.totalorder %v1067, %v1304
    %v1306 = vsel %vm1302, 1, 0
    %vm1307 = vcmp.eq.s32.totalorder %v1306, 1
    %vm1308 = vmand %vm1305, %vm1307
    %v1309 = vsel %vm1308, 1, %v1268
    %vm1310 = vcmp.eq.s32.totalorder %v177, 5
    %v1311 = vsel %vm1310, 1, 0
    %vm1312 = vcmp.eq.s32.totalorder %v1311, 1
    %vm1313 = vmand %vm1312, %vm1307
    %v1314 = vsel %vm1313, 1.0, %v1273
    %v1315 = vld [vmem:[#allocation2 + $0x12] sm:$0x7]
    %vm1316 = vcmp.gt.f32.partialorder %v1315, 0.5
    %v1318 = vsub.s32 %v1315, 1056964608
    %v1319 = vshll.u32 %v1318, 4
    %v1320 = vsub.s32 %v1069, %v1309
    %v1321 = vor.u32 %v1319, %v1320
    %v1322 = vsel %vm1316, %v1321, 4294967295
    %v1323 = vsel %vm1053, %v1322, 2147483648
    %v1324 = vand.u32 %v1323, 65535
    %v1325 = vshra.s32 %v1323, 16
    %v1326 = vcvt.s32.f32 %v1324
    %v1327 = vcvt.s32.f32 %v1325
    %1328 = vmax.xlane.f32.xlu0 %v1327
    %v1329 = vpop.xlane.xlu0 %1328
    %vm1330 = vcmp.eq.f32.partialorder %v1327, %v1329
    %v1331 = vsel %vm1330, %v1326, -inf
    %1332 = vmax.xlane.f32.xlu0 %v1331
    %v1333 = vpop.xlane.xlu0 %1332
    %v1334 = vcvt.f32.s32 %v1333
    %v1335 = vcvt.f32.s32 %v1329
    %v1336 = vshll.u32 %v1335, 16
    %v1337 = vadd.s32 %v1336, %v1334
    %vm1338 = vcmp.gt.s32.totalorder %v1050, 6
    %vm1339 = vcmp.ge.s32.totalorder %v1337, 0
    %vm1340 = vmand %vm1338, %vm1339
    %v1341 = vand.u32 %v1337, 1
    %vm1342 = vcmp.eq.s32.totalorder %v1341, 1
    %vm1343 = vmand %vm1340, %vm1342
    %v1344 = vshra.s32 %v1337, 1
    %v1345 = vand.u32 %v1344, 7
    %vm1346 = vcmp.eq.s32.totalorder %v1067, %v1345
    %v1347 = vsel %vm1343, 1, 0
    %vm1348 = vcmp.eq.s32.totalorder %v1347, 1
    %vm1349 = vmand %vm1346, %vm1348
    %v1350 = vsel %vm1349, 1, %v1309
    %vm1351 = vcmp.eq.s32.totalorder %v177, 6
    %v1352 = vsel %vm1351, 1, 0
    %vm1353 = vcmp.eq.s32.totalorder %v1352, 1
    %vm1354 = vmand %vm1353, %vm1348
    %v1355 = vsel %vm1354, 1.0, %v1314
    %v1356 = vld [vmem:[#allocation2 + $0x15] sm:$0x7]
    %vm1357 = vcmp.gt.f32.partialorder %v1356, 0.5
    %v1359 = vsub.s32 %v1356, 1056964608
    %v1360 = vshll.u32 %v1359, 4
    %v1361 = vsub.s32 %v1069, %v1350
    %v1362 = vor.u32 %v1360, %v1361
    %v1363 = vsel %vm1357, %v1362, 4294967295
    %v1364 = vsel %vm1053, %v1363, 2147483648
    %v1365 = vand.u32 %v1364, 65535
    %v1366 = vshra.s32 %v1364, 16
    %v1367 = vcvt.s32.f32 %v1365
    %v1368 = vcvt.s32.f32 %v1366
    %1369 = vmax.xlane.f32.xlu0 %v1368
    %v1370 = vpop.xlane.xlu0 %1369
    %vm1371 = vcmp.eq.f32.partialorder %v1368, %v1370
    %v1372 = vsel %vm1371, %v1367, -inf
    %1373 = vmax.xlane.f32.xlu0 %v1372
    %v1374 = vpop.xlane.xlu0 %1373
    %v1375 = vcvt.f32.s32 %v1374
    %v1376 = vcvt.f32.s32 %v1370
    %v1377 = vshll.u32 %v1376, 16
    %v1378 = vadd.s32 %v1377, %v1375
    %vm1379 = vcmp.gt.s32.totalorder %v1050, 7
    %vm1380 = vcmp.ge.s32.totalorder %v1378, 0
    %vm1381 = vmand %vm1379, %vm1380
    %v1382 = vand.u32 %v1378, 1
    %vm1383 = vcmp.eq.s32.totalorder %v1382, 1
    %vm1384 = vmand %vm1381, %vm1383
    %v1385 = vshra.s32 %v1378, 1
    %v1386 = vand.u32 %v1385, 7
    %vm1387 = vcmp.eq.s32.totalorder %v1067, %v1386
    %v1388 = vsel %vm1384, 1, 0
    %vm1389 = vcmp.eq.s32.totalorder %v1388, 1
    %vm1390 = vmand %vm1387, %vm1389
    %v1391 = vsel %vm1390, 1, %v1350
    %vm1392 = vcmp.eq.s32.totalorder %v177, 7
    %v1393 = vsel %vm1392, 1, 0
    %vm1394 = vcmp.eq.s32.totalorder %v1393, 1
    %vm1395 = vmand %vm1394, %vm1389
    %v1396 = vsel %vm1395, 1.0, %v1355
    %v1397 = vld [vmem:[#allocation2 + $0x18] sm:$0x7]
    %vm1398 = vcmp.gt.f32.partialorder %v1397, 0.5
    %v1400 = vsub.s32 %v1397, 1056964608
    %v1401 = vshll.u32 %v1400, 4
    %v1402 = vsub.s32 %v1069, %v1391
    %v1403 = vor.u32 %v1401, %v1402
    %v1404 = vsel %vm1398, %v1403, 4294967295
    %v1405 = vsel %vm1053, %v1404, 2147483648
    %v1406 = vand.u32 %v1405, 65535
    %v1407 = vshra.s32 %v1405, 16
    %v1408 = vcvt.s32.f32 %v1406
    %v1409 = vcvt.s32.f32 %v1407
    %1410 = vmax.xlane.f32.xlu0 %v1409
    %v1411 = vpop.xlane.xlu0 %1410
    %vm1412 = vcmp.eq.f32.partialorder %v1409, %v1411
    %v1413 = vsel %vm1412, %v1408, -inf
    %1414 = vmax.xlane.f32.xlu0 %v1413
    %v1415 = vpop.xlane.xlu0 %1414
    %v1416 = vcvt.f32.s32 %v1415
    %v1417 = vcvt.f32.s32 %v1411
    %v1418 = vshll.u32 %v1417, 16
    %v1419 = vadd.s32 %v1418, %v1416
    %vm1420 = vcmp.gt.s32.totalorder %v1050, 8
    %vm1421 = vcmp.ge.s32.totalorder %v1419, 0
    %vm1422 = vmand %vm1420, %vm1421
    %v1423 = vand.u32 %v1419, 1
    %vm1424 = vcmp.eq.s32.totalorder %v1423, 1
    %vm1425 = vmand %vm1422, %vm1424
    %v1426 = vshra.s32 %v1419, 1
    %v1427 = vand.u32 %v1426, 7
    %vm1428 = vcmp.eq.s32.totalorder %v1067, %v1427
    %v1429 = vsel %vm1425, 1, 0
    %vm1430 = vcmp.eq.s32.totalorder %v1429, 1
    %vm1431 = vmand %vm1428, %vm1430
    %v1432 = vsel %vm1431, 1, %v1391
    %vm1433 = vcmp.eq.s32.totalorder %v177, 8
    %v1434 = vsel %vm1433, 1, 0
    %vm1435 = vcmp.eq.s32.totalorder %v1434, 1
    %vm1436 = vmand %vm1435, %vm1430
    %v1437 = vsel %vm1436, 1.0, %v1396
    %v1438 = vld [vmem:[#allocation2 + $0x1b] sm:$0x7]
    %vm1439 = vcmp.gt.f32.partialorder %v1438, 0.5
    %v1441 = vsub.s32 %v1438, 1056964608
    %v1442 = vshll.u32 %v1441, 4
    %v1443 = vsub.s32 %v1069, %v1432
    %v1444 = vor.u32 %v1442, %v1443
    %v1445 = vsel %vm1439, %v1444, 4294967295
    %v1446 = vsel %vm1053, %v1445, 2147483648
    %v1447 = vand.u32 %v1446, 65535
    %v1448 = vshra.s32 %v1446, 16
    %v1449 = vcvt.s32.f32 %v1447
    %v1450 = vcvt.s32.f32 %v1448
    %1451 = vmax.xlane.f32.xlu0 %v1450
    %v1452 = vpop.xlane.xlu0 %1451
    %vm1453 = vcmp.eq.f32.partialorder %v1450, %v1452
    %v1454 = vsel %vm1453, %v1449, -inf
    %1455 = vmax.xlane.f32.xlu0 %v1454
    %v1456 = vpop.xlane.xlu0 %1455
    %v1457 = vcvt.f32.s32 %v1456
    %v1458 = vcvt.f32.s32 %v1452
    %v1459 = vshll.u32 %v1458, 16
    %v1460 = vadd.s32 %v1459, %v1457
    %vm1461 = vcmp.gt.s32.totalorder %v1050, 9
    %vm1462 = vcmp.ge.s32.totalorder %v1460, 0
    %vm1463 = vmand %vm1461, %vm1462
    %v1464 = vand.u32 %v1460, 1
    %vm1465 = vcmp.eq.s32.totalorder %v1464, 1
    %vm1466 = vmand %vm1463, %vm1465
    %v1467 = vshra.s32 %v1460, 1
    %v1468 = vand.u32 %v1467, 7
    %vm1469 = vcmp.eq.s32.totalorder %v1067, %v1468
    %v1470 = vsel %vm1466, 1, 0
    %vm1471 = vcmp.eq.s32.totalorder %v1470, 1
    %vm1472 = vmand %vm1469, %vm1471
    %v1473 = vsel %vm1472, 1, %v1432
    %vm1474 = vcmp.eq.s32.totalorder %v177, 9
    %v1475 = vsel %vm1474, 1, 0
    %vm1476 = vcmp.eq.s32.totalorder %v1475, 1
    %vm1477 = vmand %vm1476, %vm1471
    %v1478 = vsel %vm1477, 1.0, %v1437
    %v1479 = vld [vmem:[#allocation2 + $0x1e] sm:$0x7]
    %vm1480 = vcmp.gt.f32.partialorder %v1479, 0.5
    %v1482 = vsub.s32 %v1479, 1056964608
    %v1483 = vshll.u32 %v1482, 4
    %v1484 = vsub.s32 %v1069, %v1473
    %v1485 = vor.u32 %v1483, %v1484
    %v1486 = vsel %vm1480, %v1485, 4294967295
    %v1487 = vsel %vm1053, %v1486, 2147483648
    %v1488 = vand.u32 %v1487, 65535
    %v1489 = vshra.s32 %v1487, 16
    %v1490 = vcvt.s32.f32 %v1488
    %v1491 = vcvt.s32.f32 %v1489
    %1492 = vmax.xlane.f32.xlu0 %v1491
    %v1493 = vpop.xlane.xlu0 %1492
    %vm1494 = vcmp.eq.f32.partialorder %v1491, %v1493
    %v1495 = vsel %vm1494, %v1490, -inf
    %1496 = vmax.xlane.f32.xlu0 %v1495
    %v1497 = vpop.xlane.xlu0 %1496
    %v1498 = vcvt.f32.s32 %v1497
    %v1499 = vcvt.f32.s32 %v1493
    %v1500 = vshll.u32 %v1499, 16
    %v1501 = vadd.s32 %v1500, %v1498
    %vm1502 = vcmp.gt.s32.totalorder %v1050, 10
    %vm1503 = vcmp.ge.s32.totalorder %v1501, 0
    %vm1504 = vmand %vm1502, %vm1503
    %v1505 = vand.u32 %v1501, 1
    %vm1506 = vcmp.eq.s32.totalorder %v1505, 1
    %vm1507 = vmand %vm1504, %vm1506
    %v1508 = vshra.s32 %v1501, 1
    %v1509 = vand.u32 %v1508, 7
    %vm1510 = vcmp.eq.s32.totalorder %v1067, %v1509
    %v1511 = vsel %vm1507, 1, 0
    %vm1512 = vcmp.eq.s32.totalorder %v1511, 1
    %vm1513 = vmand %vm1510, %vm1512
    %v1514 = vsel %vm1513, 1, %v1473
    %vm1515 = vcmp.eq.s32.totalorder %v177, 10
    %v1516 = vsel %vm1515, 1, 0
    %vm1517 = vcmp.eq.s32.totalorder %v1516, 1
    %vm1518 = vmand %vm1517, %vm1512
    %v1519 = vsel %vm1518, 1.0, %v1478
    %v1520 = vld [vmem:[#allocation2 + $0x21] sm:$0x7]
    %vm1521 = vcmp.gt.f32.partialorder %v1520, 0.5
    %v1523 = vsub.s32 %v1520, 1056964608
    %v1524 = vshll.u32 %v1523, 4
    %v1525 = vsub.s32 %v1069, %v1514
    %v1526 = vor.u32 %v1524, %v1525
    %v1527 = vsel %vm1521, %v1526, 4294967295
    %v1528 = vsel %vm1053, %v1527, 2147483648
    %v1529 = vand.u32 %v1528, 65535
    %v1530 = vshra.s32 %v1528, 16
    %v1531 = vcvt.s32.f32 %v1529
    %v1532 = vcvt.s32.f32 %v1530
    %1533 = vmax.xlane.f32.xlu0 %v1532
    %v1534 = vpop.xlane.xlu0 %1533
    %vm1535 = vcmp.eq.f32.partialorder %v1532, %v1534
    %v1536 = vsel %vm1535, %v1531, -inf
    %1537 = vmax.xlane.f32.xlu0 %v1536
    %v1538 = vpop.xlane.xlu0 %1537
    %v1539 = vcvt.f32.s32 %v1538
    %v1540 = vcvt.f32.s32 %v1534
    %v1541 = vshll.u32 %v1540, 16
    %v1542 = vadd.s32 %v1541, %v1539
    %vm1543 = vcmp.gt.s32.totalorder %v1050, 11
    %vm1544 = vcmp.ge.s32.totalorder %v1542, 0
    %vm1545 = vmand %vm1543, %vm1544
    %v1546 = vand.u32 %v1542, 1
    %vm1547 = vcmp.eq.s32.totalorder %v1546, 1
    %vm1548 = vmand %vm1545, %vm1547
    %v1549 = vshra.s32 %v1542, 1
    %v1550 = vand.u32 %v1549, 7
    %vm1551 = vcmp.eq.s32.totalorder %v1067, %v1550
    %v1552 = vsel %vm1548, 1, 0
    %vm1553 = vcmp.eq.s32.totalorder %v1552, 1
    %vm1554 = vmand %vm1551, %vm1553
    %v1555 = vsel %vm1554, 1, %v1514
    %vm1556 = vcmp.eq.s32.totalorder %v177, 11
    %v1557 = vsel %vm1556, 1, 0
    %vm1558 = vcmp.eq.s32.totalorder %v1557, 1
    %vm1559 = vmand %vm1558, %vm1553
    %v1560 = vsel %vm1559, 1.0, %v1519
    %v1561 = vld [vmem:[#allocation2 + $0x24] sm:$0x7]
    %vm1562 = vcmp.gt.f32.partialorder %v1561, 0.5
    %v1564 = vsub.s32 %v1561, 1056964608
    %v1565 = vshll.u32 %v1564, 4
    %v1566 = vsub.s32 %v1069, %v1555
    %v1567 = vor.u32 %v1565, %v1566
    %v1568 = vsel %vm1562, %v1567, 4294967295
    %v1569 = vsel %vm1053, %v1568, 2147483648
    %v1570 = vand.u32 %v1569, 65535
    %v1571 = vshra.s32 %v1569, 16
    %v1572 = vcvt.s32.f32 %v1570
    %v1573 = vcvt.s32.f32 %v1571
    %1574 = vmax.xlane.f32.xlu0 %v1573
    %v1575 = vpop.xlane.xlu0 %1574
    %vm1576 = vcmp.eq.f32.partialorder %v1573, %v1575
    %v1577 = vsel %vm1576, %v1572, -inf
    %1578 = vmax.xlane.f32.xlu0 %v1577
    %v1579 = vpop.xlane.xlu0 %1578
    %v1580 = vcvt.f32.s32 %v1579
    %v1581 = vcvt.f32.s32 %v1575
    %v1582 = vshll.u32 %v1581, 16
    %v1583 = vadd.s32 %v1582, %v1580
    %vm1584 = vcmp.gt.s32.totalorder %v1050, 12
    %vm1585 = vcmp.ge.s32.totalorder %v1583, 0
    %vm1586 = vmand %vm1584, %vm1585
    %v1587 = vand.u32 %v1583, 1
    %vm1588 = vcmp.eq.s32.totalorder %v1587, 1
    %vm1589 = vmand %vm1586, %vm1588
    %v1590 = vshra.s32 %v1583, 1
    %v1591 = vand.u32 %v1590, 7
    %vm1592 = vcmp.eq.s32.totalorder %v1067, %v1591
    %v1593 = vsel %vm1589, 1, 0
    %vm1594 = vcmp.eq.s32.totalorder %v1593, 1
    %vm1595 = vmand %vm1592, %vm1594
    %v1596 = vsel %vm1595, 1, %v1555
    %vm1597 = vcmp.eq.s32.totalorder %v177, 12
    %v1598 = vsel %vm1597, 1, 0
    %vm1599 = vcmp.eq.s32.totalorder %v1598, 1
    %vm1600 = vmand %vm1599, %vm1594
    %v1601 = vsel %vm1600, 1.0, %v1560
    %v1602 = vld [vmem:[#allocation2 + $0x27] sm:$0x7]
    %vm1603 = vcmp.gt.f32.partialorder %v1602, 0.5
    %v1605 = vsub.s32 %v1602, 1056964608
    %v1606 = vshll.u32 %v1605, 4
    %v1607 = vsub.s32 %v1069, %v1596
    %v1608 = vor.u32 %v1606, %v1607
    %v1609 = vsel %vm1603, %v1608, 4294967295
    %v1610 = vsel %vm1053, %v1609, 2147483648
    %v1611 = vand.u32 %v1610, 65535
    %v1612 = vshra.s32 %v1610, 16
    %v1613 = vcvt.s32.f32 %v1611
    %v1614 = vcvt.s32.f32 %v1612
    %1615 = vmax.xlane.f32.xlu0 %v1614
    %v1616 = vpop.xlane.xlu0 %1615
    %vm1617 = vcmp.eq.f32.partialorder %v1614, %v1616
    %v1618 = vsel %vm1617, %v1613, -inf
    %1619 = vmax.xlane.f32.xlu0 %v1618
    %v1620 = vpop.xlane.xlu0 %1619
    %v1621 = vcvt.f32.s32 %v1620
    %v1622 = vcvt.f32.s32 %v1616
    %v1623 = vshll.u32 %v1622, 16
    %v1624 = vadd.s32 %v1623, %v1621
    %vm1625 = vcmp.gt.s32.totalorder %v1050, 13
    %vm1626 = vcmp.ge.s32.totalorder %v1624, 0
    %vm1627 = vmand %vm1625, %vm1626
    %v1628 = vand.u32 %v1624, 1
    %vm1629 = vcmp.eq.s32.totalorder %v1628, 1
    %vm1630 = vmand %vm1627, %vm1629
    %v1631 = vshra.s32 %v1624, 1
    %v1632 = vand.u32 %v1631, 7
    %vm1633 = vcmp.eq.s32.totalorder %v1067, %v1632
    %v1634 = vsel %vm1630, 1, 0
    %vm1635 = vcmp.eq.s32.totalorder %v1634, 1
    %vm1636 = vmand %vm1633, %vm1635
    %v1637 = vsel %vm1636, 1, %v1596
    %vm1638 = vcmp.eq.s32.totalorder %v177, 13
    %v1639 = vsel %vm1638, 1, 0
    %vm1640 = vcmp.eq.s32.totalorder %v1639, 1
    %vm1641 = vmand %vm1640, %vm1635
    %v1642 = vsel %vm1641, 1.0, %v1601
    %v1643 = vld [vmem:[#allocation2 + $0x2a] sm:$0x7]
    %vm1644 = vcmp.gt.f32.partialorder %v1643, 0.5
    %v1646 = vsub.s32 %v1643, 1056964608
    %v1647 = vshll.u32 %v1646, 4
    %v1648 = vsub.s32 %v1069, %v1637
    %v1649 = vor.u32 %v1647, %v1648
    %v1650 = vsel %vm1644, %v1649, 4294967295
    %v1651 = vsel %vm1053, %v1650, 2147483648
    %v1652 = vand.u32 %v1651, 65535
    %v1653 = vshra.s32 %v1651, 16
    %v1654 = vcvt.s32.f32 %v1652
    %v1655 = vcvt.s32.f32 %v1653
    %1656 = vmax.xlane.f32.xlu0 %v1655
    %v1657 = vpop.xlane.xlu0 %1656
    %vm1658 = vcmp.eq.f32.partialorder %v1655, %v1657
    %v1659 = vsel %vm1658, %v1654, -inf
    %1660 = vmax.xlane.f32.xlu0 %v1659
    %v1661 = vpop.xlane.xlu0 %1660
    %v1662 = vcvt.f32.s32 %v1661
    %v1663 = vcvt.f32.s32 %v1657
    %v1664 = vshll.u32 %v1663, 16
    %v1665 = vadd.s32 %v1664, %v1662
    %vm1666 = vcmp.gt.s32.totalorder %v1050, 14
    %vm1667 = vcmp.ge.s32.totalorder %v1665, 0
    %vm1668 = vmand %vm1666, %vm1667
    %v1669 = vand.u32 %v1665, 1
    %vm1670 = vcmp.eq.s32.totalorder %v1669, 1
    %vm1671 = vmand %vm1668, %vm1670
    %v1672 = vshra.s32 %v1665, 1
    %v1673 = vand.u32 %v1672, 7
    %vm1674 = vcmp.eq.s32.totalorder %v1067, %v1673
    %v1675 = vsel %vm1671, 1, 0
    %vm1676 = vcmp.eq.s32.totalorder %v1675, 1
    %vm1677 = vmand %vm1674, %vm1676
    %v1678 = vsel %vm1677, 1, %v1637
    %vm1679 = vcmp.eq.s32.totalorder %v177, 14
    %v1680 = vsel %vm1679, 1, 0
    %vm1681 = vcmp.eq.s32.totalorder %v1680, 1
    %vm1682 = vmand %vm1681, %vm1676
    %v1683 = vsel %vm1682, 1.0, %v1642
    %v1684 = vld [vmem:[#allocation2 + $0x2d] sm:$0x7]
    %vm1685 = vcmp.gt.f32.partialorder %v1684, 0.5
    %v1687 = vsub.s32 %v1684, 1056964608
    %v1688 = vshll.u32 %v1687, 4
    %v1689 = vsub.s32 %v1069, %v1678
    %v1690 = vor.u32 %v1688, %v1689
    %v1691 = vsel %vm1685, %v1690, 4294967295
    %v1692 = vsel %vm1053, %v1691, 2147483648
    %v1693 = vand.u32 %v1692, 65535
    %v1694 = vshra.s32 %v1692, 16
    %v1695 = vcvt.s32.f32 %v1693
    %v1696 = vcvt.s32.f32 %v1694
    %1697 = vmax.xlane.f32.xlu0 %v1696
    %v1698 = vpop.xlane.xlu0 %1697
    %vm1699 = vcmp.eq.f32.partialorder %v1696, %v1698
    %v1700 = vsel %vm1699, %v1695, -inf
    %1701 = vmax.xlane.f32.xlu0 %v1700
    %v1702 = vpop.xlane.xlu0 %1701
    %v1703 = vcvt.f32.s32 %v1702
    %v1704 = vcvt.f32.s32 %v1698
    %v1705 = vshll.u32 %v1704, 16
    %v1706 = vadd.s32 %v1705, %v1703
    %vm1707 = vcmp.gt.s32.totalorder %v1050, 15
    %vm1708 = vcmp.ge.s32.totalorder %v1706, 0
    %vm1709 = vmand %vm1707, %vm1708
    %v1710 = vand.u32 %v1706, 1
    %vm1711 = vcmp.eq.s32.totalorder %v1710, 1
    %vm1712 = vmand %vm1709, %vm1711
    %vm1713 = vcmp.eq.s32.totalorder %v177, 15
    %v1714 = vsel %vm1713, 1, 0
    %vm1715 = vcmp.eq.s32.totalorder %v1714, 1
    %v1716 = vsel %vm1712, 1, 0
    %vm1717 = vcmp.eq.s32.totalorder %v1716, 1
    %vm1718 = vmand %vm1715, %vm1717
    %v1719 = vsel %vm1718, 1.0, %v1683
    %vm1720 = vcmp.le.s32.totalorder %v174, %v177
    %vm1721 = vcmp.le.s32.totalorder %v175, %v177
    %v1722 = vsel %vm1720, 1, 0
    %v1723 = vsel %vm1721, 1, 0
    %v1724 = vcvt.s32.f32 %v1722
    %v1725 = vcvt.s32.f32 %v1723
    %v1727 = vsel %vm218, %v1719, 0
    %1729 = vmatprep.subr.mxu0 0.0
    %1730 = vmatpush1.msra.mxu0 0.0
    %1731 = vmatprep.subr.mxu0 0.0
    %1732 = vmatpush1.msra.mxu0 0.0
    %1733 = vmatprep.subr.mxu0 0.0
    %1734 = vmatpush1.msra.mxu0 0.0
    %1735 = vmatprep.subr.mxu0 0.0
    %1736 = vmatpush1.msra.mxu0 0.0
    %1737 = vmatprep.subr.mxu0 0.0
    %1738 = vmatpush1.msra.mxu0 0.0
    %1739 = vmatprep.subr.mxu0 0.0
    %1740 = vmatpush1.msra.mxu0 0.0
    %1741 = vmatprep.subr.mxu0 0.0
    %1742 = vmatpush1.msra.mxu0 0.0
    %1743 = vmatprep.subr.mxu0 0.0
    %1744 = vmatpush1.msra.mxu0 0.0
    %1745 = vmatprep.subr.mxu0 0.0
    %1746 = vmatpush1.msra.mxu0 0.0
    %1747 = vmatprep.subr.mxu0 0.0
    %1748 = vmatpush1.msra.mxu0 0.0
    %1749 = vmatprep.subr.mxu0 0.0
    %1750 = vmatpush1.msra.mxu0 0.0
    %1751 = vmatprep.subr.mxu0 0.0
    %1752 = vmatpush1.msra.mxu0 0.0
    %1753 = vmatprep.subr.mxu0 0.0
    %1754 = vmatpush1.msra.mxu0 0.0
    %1755 = vmatprep.subr.mxu0 0.0
    %1756 = vmatpush1.msra.mxu0 0.0
    %1757 = vmatprep.subr.mxu0 0.0
    %1758 = vmatpush1.msra.mxu0 %v1725
    %1759 = vmatprep.subr.mxu0 0.0
    %1760 = vmatpush1.msra.mxu0 %v1724
    %1761 = vmatprep.subr.mxu0 0.0
    %1762 = vmatpush2.msra.mxu0 0.0
    %1763 = vmatprep.subr.mxu0 0.0
    %1764 = vmatpush2.msra.mxu0 0.0
    %1765 = vmatprep.subr.mxu0 0.0
    %1766 = vmatpush2.msra.mxu0 0.0
    %1767 = vmatprep.subr.mxu0 0.0
    %1768 = vmatpush2.msra.mxu0 0.0
    %1769 = vmatprep.subr.mxu0 0.0
    %1770 = vmatpush2.msra.mxu0 0.0
    %1771 = vmatprep.subr.mxu0 0.0
    %1772 = vmatpush2.msra.mxu0 0.0
    %1773 = vmatprep.subr.mxu0 0.0
    %1774 = vmatpush2.msra.mxu0 0.0
    %1775 = vmatprep.subr.mxu0 0.0
    %1776 = vmatpush2.msra.mxu0 0.0
    %1777 = vmatprep.subr.mxu0 0.0
    %1778 = vmatpush2.msra.mxu0 0.0
    %1779 = vmatprep.subr.mxu0 0.0
    %1780 = vmatpush2.msra.mxu0 0.0
    %1781 = vmatprep.subr.mxu0 0.0
    %1782 = vmatpush2.msra.mxu0 0.0
    %1783 = vmatprep.subr.mxu0 0.0
    %1784 = vmatpush2.msra.mxu0 0.0
    %1785 = vmatprep.subr.mxu0 0.0
    %1786 = vmatpush2.msra.mxu0 0.0
    %1787 = vmatprep.subr.mxu0 0.0
    %1788 = vmatpush2.msra.mxu0 0.0
    %1789 = vmatprep.subr.mxu0 0.0
    %1790 = vmatpush2.msra.mxu0 0.0
    %1791 = vmatprep.subr.mxu0 0.0
    %1792 = vmatpush2.msra.mxu0 0.0
    %1793 = vmatprep.mubr.f32.mxu0 0.0
    %1794 = vmatmul.mubr.f32.gmra.mxu0 %v1727
    %v1795 = vpop.f32.mrf.mxu0
    %v1796 = vadd.f32 0.0, %v1795
    %v1797 = vpop.f32.mrf.mxu0
    %1798 = vdwg.mxu0
    %v1799 = vcvt.s32.f32 %v177
    %v1800 = vadd.f32 %v1799, 1.00001
    %v1801 = vrcp.pop %v1800
    %v1802 = vmul.f32 %v1796, %v1801
    %v1803 = vcvt.s32.f32 %v1066
    %v1804 = vadd.f32 %v1803, 1e-05
    %v1805 = vrcp.pop %v1804
    %v1806 = vmul.f32 %v1796, %v1805
    %vm1807 = vcmp.lt.s32.totalorder %v177, %v1050
    %v1808 = vmul.f32 %v968, 0.1
    %v1809 = vmul.f32 %v969, 0.1
    %v1810 = vlaneseq
    %v1811 = vshrl.u32 %v1810, 7
    %v1812 = vsub.s32 0, %v1811
    %v1813 = vrot.slane %v1806, %v1812
    %vm1814 = vcmp.ge.f32.partialorder %v1813, %v1808
    %vm1815 = vcmp.ge.f32.partialorder %v1813, %v1809
    %v1816 = vsel %vm1807, 1, 0
    %vm1817 = vcmp.eq.s32.totalorder %v1816, 1
    %v1818 = vsel %vm1814, 1, 0
    %v1819 = vsel %vm1815, 1, 0
    %v1820 = vrot.slane %v1818, 1
    %v1821 = vrot.slane %v1818, 2
    %v1822 = vrot.slane %v1818, 3
    %v1823 = vrot.slane %v1818, 4
    %v1824 = vrot.slane %v1818, 5
    %v1825 = vrot.slane %v1818, 6
    %v1826 = vrot.slane %v1818, 7
    %v1827 = vrot.slane %v1819, 1
    %v1828 = vrot.slane %v1819, 2
    %vm1829 = vcmp.ne.s32.totalorder %v1818, 0
    %vm1830 = vcmp.ne.s32.totalorder %v1820, 0
    %vm1831 = vcmp.ne.s32.totalorder %v1821, 0
    %vm1832 = vcmp.ne.s32.totalorder %v1822, 0
    %vm1833 = vcmp.ne.s32.totalorder %v1823, 0
    %vm1834 = vcmp.ne.s32.totalorder %v1824, 0
    %vm1835 = vcmp.ne.s32.totalorder %v1825, 0
    %vm1836 = vcmp.ne.s32.totalorder %v1826, 0
    %vm1837 = vcmp.ne.s32.totalorder %v1819, 0
    %vm1838 = vcmp.ne.s32.totalorder %v1827, 0
    %vm1839 = vcmp.ne.s32.totalorder %v1828, 0
    %vm1840 = vmand %vm1817, %vm1829
    %vm1841 = vmand %vm1817, %vm1830
    %vm1842 = vmand %vm1817, %vm1831
    %vm1843 = vmand %vm1817, %vm1832
    %vm1844 = vmand %vm1817, %vm1833
    %vm1845 = vmand %vm1817, %vm1834
    %vm1846 = vmand %vm1817, %vm1835
    %vm1847 = vmand %vm1817, %vm1836
    %vm1848 = vmand %vm1817, %vm1837
    %vm1849 = vmand %vm1817, %vm1838
    %vm1850 = vmand %vm1817, %vm1839
    %v1851 = vlaneseq
    %v1852 = vshrl.u32 %v1851, 7
    %v1853 = vsub.s32 0, %v1852
    %v1854 = vrot.slane %v1802, %v1853
    %v1855 = vsel %vm1840, %v1854, 0.0
    %v1856 = vsel %vm1841, %v1854, 0.0
    %v1857 = vsel %vm1842, %v1854, 0.0
    %v1858 = vsel %vm1843, %v1854, 0.0
    %v1859 = vsel %vm1844, %v1854, 0.0
    %v1860 = vsel %vm1845, %v1854, 0.0
    %v1861 = vsel %vm1846, %v1854, 0.0
    %v1862 = vsel %vm1847, %v1854, 0.0
    %v1863 = vsel %vm1848, %v1854, 0.0
    %v1864 = vsel %vm1849, %v1854, 0.0
    %v1865 = vsel %vm1850, %v1854, 0.0
    %v1877 = vrot.slane %v1856, 7
    %vm1878 = vcmask 1041409
    %v1879 = vsel %vm1878, %v1877, %v1855
    %v1880 = vrot.slane %v1857, 6
    %vm1881 = vcmask 1042434
    %v1882 = vsel %vm1881, %v1880, %v1879
    %v1883 = vrot.slane %v1858, 5
    %vm1884 = vcmask 1043459
    %v1885 = vsel %vm1884, %v1883, %v1882
    %v1886 = vrot.slane %v1859, 4
    %vm1887 = vcmask 1044484
    %v1888 = vsel %vm1887, %v1886, %v1885
    %v1889 = vrot.slane %v1860, 3
    %vm1890 = vcmask 1045509
    %v1891 = vsel %vm1890, %v1889, %v1888
    %v1892 = vrot.slane %v1861, 2
    %vm1893 = vcmask 1046534
    %v1894 = vsel %vm1893, %v1892, %v1891
    %v1895 = vrot.slane %v1862, 1
    %vm1896 = vcmask 1047559
    %v1897 = vsel %vm1896, %v1895, %v1894
    %v1898 = vrot.slane %v1864, 7
    %v1899 = vsel %vm1878, %v1898, %v1863
    %v1900 = vrot.slane %v1865, 6
    %v1901 = vsel %vm1881, %v1900, %v1899
    %v1904 = vsel %vm218, %v1897, -inf
    %1905 = vmax.xlane.f32.xlu0 %v1904
    %v1906 = vpop.xlane.xlu0 %1905
    %v1907 = vsel %vm1037, %v1901, -inf
    %1908 = vmax.xlane.f32.xlu0 %v1907
    %v1909 = vpop.xlane.xlu0 %1908
    %vm1910 = vcmask 1042432
    %v1911 = vsel %vm1910, %v1909, 0.0
    %v1912 = vadd.f32 %v1906, %v1911
    %v1913 = vrot.slane %v1912, 4
    %v1914 = vadd.f32 %v1912, %v1913
    %v1915 = vrot.slane %v1914, 2
    %v1916 = vadd.f32 %v1914, %v1915
    %v1917 = vrot.slane %v1916, 1
    %v1918 = vadd.f32 %v1916, %v1917
    %v1919 = vmul.f32 %v1918, 0.09090909
    %vm1920 = vcmp.gt.s32.totalorder %v1066, 0
    %vm1921 = vmand %vm1092, %vm1920
    %v1922 = vsel %vm1921, %v1919, 0.0
    %v1923 = vadd.f32 %v1922, 0.0
    %v1924 = vlaneseq
    %v1925 = vshrl.u32 %v1924, 7
    %v1926 = vsub.s32 1, %v1925
    %v1927 = vrot.slane %v1806, %v1926
    %vm1928 = vcmp.ge.f32.partialorder %v1927, %v1808
    %vm1929 = vcmp.ge.f32.partialorder %v1927, %v1809
    %v1930 = vsel %vm1928, 1, 0
    %v1931 = vsel %vm1929, 1, 0
    %v1932 = vrot.slane %v1930, 7
    %v1933 = vrot.slane %v1930, 1
    %v1934 = vrot.slane %v1930, 2
    %v1935 = vrot.slane %v1930, 3
    %v1936 = vrot.slane %v1930, 4
    %v1937 = vrot.slane %v1930, 5
    %v1938 = vrot.slane %v1930, 6
    %v1939 = vrot.slane %v1931, 7
    %v1940 = vrot.slane %v1931, 1
    %vm1941 = vcmp.ne.s32.totalorder %v1932, 0
    %vm1942 = vcmp.ne.s32.totalorder %v1930, 0
    %vm1943 = vcmp.ne.s32.totalorder %v1933, 0
    %vm1944 = vcmp.ne.s32.totalorder %v1934, 0
    %vm1945 = vcmp.ne.s32.totalorder %v1935, 0
    %vm1946 = vcmp.ne.s32.totalorder %v1936, 0
    %vm1947 = vcmp.ne.s32.totalorder %v1937, 0
    %vm1948 = vcmp.ne.s32.totalorder %v1938, 0
    %vm1949 = vcmp.ne.s32.totalorder %v1939, 0
    %vm1950 = vcmp.ne.s32.totalorder %v1931, 0
    %vm1951 = vcmp.ne.s32.totalorder %v1940, 0
    %vm1952 = vmand %vm1817, %vm1941
    %vm1953 = vmand %vm1817, %vm1942
    %vm1954 = vmand %vm1817, %vm1943
    %vm1955 = vmand %vm1817, %vm1944
    %vm1956 = vmand %vm1817, %vm1945
    %vm1957 = vmand %vm1817, %vm1946
    %vm1958 = vmand %vm1817, %vm1947
    %vm1959 = vmand %vm1817, %vm1948
    %vm1960 = vmand %vm1817, %vm1949
    %vm1961 = vmand %vm1817, %vm1950
    %vm1962 = vmand %vm1817, %vm1951
    %v1963 = vlaneseq
    %v1964 = vshrl.u32 %v1963, 7
    %v1965 = vsub.s32 1, %v1964
    %v1966 = vrot.slane %v1802, %v1965
    %v1967 = vsel %vm1952, %v1966, 0.0
    %v1968 = vsel %vm1953, %v1966, 0.0
    %v1969 = vsel %vm1954, %v1966, 0.0
    %v1970 = vsel %vm1955, %v1966, 0.0
    %v1971 = vsel %vm1956, %v1966, 0.0
    %v1972 = vsel %vm1957, %v1966, 0.0
    %v1973 = vsel %vm1958, %v1966, 0.0
    %v1974 = vsel %vm1959, %v1966, 0.0
    %v1975 = vsel %vm1960, %v1966, 0.0
    %v1976 = vsel %vm1961, %v1966, 0.0
    %v1977 = vsel %vm1962, %v1966, 0.0
    %v1989 = vrot.slane %v1968, 7
    %v1990 = vsel %vm1881, %v1989, %v1967
    %v1991 = vrot.slane %v1969, 6
    %v1992 = vsel %vm1884, %v1991, %v1990
    %v1993 = vrot.slane %v1970, 5
    %v1994 = vsel %vm1887, %v1993, %v1992
    %v1995 = vrot.slane %v1971, 4
    %v1996 = vsel %vm1890, %v1995, %v1994
    %v1997 = vrot.slane %v1972, 3
    %v1998 = vsel %vm1893, %v1997, %v1996
    %v1999 = vrot.slane %v1973, 2
    %v2000 = vsel %vm1896, %v1999, %v1998
    %v2001 = vrot.slane %v1974, 1
    %v2002 = vsel %vm1878, %v1975, %v2001
    %v2003 = vrot.slane %v1976, 7
    %v2004 = vsel %vm1881, %v2003, %v2002
    %v2005 = vrot.slane %v1977, 6
    %v2006 = vsel %vm1884, %v2005, %v2004
    %vm2009 = vcmask 130049
    %v2010 = vsel %vm2009, %v2000, -inf
    %2011 = vmax.xlane.f32.xlu0 %v2010
    %v2012 = vpop.xlane.xlu0 %2011
    %vm2013 = vcmask 125952
    %v2014 = vsel %vm2013, %v2006, -inf
    %2015 = vmax.xlane.f32.xlu0 %v2014
    %v2016 = vpop.xlane.xlu0 %2015
    %vm2019 = vcmask 1046528
    %v2020 = vrot.slane %v2012, 1
    %v2021 = vrot.slane %v2016, 1
    %v2022 = vsel %vm2019, %v2020, %v2021
    %v2025 = vsel %vm1910, %v2021, 0.0
    %v2026 = vadd.f32 %v2022, %v2025
    %v2027 = vrot.slane %v2026, 4
    %v2028 = vadd.f32 %v2026, %v2027
    %v2029 = vrot.slane %v2028, 2
    %v2030 = vadd.f32 %v2028, %v2029
    %v2031 = vrot.slane %v2030, 1
    %v2032 = vadd.f32 %v2030, %v2031
    %v2033 = vmul.f32 %v2032, 0.09090909
    %v2034 = vsel %vm1921, %v2033, 0.0
    %v2036 = vrot.slane %v2034, 1
    %v2038 = vadd.f32 %v1923, %v2036
    %v2039 = vlaneseq
    %v2040 = vshrl.u32 %v2039, 7
    %v2041 = vsub.s32 2, %v2040
    %v2042 = vrot.slane %v1806, %v2041
    %vm2043 = vcmp.ge.f32.partialorder %v2042, %v1808
    %vm2044 = vcmp.ge.f32.partialorder %v2042, %v1809
    %v2045 = vsel %vm2043, 1, 0
    %v2046 = vsel %vm2044, 1, 0
    %v2047 = vrot.slane %v2045, 6
    %v2048 = vrot.slane %v2045, 7
    %v2049 = vrot.slane %v2045, 1
    %v2050 = vrot.slane %v2045, 2
    %v2051 = vrot.slane %v2045, 3
    %v2052 = vrot.slane %v2045, 4
    %v2053 = vrot.slane %v2045, 5
    %v2054 = vrot.slane %v2046, 6
    %v2055 = vrot.slane %v2046, 7
    %vm2056 = vcmp.ne.s32.totalorder %v2047, 0
    %vm2057 = vcmp.ne.s32.totalorder %v2048, 0
    %vm2058 = vcmp.ne.s32.totalorder %v2045, 0
    %vm2059 = vcmp.ne.s32.totalorder %v2049, 0
    %vm2060 = vcmp.ne.s32.totalorder %v2050, 0
    %vm2061 = vcmp.ne.s32.totalorder %v2051, 0
    %vm2062 = vcmp.ne.s32.totalorder %v2052, 0
    %vm2063 = vcmp.ne.s32.totalorder %v2053, 0
    %vm2064 = vcmp.ne.s32.totalorder %v2054, 0
    %vm2065 = vcmp.ne.s32.totalorder %v2055, 0
    %vm2066 = vcmp.ne.s32.totalorder %v2046, 0
    %vm2067 = vmand %vm1817, %vm2056
    %vm2068 = vmand %vm1817, %vm2057
    %vm2069 = vmand %vm1817, %vm2058
    %vm2070 = vmand %vm1817, %vm2059
    %vm2071 = vmand %vm1817, %vm2060
    %vm2072 = vmand %vm1817, %vm2061
    %vm2073 = vmand %vm1817, %vm2062
    %vm2074 = vmand %vm1817, %vm2063
    %vm2075 = vmand %vm1817, %vm2064
    %vm2076 = vmand %vm1817, %vm2065
    %vm2077 = vmand %vm1817, %vm2066
    %v2078 = vlaneseq
    %v2079 = vshrl.u32 %v2078, 7
    %v2080 = vsub.s32 2, %v2079
    %v2081 = vrot.slane %v1802, %v2080
    %v2082 = vsel %vm2067, %v2081, 0.0
    %v2083 = vsel %vm2068, %v2081, 0.0
    %v2084 = vsel %vm2069, %v2081, 0.0
    %v2085 = vsel %vm2070, %v2081, 0.0
    %v2086 = vsel %vm2071, %v2081, 0.0
    %v2087 = vsel %vm2072, %v2081, 0.0
    %v2088 = vsel %vm2073, %v2081, 0.0
    %v2089 = vsel %vm2074, %v2081, 0.0
    %v2090 = vsel %vm2075, %v2081, 0.0
    %v2091 = vsel %vm2076, %v2081, 0.0
    %v2092 = vsel %vm2077, %v2081, 0.0
    %v2104 = vrot.slane %v2083, 7
    %v2105 = vsel %vm1884, %v2104, %v2082
    %v2106 = vrot.slane %v2084, 6
    %v2107 = vsel %vm1887, %v2106, %v2105
    %v2108 = vrot.slane %v2085, 5
    %v2109 = vsel %vm1890, %v2108, %v2107
    %v2110 = vrot.slane %v2086, 4
    %v2111 = vsel %vm1893, %v2110, %v2109
    %v2112 = vrot.slane %v2087, 3
    %v2113 = vsel %vm1896, %v2112, %v2111
    %v2114 = vrot.slane %v2088, 2
    %v2115 = vrot.slane %v2089, 1
    %v2116 = vsel %vm1878, %v2115, %v2114
    %v2117 = vsel %vm1881, %v2090, %v2116
    %v2118 = vrot.slane %v2091, 7
    %v2119 = vsel %vm1884, %v2118, %v2117
    %v2120 = vrot.slane %v2092, 6
    %v2121 = vsel %vm1887, %v2120, %v2119
    %vm2124 = vcmask 130050
    %v2125 = vsel %vm2124, %v2113, -inf
    %2126 = vmax.xlane.f32.xlu0 %v2125
    %v2127 = vpop.xlane.xlu0 %2126
    %vm2128 = vcmask 126976
    %v2129 = vsel %vm2128, %v2121, -inf
    %2130 = vmax.xlane.f32.xlu0 %v2129
    %v2131 = vpop.xlane.xlu0 %2130
    %vm2134 = vcmask 1045504
    %v2135 = vrot.slane %v2127, 2
    %v2136 = vrot.slane %v2131, 2
    %v2137 = vsel %vm2134, %v2135, %v2136
    %v2140 = vsel %vm1910, %v2136, 0.0
    %v2141 = vadd.f32 %v2137, %v2140
    %v2142 = vrot.slane %v2141, 4
    %v2143 = vadd.f32 %v2141, %v2142
    %v2144 = vrot.slane %v2143, 2
    %v2145 = vadd.f32 %v2143, %v2144
    %v2146 = vrot.slane %v2145, 1
    %v2147 = vadd.f32 %v2145, %v2146
    %v2148 = vmul.f32 %v2147, 0.09090909
    %v2149 = vsel %vm1921, %v2148, 0.0
    %v2151 = vrot.slane %v2149, 2
    %v2153 = vadd.f32 %v2038, %v2151
    %v2154 = vmul.f32 %v2153, 0.33333334
    %vm2155 = vcmask 0
    %2156 = vst.msk [vmem:[#allocation6] sm:$0x1] %vm2155, %v2154
    // Predicated region
    $region10: #{tpu_custom_call.1} parent=1 // pred_check
      _
    $region11: #{tpu_custom_call.1} parent=1 // pred_check_branch
      %2158 = sbr.rel (0) target = $region13
    $region12: #{tpu_custom_call.1} parent=1 // pred_region
      %s2160 = ssub.s32 16, 16
      %2161 = vsyncadd [#allocation5], %s2160
      %s2163 = sshll.u32 [#allocation6], 4
      %s2164 = int_to_ptr.vmem [resolvable:$true] %s2163
      %2166 = dma.vmem_to_hbm [thread:$0]  %s2164, 16, %s1, [#allocation5]
    $region13: #{tpu_custom_call.1} parent=1 // pred_fallthru
      _
    // Predicated region
    $region14: #{tpu_custom_call.1} parent=1 // pred_check
      _
    $region15: #{tpu_custom_call.1} parent=1 // pred_check_branch
      %2168 = sbr.rel (0) target = $region17
    $region16: #{tpu_custom_call.1} parent=1 // pred_region
      %2169 = dma.done [#allocation5], 16
    $region17: #{tpu_custom_call.1} parent=1 // pred_fallthru
      _
    %2170 = vsyncpa [#allocation4], 1
    %2171 = vsyncpa [#allocation5], 1

</llo_original>
